<compile_context>
chip_gen: v5e
topology: v5e:2x2
jax: 0.10.0
libtpu: 0.0.40
codegen_flags: <defaults>
</compile_context>

<pallas_src>
import math
import functools
import numpy as np
import jax
import jax.numpy as jnp
from jax.experimental import pallas as pl
from jax.experimental.pallas import tpu as pltpu

_BN_EPS = 1e-5
_VMEM_LIMIT = 16 * 1024 * 1024     # actual working set is ~2 MiB; keep headroom


def _ceil_to(x, m):
    return ((x + m - 1) // m) * m


# ----------------------------- Pallas kernels ------------------------------

def _mm_kernel(*refs, slope, has_res):
    """Tiled matmul with fused bias (+residual) (+LeakyReLU) epilogue."""
    if has_res:
        a_ref, b_ref, bias_ref, res_ref, o_ref, acc_ref = refs
    else:
        a_ref, b_ref, bias_ref, o_ref, acc_ref = refs
        res_ref = None
    k = pl.program_id(2)

    @pl.when(k == 0)
    def _init():
        acc_ref[...] = jnp.zeros_like(acc_ref)

    acc_ref[...] += jnp.dot(a_ref[...], b_ref[...],
                            preferred_element_type=jnp.float32)

    @pl.when(k == pl.num_programs(2) - 1)
    def _finalize():
        y = acc_ref[...] + bias_ref[...]
        if res_ref is not None:
            y = y + res_ref[...]
        if slope is not None:
            y = jnp.where(y >= 0, y, slope * y)
        o_ref[...] = y.astype(o_ref.dtype)


def matmul_fused(a, b, bias, residual=None, act_slope=None,
                 out_dtype=jnp.float32):
    """(M,K) @ (K,N) + bias(N,) [+ residual(M,N)] [+ LeakyReLU] -> (M,N).

    Large-enough problems go through a tiled Pallas matmul (bf16 MXU operands,
    f32 accumulation, fused epilogue).  Tiny problems (K<16 / N<16 / M<16) are
    launch-bound and >90% padding on TPU tiles, so they use a plain XLA dot."""
    M, K = a.shape
    K2, N = b.shape
    assert K == K2

    if M < 16 or K < 16 or N < 16:
        y = jnp.dot(a.astype(b.dtype), b, preferred_element_type=jnp.float32)
        y = y + bias.astype(jnp.float32)
        if residual is not None:
            y = y + residual.astype(jnp.float32)
        if act_slope is not None:
            y = jnp.where(y >= 0, y, act_slope * y)
        return y.astype(out_dtype)

    # ------------------------- Pallas tiled path ---------------------------
    TM, TN, TK = 256, 256, 512
    # N: single full-dim block when it fits (block dim == array dim is legal).
    if N <= TN:
        tn, Np = N, N
    else:
        tn, Np = TN, _ceil_to(N, TN)
    # K: single full-dim block (-> one reduction step) when it fits.
    if K <= TK:
        tk, Kp = K, K
    else:
        tk, Kp = TK, _ceil_to(K, TK)
    # M: split into >= 2 blocks when possible so both v7x TensorCores get work.
    if M <= 2 * TM:
        tm = max(8, _ceil_to((M + 1) // 2, 8))
        Mp = _ceil_to(M, tm)
    else:
        tm, Mp = TM, _ceil_to(M, TM)

    a_p = a.astype(jnp.bfloat16)
    if (Mp, Kp) != (M, K):
        a_p = jnp.pad(a_p, ((0, Mp - M), (0, Kp - K)))
    b_p = b.astype(jnp.bfloat16)
    if (Kp, Np) != (K, N):
        b_p = jnp.pad(b_p, ((0, Kp - K), (0, Np - N)))
    bias_p = bias.astype(jnp.float32)
    if Np != N:
        bias_p = jnp.pad(bias_p, (0, Np - N))
    bias_p = bias_p.reshape(1, Np)

    in_specs = [
        pl.BlockSpec((tm, tk), lambda i, j, k: (i, k)),
        pl.BlockSpec((tk, tn), lambda i, j, k: (k, j)),
        pl.BlockSpec((1, tn), lambda i, j, k: (0, j)),
    ]
    args = [a_p, b_p, bias_p]
    if residual is not None:
        r_p = residual.astype(jnp.float32)
        if (Mp, Np) != (M, N):
            r_p = jnp.pad(r_p, ((0, Mp - M), (0, Np - N)))
        in_specs.append(pl.BlockSpec((tm, tn), lambda i, j, k: (i, j)))
        args.append(r_p)

    gm, gn, gk = Mp // tm, Np // tn, Kp // tk
    out = pl.pallas_call(
        functools.partial(_mm_kernel, slope=act_slope,
                          has_res=residual is not None),
        out_shape=jax.ShapeDtypeStruct((Mp, Np), out_dtype),
        grid=(gm, gn, gk),
        in_specs=in_specs,
        out_specs=pl.BlockSpec((tm, tn), lambda i, j, k: (i, j)),
        scratch_shapes=[pltpu.VMEM((tm, tn), jnp.float32)],
        compiler_params=pltpu.CompilerParams(
            dimension_semantics=("parallel", "parallel", "arbitrary"),
            vmem_limit_bytes=_VMEM_LIMIT),
        cost_estimate=pl.CostEstimate(
            flops=2 * Mp * Np * Kp, transcendentals=0,
            bytes_accessed=2 * (Mp * Kp + Kp * Np) + 4 * (Mp * Np + Np)),
    )(*args)
    if (Mp, Np) != (M, N):
        out = out[:M, :N]
    return out


def _sta_attn_kernel(alpha_ref, q_ref, k_ref, x_ref, att0_ref, o_ref, *,
                     inv_temp, num_heads, tc):
    # q/k : (1, H, V, T*Q) bf16   x : (1, V, T*Cin) bf16
    # att0: (H, V, V) f32         alphas : SMEM (H,) f32
    # out : (1, V, H*T*Cin) f32   (lane-dense: last dim is a 128 multiple here)
    outs = []
    for h in range(num_heads):                      # H is tiny & static: unroll
        scores = jax.lax.dot_general(
            q_ref[0, h], k_ref[0, h], (((1,), (1,)), ((), ())),
            preferred_element_type=jnp.float32) * inv_temp          # (V, V)
        m = jnp.max(scores, axis=-1, keepdims=True)
        e = jnp.exp(scores - m)
        att = e * pl.reciprocal(jnp.sum(e, axis=-1, keepdims=True), approx=True)
        att = att * alpha_ref[h] + att0_ref[h]
        # out[v, t*Cin+c] = sum_u att[u, v] * x[u, t*Cin+c]
        outs.append(jax.lax.dot_general(
            att.astype(jnp.bfloat16), x_ref[0], (((0,), (0,)), ((), ())),
            preferred_element_type=jnp.float32))                    # (V, T*Cin)
    o_ref[0] = jnp.concatenate(outs, axis=-1).astype(o_ref.dtype)


def sta_attention(q, k, x_r, alphas, att0s, inv_temp):
    """q,k: (NM,H,V,T*Q) bf16; x_r: (NM,V,T*Cin) bf16; alphas: (H,); att0s: (H,V,V).

    Returns (NM, V, H*T*Cin) f32 — the reference softmax attention with all
    heads packed along the lane axis (lane-dense stores)."""
    NM, H, V, TQ = q.shape
    TC = x_r.shape[-1]
    return pl.pallas_call(
        functools.partial(_sta_attn_kernel, inv_temp=inv_temp,
                          num_heads=H, tc=TC),
        out_shape=jax.ShapeDtypeStruct((NM, V, H * TC), jnp.float32),
        grid=(NM,),
        in_specs=[
            pl.BlockSpec(memory_space=pltpu.MemorySpace.SMEM),       # alphas
            pl.BlockSpec((1, H, V, TQ), lambda n: (n, 0, 0, 0)),
            pl.BlockSpec((1, H, V, TQ), lambda n: (n, 0, 0, 0)),
            pl.BlockSpec((1, V, TC), lambda n: (n, 0, 0)),
            pl.BlockSpec((H, V, V), lambda n: (0, 0, 0)),
        ],
        out_specs=pl.BlockSpec((1, V, H * TC), lambda n: (n, 0, 0)),
        compiler_params=pltpu.CompilerParams(
            dimension_semantics=("parallel",),
            vmem_limit_bytes=_VMEM_LIMIT),
        cost_estimate=pl.CostEstimate(
            flops=2 * NM * H * V * V * (TQ + TC),
            transcendentals=NM * H * V * V,
            bytes_accessed=2 * (2 * NM * H * V * TQ + NM * V * TC)
                           + 4 * (H * V * V + NM * V * H * TC)),
    )(alphas.astype(jnp.float32), q, k, x_r, att0s.astype(jnp.float32))


# ------------------------------- glue helpers -------------------------------

def conv2d_cl(x, wm, b, kh, kw, pad_t, pad_v, act_slope=None, residual=None,
              out_dtype=jnp.float32):
    """Channels-last stride-1 conv via tap concat + fused matmul.

    x: (B,T,V,C); wm: pre-packed (kh*kw*C, O) weight matrix; b: (O,)."""
    B, T, V, C = x.shape
    O = wm.shape[1]
    if kh == 1 and kw == 1:
        cols = x.reshape(B * T * V, C)
    else:
        xp = jnp.pad(x, ((0, 0), (pad_t, pad_t), (pad_v, pad_v), (0, 0)))
        taps = [xp[:, i:i + T, j:j + V, :] for i in range(kh) for j in range(kw)]
        cols = jnp.concatenate(taps, axis=-1).reshape(B * T * V, kh * kw * C)
    res2 = residual.reshape(B * T * V, O) if residual is not None else None
    y = matmul_fused(cols, wm, b, residual=res2, act_slope=act_slope,
                     out_dtype=out_dtype)
    return y.reshape(B, T, V, O)


def leaky_relu(x, slope=0.1):
    return jnp.where(x >= 0, x, slope * x)


def bn_eval_cl(x, gamma, beta):
    # BatchNorm2d, eval mode, running_mean=0, running_var=1 (as initialized).
    inv = gamma / jnp.sqrt(1.0 + _BN_EPS)
    return x * inv + beta


def group_norm_cl(x, gamma, beta, eps=1e-5):
    # GroupNorm(C, C): one channel per group, normalized over (T, V).
    mean = jnp.mean(x, axis=(1, 2), keepdims=True)
    var = jnp.var(x, axis=(1, 2), keepdims=True)
    return (x - mean) / jnp.sqrt(var + eps) * gamma + beta


def st_pos_embed_cl(channels, num_frames, num_joints):
    # STPos_Embed, pes_style='st', stored channels-last (1, T, V, C).
    pos = np.array([st for _t in range(num_frames) for st in range(num_joints)],
                   dtype=np.float32)[:, None]
    pe = np.zeros((num_frames * num_joints, channels), dtype=np.float32)
    div = np.exp(np.arange(0, channels, 2, dtype=np.float32) *
                 -(math.log(10000.0) / channels))
    pe[:, 0::2] = np.sin(pos * div)
    pe[:, 1::2] = np.cos(pos * div)
    return jnp.asarray(pe.reshape(num_frames, num_joints, channels)[None])


def ema_forward_cl(x, p, groups):
    # TODO(synk): EMA source not included in the reference file; implementing the
    # standard "Efficient Multi-scale Attention" (EMA, 2023) module it imports.
    b, T, V, c = x.shape
    cg = c // groups
    gx = jnp.transpose(x.reshape(b, T, V, groups, cg),
                       (0, 3, 1, 2, 4)).reshape(b * groups, T, V, cg)
    x_h = jnp.mean(gx, axis=2, keepdims=True)                        # (bg,T,1,cg)
    x_w = jnp.transpose(jnp.mean(gx, axis=1, keepdims=True),
                        (0, 2, 1, 3))                                 # (bg,V,1,cg)
    hw = conv2d_cl(jnp.concatenate([x_h, x_w], axis=1),
                   p['w1m'], p['b1'], 1, 1, 0, 0)
    xh2 = hw[:, :T]                                                   # (bg,T,1,cg)
    xw2 = jnp.transpose(hw[:, T:], (0, 2, 1, 3))                      # (bg,1,V,cg)
    x1 = gx * jax.nn.sigmoid(xh2) * jax.nn.sigmoid(xw2)
    x1 = group_norm_cl(x1, p['gn_w'], p['gn_b'])
    x2 = conv2d_cl(gx, p['w3m'], p['b3'], 3, 3, 1, 1)
    x11 = jax.nn.softmax(jnp.mean(x1, axis=(1, 2)), axis=-1)          # (bg,cg)
    x21 = jax.nn.softmax(jnp.mean(x2, axis=(1, 2)), axis=-1)          # (bg,cg)
    wts = (jnp.einsum('bc,btvc->btv', x11, x2)
           + jnp.einsum('bc,btvc->btv', x21, x1))
    out = gx * jax.nn.sigmoid(wts)[..., None]
    out = out.reshape(b, groups, T, V, cg)
    return jnp.transpose(out, (0, 2, 3, 1, 4)).reshape(b, T, V, c)


# ------------------------------- model blocks -------------------------------

def sta_block_forward(x, p, num_heads, kernel_size, factor):
    NM, T, V, Cin = x.shape
    H = num_heads
    ks_t, ks_s = kernel_size
    pads = (ks_s - 1) // 2
    padt = (ks_t - 1) // 2
    Q = p['qkv_wm'].shape[1] // (2 * H)

    xs = x + p['pe'][:, :T]                                           # use_pes
    qk = conv2d_cl(xs, p['qkv_wm'], p['qkv_b'], 1, 1, 0, 0,
                   out_dtype=jnp.bfloat16)                            # (NM,T,V,2HQ)
    qk = qk.reshape(NM, T, V, 2, H, Q)
    q = jnp.transpose(qk[:, :, :, 0], (0, 3, 2, 1, 4)).reshape(NM, H, V, T * Q)
    k = jnp.transpose(qk[:, :, :, 1], (0, 3, 2, 1, 4)).reshape(NM, H, V, T * Q)
    x_r = jnp.transpose(x, (0, 2, 1, 3)).reshape(NM, V, T * Cin)
    x_r = x_r.astype(jnp.bfloat16)

    att_out = sta_attention(q, k, x_r, p['alphas'], p['att0s'],
                            1.0 / float(Q * T))                       # (NM,V,H*T*Cin)
    xs_att = jnp.transpose(att_out.reshape(NM, V, H, T, Cin),
                           (0, 3, 1, 2, 4)).reshape(NM, T, V, H * Cin)

    x_ress = (conv2d_cl(x, p['ress_wm'], p['ress_b'], 1, 1, 0, 0)
              if 'ress_wm' in p else x)

    # out_nets (BN folded into weights) + residual add + LeakyReLU, all fused.
    xs2 = conv2d_cl(xs_att, p['out_wm'], p['out_b'], 1, ks_s, 0, pads,
                    act_slope=0.1, residual=x_ress)

    # ff_net = EMA -> BatchNorm (BN kept explicit: no conv to fold into)
    z = bn_eval_cl(ema_forward_cl(xs2, p['ema'], factor),
                   p['ff_bn_g'], p['ff_bn_b'])
    xs3 = leaky_relu(z + x_ress)

    x_rest = (conv2d_cl(xs3, p['rest_wm'], p['rest_b'], 1, 1, 0, 0)
              if 'rest_wm' in p else xs3)
    # out_nett (BN folded) + residual add + LeakyReLU, fused.
    return conv2d_cl(xs3, p['outt_wm'], p['outt_b'], ks_t, 1, padt, 0,
                     act_slope=0.1, residual=x_rest)


def model_forward(x, params, cfg):
    N, C, T, V, M = x.shape
    lp = cfg['len_parts']
    x = jnp.transpose(x, (0, 4, 1, 2, 3)).reshape(N * M, C, T, V)
    x = x.reshape(N * M, C, T // lp, V * lp)
    x = jnp.transpose(x, (0, 2, 3, 1))                                # channels-last
    # input_map: conv + (folded) BN + LeakyReLU (tiny K=3 -> XLA dot path)
    x = conv2d_cl(x, params['in_wm'], params['in_b'], 1, 1, 0, 0, act_slope=0.1)
    for bp in params['blocks']:
        x = sta_block_forward(x, bp, cfg['num_heads'], cfg['kernel_size'],
                              cfg['factor'])
    NM, Tp, Vp, Cout = x.shape
    pooled = x.reshape(N, M, Tp * Vp, Cout).mean(axis=(1, 2))         # (N, Cout)
    return matmul_fused(pooled, params['fc_wm'], params['fc_b'])      # (N, classes)


# ---------------------------- parameter creation ----------------------------

def _fold_bn(w, b, gamma, beta):
    # conv -> BatchNorm2d (eval, running_mean=0, running_var=1) folded into conv.
    s = gamma / jnp.sqrt(1.0 + _BN_EPS)
    return w * s[:, None, None, None], b * s + beta


def init_params(key, cfg):
    ks_t, ks_s = cfg['kernel_size']
    T = cfg['num_frames'] // cfg['len_parts']
    V = cfg['num_joints'] * cfg['len_parts']
    H = cfg['num_heads']
    config = cfg['config']
    c0 = config[0][0]
    keys = iter(jax.random.split(key, 128))

    def kconv(o, i, kh, kw):  # kaiming normal, mode='fan_out'
        std = math.sqrt(2.0 / (o * kh * kw))
        return jax.random.normal(next(keys), (o, i, kh, kw), jnp.float32) * std

    ones = lambda n: jnp.ones((n,), jnp.float32)
    zeros = lambda n: jnp.zeros((n,), jnp.float32)

    def pack(w, b):
        # (O,C,kh,kw) -> (kh*kw*C, O) bf16, tap-major (matches tap concat order).
        O, Ci, kh, kw = w.shape
        wm = jnp.transpose(w, (2, 3, 1, 0)).reshape(kh * kw * Ci, O)
        return wm.astype(jnp.bfloat16), b.astype(jnp.float32)

    def pack_bn(w, b, gamma, beta):
        return pack(*_fold_bn(w, b, gamma, beta))

    in_wm, in_b = pack_bn(kconv(c0, cfg['num_channels'], 1, 1), zeros(c0),
                          ones(c0), zeros(c0))
    params = {'in_wm': in_wm, 'in_b': in_b, 'blocks': []}
    for (cin, cout, q) in config:
        cg = cout // cfg['factor']
        out_wm, out_b = pack_bn(kconv(cout, cin * H, 1, ks_s), zeros(cout),
                                ones(cout), zeros(cout))
        outt_wm, outt_b = pack_bn(kconv(cout, cout, ks_t, 1), zeros(cout),
                                  ones(cout), zeros(cout))
        qkv_wm, qkv_b = pack(kconv(2 * H * q, cin, 1, 1), zeros(2 * H * q))
        w1m, b1 = pack(kconv(cg, cg, 1, 1), zeros(cg))
        w3m, b3 = pack(kconv(cg, cg, 3, 3), zeros(cg))
        bp = {
            'pe': st_pos_embed_cl(cin, T, V),
            'qkv_wm': qkv_wm, 'qkv_b': qkv_b,
            'alphas': ones(H),
            'att0s': jnp.full((H, V, V), 1.0 / V, jnp.float32),
            'out_wm': out_wm, 'out_b': out_b,
            'ema': {'w1m': w1m, 'b1': b1, 'w3m': w3m, 'b3': b3,
                    'gn_w': ones(cg), 'gn_b': zeros(cg)},
            'ff_bn_g': ones(cout), 'ff_bn_b': zeros(cout),
            'outt_wm': outt_wm, 'outt_b': outt_b,
        }
        if cin != cout:
            rwm, rb = pack_bn(kconv(cout, cin, 1, 1), zeros(cout),
                              ones(cout), zeros(cout))
            rwm2, rb2 = pack_bn(kconv(cout, cout, 1, 1), zeros(cout),
                                ones(cout), zeros(cout))
            bp.update({'ress_wm': rwm, 'ress_b': rb,
                       'rest_wm': rwm2, 'rest_b': rb2})
        params['blocks'].append(bp)

    cout_last = config[-1][1]
    nclass = cfg['num_classes']
    std = math.sqrt(2.0 / (cout_last + nclass))  # xavier normal
    fc_w = jax.random.normal(next(keys), (nclass, cout_last), jnp.float32) * std
    params['fc_wm'] = fc_w.T                     # (Cout, classes), f32 classifier
    params['fc_b'] = zeros(nclass)
    return params


# ----------------------------------- main ------------------------------------

if __name__ == "__main__":
    cfg = dict(
        len_parts=2, num_classes=10, num_joints=4, num_frames=8,
        num_heads=2, num_persons=2, num_channels=3, kernel_size=(3, 3),
        config=((16, 16, 8), (16, 32, 8)), factor=8,
    )
    key = jax.random.PRNGKey(0)
    k_x, k_p = jax.random.split(key)
    params = init_params(k_p, cfg)

    # input: (N, C, T, V, M)
    x = jax.random.normal(k_x, (2, cfg['num_channels'], cfg['num_frames'],
                                cfg['num_joints'], cfg['num_persons']),
                          jnp.float32)

    fwd = jax.jit(lambda xx: model_forward(xx, params, cfg))
    out = fwd(x)
    jax.block_until_ready(out)
    assert out.shape == (2, cfg['num_classes'])
    assert bool(jnp.all(jnp.isfinite(out)))
    print("KERNEL_OK")
</pallas_src>

<mosaic_0001>
module attributes {stable_mosaic.version = 11 : i64} {
  func.func @_mm_kernel(%arg0: i32, %arg1: i32, %arg2: i32, %arg3: memref<64x16xbf16, #tpu.memory_space<vmem>>, %arg4: memref<16x32xbf16, #tpu.memory_space<vmem>>, %arg5: memref<1x32xf32, #tpu.memory_space<vmem>>, %arg6: memref<64x32xbf16, #tpu.memory_space<vmem>>, %arg7: memref<64x32xf32, #tpu.memory_space<vmem>>) attributes {dimension_semantics = [#tpu.dimension_semantics<parallel>, #tpu.dimension_semantics<parallel>, #tpu.dimension_semantics<arbitrary>], iteration_bounds = array<i64: 2, 1, 1>, scalar_prefetch = 0 : i64, scratch_operands = 1 : i64, tpu.core_type = #tpu.core_type<tc>, window_params = [{transform_indices = @transform_0, window_bounds = array<i64: 64, 16>}, {transform_indices = @transform_1, window_bounds = array<i64: 16, 32>}, {transform_indices = @transform_2, window_bounds = array<i64: 1, 32>}, {transform_indices = @transform_3, window_bounds = array<i64: 64, 32>}]} {
    %c0_i32 = arith.constant 0 : i32
    %0 = arith.cmpi eq, %arg2, %c0_i32 : i32
    %1 = arith.extui %0 : i1 to i32
    %c0_i32_0 = arith.constant 0 : i32
    %2 = arith.cmpi ne, %1, %c0_i32_0 : i32
    scf.if %2 {
      %cst_10 = arith.constant 0.000000e+00 : f32
      %12 = vector.broadcast %cst_10 : f32 to vector<64x32xf32>
      %c0_11 = arith.constant 0 : index
      %c0_12 = arith.constant 0 : index
      %13 = vector.load %arg7[%c0_11, %c0_12] : memref<64x32xf32, #tpu.memory_space<vmem>>, vector<64x32xf32>
      tpu.vector_store %arg7[%c0_11, %c0_12], %12 {strides = array<i32>} : memref<64x32xf32, #tpu.memory_space<vmem>>, vector<64x32xf32>,
    } else {
    }
    %c0 = arith.constant 0 : index
    %c0_1 = arith.constant 0 : index
    %3 = vector.load %arg7[%c0, %c0_1] : memref<64x32xf32, #tpu.memory_space<vmem>>, vector<64x32xf32>
    %c0_2 = arith.constant 0 : index
    %c0_3 = arith.constant 0 : index
    %4 = vector.load %arg3[%c0_2, %c0_3] : memref<64x16xbf16, #tpu.memory_space<vmem>>, vector<64x16xbf16>
    %c0_4 = arith.constant 0 : index
    %c0_5 = arith.constant 0 : index
    %5 = vector.load %arg4[%c0_4, %c0_5] : memref<16x32xbf16, #tpu.memory_space<vmem>>, vector<16x32xbf16>
    %cst = arith.constant dense<0.000000e+00> : vector<64x32xf32>
    %6 = tpu.matmul %4, %5, %cst {dimension_numbers = #tpu.dot_dimension_numbers<[1], [0], [0], [1], [0, 0, 1, 1], [], []>} : vector<64x16xbf16>, vector<16x32xbf16>, vector<64x32xf32> -> vector<64x32xf32>
    %7 = arith.addf %3, %6 : vector<64x32xf32>
    %c0_6 = arith.constant 0 : index
    %c0_7 = arith.constant 0 : index
    %8 = vector.load %arg7[%c0_6, %c0_7] : memref<64x32xf32, #tpu.memory_space<vmem>>, vector<64x32xf32>
    tpu.vector_store %arg7[%c0_6, %c0_7], %7 {strides = array<i32>} : memref<64x32xf32, #tpu.memory_space<vmem>>, vector<64x32xf32>,
    %c0_i32_8 = arith.constant 0 : i32
    %9 = arith.cmpi eq, %arg2, %c0_i32_8 : i32
    %10 = arith.extui %9 : i1 to i32
    %c0_i32_9 = arith.constant 0 : i32
    %11 = arith.cmpi ne, %10, %c0_i32_9 : i32
    scf.if %11 {
      %c0_10 = arith.constant 0 : index
      %c0_11 = arith.constant 0 : index
      %12 = vector.load %arg7[%c0_10, %c0_11] : memref<64x32xf32, #tpu.memory_space<vmem>>, vector<64x32xf32>
      %c0_12 = arith.constant 0 : index
      %c0_13 = arith.constant 0 : index
      %13 = vector.load %arg5[%c0_12, %c0_13] : memref<1x32xf32, #tpu.memory_space<vmem>>, vector<1x32xf32>
      %14 = vector.broadcast %13 : vector<1x32xf32> to vector<64x32xf32>
      %15 = arith.addf %12, %14 : vector<64x32xf32>
      %16 = arith.truncf %15 : vector<64x32xf32> to vector<64x32xbf16>
      %c0_14 = arith.constant 0 : index
      %c0_15 = arith.constant 0 : index
      %17 = vector.load %arg6[%c0_14, %c0_15] : memref<64x32xbf16, #tpu.memory_space<vmem>>, vector<64x32xbf16>
      tpu.vector_store %arg6[%c0_14, %c0_15], %16 {strides = array<i32>} : memref<64x32xbf16, #tpu.memory_space<vmem>>, vector<64x32xbf16>,
    } else {
    }
    return
  }
  func.func @transform_0(%arg0: i32, %arg1: i32, %arg2: i32) -> (i32, i32) {
    %c0_i32 = arith.constant 0 : i32
    return %arg0, %arg2 : i32, i32
  }
  func.func @transform_1(%arg0: i32, %arg1: i32, %arg2: i32) -> (i32, i32) {
    %c0_i32 = arith.constant 0 : i32
    return %arg2, %arg1 : i32, i32
  }
  func.func @transform_2(%arg0: i32, %arg1: i32, %arg2: i32) -> (i32, i32) {
    %c0_i32 = arith.constant 0 : i32
    %c0_i32_0 = arith.constant 0 : i32
    return %c0_i32, %arg1 : i32, i32
  }
  func.func @transform_3(%arg0: i32, %arg1: i32, %arg2: i32) -> (i32, i32) {
    %c0_i32 = arith.constant 0 : i32
    return %arg0, %arg1 : i32, i32
  }
}

module attributes {stable_mosaic.version = 11 : i64} {
  func.func @_sta_attn_kernel(%arg0: i32, %arg1: memref<2xf32, #tpu.memory_space<smem>>, %arg2: memref<1x2x8x32xbf16, #tpu.memory_space<vmem>>, %arg3: memref<1x2x8x32xbf16, #tpu.memory_space<vmem>>, %arg4: memref<1x8x64xbf16, #tpu.memory_space<vmem>>, %arg5: memref<2x8x8xf32, #tpu.memory_space<vmem>>, %arg6: memref<1x8x128xf32, #tpu.memory_space<vmem>>) attributes {dimension_semantics = [#tpu.dimension_semantics<parallel>], iteration_bounds = array<i64: 4>, scalar_prefetch = 0 : i64, scratch_operands = 0 : i64, tpu.core_type = #tpu.core_type<tc>, window_params = [{transform_indices = @transform_0, window_bounds = array<i64: 2>}, {transform_indices = @transform_1, window_bounds = array<i64: 1, 2, 8, 32>}, {transform_indices = @transform_2, window_bounds = array<i64: 1, 2, 8, 32>}, {transform_indices = @transform_3, window_bounds = array<i64: 1, 8, 64>}, {pipeline_mode = #tpu.pipeline_mode<synchronous>, transform_indices = @transform_4, window_bounds = array<i64: 2, 8, 8>}, {transform_indices = @transform_5, window_bounds = array<i64: 1, 8, 128>}]} {
    %c0 = arith.constant 0 : index
    %c0_0 = arith.constant 0 : index
    %c0_1 = arith.constant 0 : index
    %c0_2 = arith.constant 0 : index
    %0 = vector.load %arg2[%c0, %c0_0, %c0_1, %c0_2] : memref<1x2x8x32xbf16, #tpu.memory_space<vmem>>, vector<1x1x8x32xbf16>
    %1 = vector.shape_cast %0 : vector<1x1x8x32xbf16> to vector<8x32xbf16>
    %c0_3 = arith.constant 0 : index
    %c0_4 = arith.constant 0 : index
    %c0_5 = arith.constant 0 : index
    %c0_6 = arith.constant 0 : index
    %2 = vector.load %arg3[%c0_3, %c0_4, %c0_5, %c0_6] : memref<1x2x8x32xbf16, #tpu.memory_space<vmem>>, vector<1x1x8x32xbf16>
    %3 = vector.shape_cast %2 : vector<1x1x8x32xbf16> to vector<8x32xbf16>
    %cst = arith.constant dense<0.000000e+00> : vector<8x8xf32>
    %4 = tpu.matmul %1, %3, %cst {dimension_numbers = #tpu.dot_dimension_numbers<[1], [1], [0], [0], [0, 0, 1, 0], [], []>} : vector<8x32xbf16>, vector<8x32xbf16>, vector<8x8xf32> -> vector<8x8xf32>
    %cst_7 = arith.constant 3.125000e-02 : f32
    %5 = vector.broadcast %cst_7 : f32 to vector<8x8xf32>
    %6 = arith.mulf %4, %5 : vector<8x8xf32>
    %cst_8 = arith.constant dense<0xFF800000> : vector<8xf32>
    %7 = vector.multi_reduction <maximumf>, %6, %cst_8 [1] : vector<8x8xf32> to vector<8xf32>
    %8 = vector.shape_cast %7 : vector<8xf32> to vector<8x1xf32>
    %9 = vector.broadcast %8 : vector<8x1xf32> to vector<8x8xf32>
    %10 = arith.subf %6, %9 : vector<8x8xf32>
    %11 = math.exp %10 : vector<8x8xf32>
    %cst_9 = arith.constant dense<0.000000e+00> : vector<8xf32>
    %12 = vector.multi_reduction <add>, %11, %cst_9 [1] : vector<8x8xf32> to vector<8xf32>
    %13 = vector.shape_cast %12 : vector<8xf32> to vector<8x1xf32>
    %14 = tpu.reciprocal %13 {approx = true} : vector<8x1xf32> -> vector<8x1xf32>
    %15 = vector.broadcast %14 : vector<8x1xf32> to vector<8x8xf32>
    %16 = arith.mulf %11, %15 : vector<8x8xf32>
    %c0_10 = arith.constant 0 : index
    %17 = memref.load %arg1[%c0_10] : memref<2xf32, #tpu.memory_space<smem>>
    %18 = vector.broadcast %17 : f32 to vector<8x8xf32>
    %19 = arith.mulf %16, %18 : vector<8x8xf32>
    %c0_11 = arith.constant 0 : index
    %c0_12 = arith.constant 0 : index
    %c0_13 = arith.constant 0 : index
    %20 = vector.load %arg5[%c0_11, %c0_12, %c0_13] : memref<2x8x8xf32, #tpu.memory_space<vmem>>, vector<1x8x8xf32>
    %21 = vector.shape_cast %20 : vector<1x8x8xf32> to vector<8x8xf32>
    %22 = arith.addf %19, %21 : vector<8x8xf32>
    %23 = arith.truncf %22 : vector<8x8xf32> to vector<8x8xbf16>
    %c0_14 = arith.constant 0 : index
    %c0_15 = arith.constant 0 : index
    %c0_16 = arith.constant 0 : index
    %24 = vector.load %arg4[%c0_14, %c0_15, %c0_16] : memref<1x8x64xbf16, #tpu.memory_space<vmem>>, vector<1x8x64xbf16>
    %25 = vector.shape_cast %24 : vector<1x8x64xbf16> to vector<8x64xbf16>
    %cst_17 = arith.constant dense<0.000000e+00> : vector<8x64xf32>
    %26 = tpu.matmul %23, %25, %cst_17 {dimension_numbers = #tpu.dot_dimension_numbers<[0], [0], [1], [1], [0, 1, 1, 1], [], []>} : vector<8x8xbf16>, vector<8x64xbf16>, vector<8x64xf32> -> vector<8x64xf32>
    %c0_18 = arith.constant 0 : index
    %c1 = arith.constant 1 : index
    %c0_19 = arith.constant 0 : index
    %c0_20 = arith.constant 0 : index
    %27 = vector.load %arg2[%c0_18, %c1, %c0_19, %c0_20] : memref<1x2x8x32xbf16, #tpu.memory_space<vmem>>, vector<1x1x8x32xbf16>
    %28 = vector.shape_cast %27 : vector<1x1x8x32xbf16> to vector<8x32xbf16>
    %c0_21 = arith.constant 0 : index
    %c1_22 = arith.constant 1 : index
    %c0_23 = arith.constant 0 : index
    %c0_24 = arith.constant 0 : index
    %29 = vector.load %arg3[%c0_21, %c1_22, %c0_23, %c0_24] : memref<1x2x8x32xbf16, #tpu.memory_space<vmem>>, vector<1x1x8x32xbf16>
    %30 = vector.shape_cast %29 : vector<1x1x8x32xbf16> to vector<8x32xbf16>
    %cst_25 = arith.constant dense<0.000000e+00> : vector<8x8xf32>
    %31 = tpu.matmul %28, %30, %cst_25 {dimension_numbers = #tpu.dot_dimension_numbers<[1], [1], [0], [0], [0, 0, 1, 0], [], []>} : vector<8x32xbf16>, vector<8x32xbf16>, vector<8x8xf32> -> vector<8x8xf32>
    %cst_26 = arith.constant 3.125000e-02 : f32
    %32 = vector.broadcast %cst_26 : f32 to vector<8x8xf32>
    %33 = arith.mulf %31, %32 : vector<8x8xf32>
    %cst_27 = arith.constant dense<0xFF800000> : vector<8xf32>
    %34 = vector.multi_reduction <maximumf>, %33, %cst_27 [1] : vector<8x8xf32> to vector<8xf32>
    %35 = vector.shape_cast %34 : vector<8xf32> to vector<8x1xf32>
    %36 = vector.broadcast %35 : vector<8x1xf32> to vector<8x8xf32>
    %37 = arith.subf %33, %36 : vector<8x8xf32>
    %38 = math.exp %37 : vector<8x8xf32>
    %cst_28 = arith.constant dense<0.000000e+00> : vector<8xf32>
    %39 = vector.multi_reduction <add>, %38, %cst_28 [1] : vector<8x8xf32> to vector<8xf32>
    %40 = vector.shape_cast %39 : vector<8xf32> to vector<8x1xf32>
    %41 = tpu.reciprocal %40 {approx = true} : vector<8x1xf32> -> vector<8x1xf32>
    %42 = vector.broadcast %41 : vector<8x1xf32> to vector<8x8xf32>
    %43 = arith.mulf %38, %42 : vector<8x8xf32>
    %c1_29 = arith.constant 1 : index
    %44 = memref.load %arg1[%c1_29] : memref<2xf32, #tpu.memory_space<smem>>
    %45 = vector.broadcast %44 : f32 to vector<8x8xf32>
    %46 = arith.mulf %43, %45 : vector<8x8xf32>
    %c1_30 = arith.constant 1 : index
    %c0_31 = arith.constant 0 : index
    %c0_32 = arith.constant 0 : index
    %47 = vector.load %arg5[%c1_30, %c0_31, %c0_32] : memref<2x8x8xf32, #tpu.memory_space<vmem>>, vector<1x8x8xf32>
    %48 = vector.shape_cast %47 : vector<1x8x8xf32> to vector<8x8xf32>
    %49 = arith.addf %46, %48 : vector<8x8xf32>
    %50 = arith.truncf %49 : vector<8x8xf32> to vector<8x8xbf16>
    %c0_33 = arith.constant 0 : index
    %c0_34 = arith.constant 0 : index
    %c0_35 = arith.constant 0 : index
    %51 = vector.load %arg4[%c0_33, %c0_34, %c0_35] : memref<1x8x64xbf16, #tpu.memory_space<vmem>>, vector<1x8x64xbf16>
    %52 = vector.shape_cast %51 : vector<1x8x64xbf16> to vector<8x64xbf16>
    %cst_36 = arith.constant dense<0.000000e+00> : vector<8x64xf32>
    %53 = tpu.matmul %50, %52, %cst_36 {dimension_numbers = #tpu.dot_dimension_numbers<[0], [0], [1], [1], [0, 1, 1, 1], [], []>} : vector<8x8xbf16>, vector<8x64xbf16>, vector<8x64xf32> -> vector<8x64xf32>
    %54 = tpu.concatenate %26, %53 in 1 : vector<8x64xf32>, vector<8x64xf32> -> vector<8x128xf32>
    %c0_37 = arith.constant 0 : index
    %c0_38 = arith.constant 0 : index
    %c0_39 = arith.constant 0 : index
    %55 = vector.load %arg6[%c0_37, %c0_38, %c0_39] : memref<1x8x128xf32, #tpu.memory_space<vmem>>, vector<1x8x128xf32>
    %56 = vector.shape_cast %55 : vector<1x8x128xf32> to vector<8x128xf32>
    %57 = vector.shape_cast %54 : vector<8x128xf32> to vector<1x8x128xf32>
    tpu.vector_store %arg6[%c0_37, %c0_38, %c0_39], %57 {strides = array<i32>} : memref<1x8x128xf32, #tpu.memory_space<vmem>>, vector<1x8x128xf32>,
    return
  }
  func.func @transform_0(%arg0: i32) -> i32 {
    %c0_i32 = arith.constant 0 : i32
    %c0_i32_0 = arith.constant 0 : i32
    return %c0_i32 : i32
  }
  func.func @transform_1(%arg0: i32) -> (i32, i32, i32, i32) {
    %c0_i32 = arith.constant 0 : i32
    %c0_i32_0 = arith.constant 0 : i32
    %c0_i32_1 = arith.constant 0 : i32
    %c0_i32_2 = arith.constant 0 : i32
    return %arg0, %c0_i32, %c0_i32_0, %c0_i32_1 : i32, i32, i32, i32
  }
  func.func @transform_2(%arg0: i32) -> (i32, i32, i32, i32) {
    %c0_i32 = arith.constant 0 : i32
    %c0_i32_0 = arith.constant 0 : i32
    %c0_i32_1 = arith.constant 0 : i32
    %c0_i32_2 = arith.constant 0 : i32
    return %arg0, %c0_i32, %c0_i32_0, %c0_i32_1 : i32, i32, i32, i32
  }
  func.func @transform_3(%arg0: i32) -> (i32, i32, i32) {
    %c0_i32 = arith.constant 0 : i32
    %c0_i32_0 = arith.constant 0 : i32
    %c0_i32_1 = arith.constant 0 : i32
    return %arg0, %c0_i32, %c0_i32_0 : i32, i32, i32
  }
  func.func @transform_4(%arg0: i32) -> (i32, i32, i32) {
    %c0_i32 = arith.constant 0 : i32
    %c0_i32_0 = arith.constant 0 : i32
    %c0_i32_1 = arith.constant 0 : i32
    %c0_i32_2 = arith.constant 0 : i32
    return %c0_i32, %c0_i32_0, %c0_i32_1 : i32, i32, i32
  }
  func.func @transform_5(%arg0: i32) -> (i32, i32, i32) {
    %c0_i32 = arith.constant 0 : i32
    %c0_i32_0 = arith.constant 0 : i32
    %c0_i32_1 = arith.constant 0 : i32
    return %arg0, %c0_i32, %c0_i32_0 : i32, i32, i32
  }
}

module attributes {stable_mosaic.version = 11 : i64} {
  func.func @_mm_kernel(%arg0: i32, %arg1: i32, %arg2: i32, %arg3: memref<64x96xbf16, #tpu.memory_space<vmem>>, %arg4: memref<96x16xbf16, #tpu.memory_space<vmem>>, %arg5: memref<1x16xf32, #tpu.memory_space<vmem>>, %arg6: memref<64x16xf32, #tpu.memory_space<vmem>>, %arg7: memref<64x16xf32, #tpu.memory_space<vmem>>, %arg8: memref<64x16xf32, #tpu.memory_space<vmem>>) attributes {dimension_semantics = [#tpu.dimension_semantics<parallel>, #tpu.dimension_semantics<parallel>, #tpu.dimension_semantics<arbitrary>], iteration_bounds = array<i64: 2, 1, 1>, scalar_prefetch = 0 : i64, scratch_operands = 1 : i64, tpu.core_type = #tpu.core_type<tc>, window_params = [{transform_indices = @transform_0, window_bounds = array<i64: 64, 96>}, {transform_indices = @transform_1, window_bounds = array<i64: 96, 16>}, {transform_indices = @transform_2, window_bounds = array<i64: 1, 16>}, {transform_indices = @transform_3, window_bounds = array<i64: 64, 16>}, {transform_indices = @transform_4, window_bounds = array<i64: 64, 16>}]} {
    %c0_i32 = arith.constant 0 : i32
    %0 = arith.cmpi eq, %arg2, %c0_i32 : i32
    %1 = arith.extui %0 : i1 to i32
    %c0_i32_0 = arith.constant 0 : i32
    %2 = arith.cmpi ne, %1, %c0_i32_0 : i32
    scf.if %2 {
      %cst_10 = arith.constant 0.000000e+00 : f32
      %12 = vector.broadcast %cst_10 : f32 to vector<64x16xf32>
      %c0_11 = arith.constant 0 : index
      %c0_12 = arith.constant 0 : index
      %13 = vector.load %arg8[%c0_11, %c0_12] : memref<64x16xf32, #tpu.memory_space<vmem>>, vector<64x16xf32>
      tpu.vector_store %arg8[%c0_11, %c0_12], %12 {strides = array<i32>} : memref<64x16xf32, #tpu.memory_space<vmem>>, vector<64x16xf32>,
    } else {
    }
    %c0 = arith.constant 0 : index
    %c0_1 = arith.constant 0 : index
    %3 = vector.load %arg8[%c0, %c0_1] : memref<64x16xf32, #tpu.memory_space<vmem>>, vector<64x16xf32>
    %c0_2 = arith.constant 0 : index
    %c0_3 = arith.constant 0 : index
    %4 = vector.load %arg3[%c0_2, %c0_3] : memref<64x96xbf16, #tpu.memory_space<vmem>>, vector<64x96xbf16>
    %c0_4 = arith.constant 0 : index
    %c0_5 = arith.constant 0 : index
    %5 = vector.load %arg4[%c0_4, %c0_5] : memref<96x16xbf16, #tpu.memory_space<vmem>>, vector<96x16xbf16>
    %cst = arith.constant dense<0.000000e+00> : vector<64x16xf32>
    %6 = tpu.matmul %4, %5, %cst {dimension_numbers = #tpu.dot_dimension_numbers<[1], [0], [0], [1], [0, 0, 1, 1], [], []>} : vector<64x96xbf16>, vector<96x16xbf16>, vector<64x16xf32> -> vector<64x16xf32>
    %7 = arith.addf %3, %6 : vector<64x16xf32>
    %c0_6 = arith.constant 0 : index
    %c0_7 = arith.constant 0 : index
    %8 = vector.load %arg8[%c0_6, %c0_7] : memref<64x16xf32, #tpu.memory_space<vmem>>, vector<64x16xf32>
    tpu.vector_store %arg8[%c0_6, %c0_7], %7 {strides = array<i32>} : memref<64x16xf32, #tpu.memory_space<vmem>>, vector<64x16xf32>,
    %c0_i32_8 = arith.constant 0 : i32
    %9 = arith.cmpi eq, %arg2, %c0_i32_8 : i32
    %10 = arith.extui %9 : i1 to i32
    %c0_i32_9 = arith.constant 0 : i32
    %11 = arith.cmpi ne, %10, %c0_i32_9 : i32
    scf.if %11 {
      %c0_10 = arith.constant 0 : index
      %c0_11 = arith.constant 0 : index
      %12 = vector.load %arg8[%c0_10, %c0_11] : memref<64x16xf32, #tpu.memory_space<vmem>>, vector<64x16xf32>
      %c0_12 = arith.constant 0 : index
      %c0_13 = arith.constant 0 : index
      %13 = vector.load %arg5[%c0_12, %c0_13] : memref<1x16xf32, #tpu.memory_space<vmem>>, vector<1x16xf32>
      %14 = vector.broadcast %13 : vector<1x16xf32> to vector<64x16xf32>
      %15 = arith.addf %12, %14 : vector<64x16xf32>
      %c0_14 = arith.constant 0 : index
      %c0_15 = arith.constant 0 : index
      %16 = vector.load %arg6[%c0_14, %c0_15] : memref<64x16xf32, #tpu.memory_space<vmem>>, vector<64x16xf32>
      %17 = arith.addf %15, %16 : vector<64x16xf32>
      %cst_16 = arith.constant 0.000000e+00 : f32
      %18 = vector.broadcast %cst_16 : f32 to vector<64x16xf32>
      %19 = arith.cmpf oge, %17, %18 : vector<64x16xf32>
      %cst_17 = arith.constant 1.000000e-01 : f32
      %20 = vector.broadcast %cst_17 : f32 to vector<64x16xf32>
      %21 = arith.mulf %20, %17 : vector<64x16xf32>
      %22 = arith.select %19, %17, %21 : vector<64x16xi1>, vector<64x16xf32>
      %c0_18 = arith.constant 0 : index
      %c0_19 = arith.constant 0 : index
      %23 = vector.load %arg7[%c0_18, %c0_19] : memref<64x16xf32, #tpu.memory_space<vmem>>, vector<64x16xf32>
      tpu.vector_store %arg7[%c0_18, %c0_19], %22 {strides = array<i32>} : memref<64x16xf32, #tpu.memory_space<vmem>>, vector<64x16xf32>,
    } else {
    }
    return
  }
  func.func @transform_0(%arg0: i32, %arg1: i32, %arg2: i32) -> (i32, i32) {
    %c0_i32 = arith.constant 0 : i32
    return %arg0, %arg2 : i32, i32
  }
  func.func @transform_1(%arg0: i32, %arg1: i32, %arg2: i32) -> (i32, i32) {
    %c0_i32 = arith.constant 0 : i32
    return %arg2, %arg1 : i32, i32
  }
  func.func @transform_2(%arg0: i32, %arg1: i32, %arg2: i32) -> (i32, i32) {
    %c0_i32 = arith.constant 0 : i32
    %c0_i32_0 = arith.constant 0 : i32
    return %c0_i32, %arg1 : i32, i32
  }
  func.func @transform_3(%arg0: i32, %arg1: i32, %arg2: i32) -> (i32, i32) {
    %c0_i32 = arith.constant 0 : i32
    return %arg0, %arg1 : i32, i32
  }
  func.func @transform_4(%arg0: i32, %arg1: i32, %arg2: i32) -> (i32, i32) {
    %c0_i32 = arith.constant 0 : i32
    return %arg0, %arg1 : i32, i32
  }
}

module attributes {stable_mosaic.version = 11 : i64} {
  func.func @_mm_kernel(%arg0: i32, %arg1: i32, %arg2: i32, %arg3: memref<64x16xbf16, #tpu.memory_space<vmem>>, %arg4: memref<16x32xbf16, #tpu.memory_space<vmem>>, %arg5: memref<1x32xf32, #tpu.memory_space<vmem>>, %arg6: memref<64x32xf32, #tpu.memory_space<vmem>>, %arg7: memref<64x32xf32, #tpu.memory_space<vmem>>) attributes {dimension_semantics = [#tpu.dimension_semantics<parallel>, #tpu.dimension_semantics<parallel>, #tpu.dimension_semantics<arbitrary>], iteration_bounds = array<i64: 2, 1, 1>, scalar_prefetch = 0 : i64, scratch_operands = 1 : i64, tpu.core_type = #tpu.core_type<tc>, window_params = [{transform_indices = @transform_0, window_bounds = array<i64: 64, 16>}, {transform_indices = @transform_1, window_bounds = array<i64: 16, 32>}, {transform_indices = @transform_2, window_bounds = array<i64: 1, 32>}, {transform_indices = @transform_3, window_bounds = array<i64: 64, 32>}]} {
    %c0_i32 = arith.constant 0 : i32
    %0 = arith.cmpi eq, %arg2, %c0_i32 : i32
    %1 = arith.extui %0 : i1 to i32
    %c0_i32_0 = arith.constant 0 : i32
    %2 = arith.cmpi ne, %1, %c0_i32_0 : i32
    scf.if %2 {
      %cst_10 = arith.constant 0.000000e+00 : f32
      %12 = vector.broadcast %cst_10 : f32 to vector<64x32xf32>
      %c0_11 = arith.constant 0 : index
      %c0_12 = arith.constant 0 : index
      %13 = vector.load %arg7[%c0_11, %c0_12] : memref<64x32xf32, #tpu.memory_space<vmem>>, vector<64x32xf32>
      tpu.vector_store %arg7[%c0_11, %c0_12], %12 {strides = array<i32>} : memref<64x32xf32, #tpu.memory_space<vmem>>, vector<64x32xf32>,
    } else {
    }
    %c0 = arith.constant 0 : index
    %c0_1 = arith.constant 0 : index
    %3 = vector.load %arg7[%c0, %c0_1] : memref<64x32xf32, #tpu.memory_space<vmem>>, vector<64x32xf32>
    %c0_2 = arith.constant 0 : index
    %c0_3 = arith.constant 0 : index
    %4 = vector.load %arg3[%c0_2, %c0_3] : memref<64x16xbf16, #tpu.memory_space<vmem>>, vector<64x16xbf16>
    %c0_4 = arith.constant 0 : index
    %c0_5 = arith.constant 0 : index
    %5 = vector.load %arg4[%c0_4, %c0_5] : memref<16x32xbf16, #tpu.memory_space<vmem>>, vector<16x32xbf16>
    %cst = arith.constant dense<0.000000e+00> : vector<64x32xf32>
    %6 = tpu.matmul %4, %5, %cst {dimension_numbers = #tpu.dot_dimension_numbers<[1], [0], [0], [1], [0, 0, 1, 1], [], []>} : vector<64x16xbf16>, vector<16x32xbf16>, vector<64x32xf32> -> vector<64x32xf32>
    %7 = arith.addf %3, %6 : vector<64x32xf32>
    %c0_6 = arith.constant 0 : index
    %c0_7 = arith.constant 0 : index
    %8 = vector.load %arg7[%c0_6, %c0_7] : memref<64x32xf32, #tpu.memory_space<vmem>>, vector<64x32xf32>
    tpu.vector_store %arg7[%c0_6, %c0_7], %7 {strides = array<i32>} : memref<64x32xf32, #tpu.memory_space<vmem>>, vector<64x32xf32>,
    %c0_i32_8 = arith.constant 0 : i32
    %9 = arith.cmpi eq, %arg2, %c0_i32_8 : i32
    %10 = arith.extui %9 : i1 to i32
    %c0_i32_9 = arith.constant 0 : i32
    %11 = arith.cmpi ne, %10, %c0_i32_9 : i32
    scf.if %11 {
      %c0_10 = arith.constant 0 : index
      %c0_11 = arith.constant 0 : index
      %12 = vector.load %arg7[%c0_10, %c0_11] : memref<64x32xf32, #tpu.memory_space<vmem>>, vector<64x32xf32>
      %c0_12 = arith.constant 0 : index
      %c0_13 = arith.constant 0 : index
      %13 = vector.load %arg5[%c0_12, %c0_13] : memref<1x32xf32, #tpu.memory_space<vmem>>, vector<1x32xf32>
      %14 = vector.broadcast %13 : vector<1x32xf32> to vector<64x32xf32>
      %15 = arith.addf %12, %14 : vector<64x32xf32>
      %c0_14 = arith.constant 0 : index
      %c0_15 = arith.constant 0 : index
      %16 = vector.load %arg6[%c0_14, %c0_15] : memref<64x32xf32, #tpu.memory_space<vmem>>, vector<64x32xf32>
      tpu.vector_store %arg6[%c0_14, %c0_15], %15 {strides = array<i32>} : memref<64x32xf32, #tpu.memory_space<vmem>>, vector<64x32xf32>,
    } else {
    }
    return
  }
  func.func @transform_0(%arg0: i32, %arg1: i32, %arg2: i32) -> (i32, i32) {
    %c0_i32 = arith.constant 0 : i32
    return %arg0, %arg2 : i32, i32
  }
  func.func @transform_1(%arg0: i32, %arg1: i32, %arg2: i32) -> (i32, i32) {
    %c0_i32 = arith.constant 0 : i32
    return %arg2, %arg1 : i32, i32
  }
  func.func @transform_2(%arg0: i32, %arg1: i32, %arg2: i32) -> (i32, i32) {
    %c0_i32 = arith.constant 0 : i32
    %c0_i32_0 = arith.constant 0 : i32
    return %c0_i32, %arg1 : i32, i32
  }
  func.func @transform_3(%arg0: i32, %arg1: i32, %arg2: i32) -> (i32, i32) {
    %c0_i32 = arith.constant 0 : i32
    return %arg0, %arg1 : i32, i32
  }
}

module attributes {stable_mosaic.version = 11 : i64} {
  func.func @_mm_kernel(%arg0: i32, %arg1: i32, %arg2: i32, %arg3: memref<64x48xbf16, #tpu.memory_space<vmem>>, %arg4: memref<48x16xbf16, #tpu.memory_space<vmem>>, %arg5: memref<1x16xf32, #tpu.memory_space<vmem>>, %arg6: memref<64x16xf32, #tpu.memory_space<vmem>>, %arg7: memref<64x16xf32, #tpu.memory_space<vmem>>, %arg8: memref<64x16xf32, #tpu.memory_space<vmem>>) attributes {dimension_semantics = [#tpu.dimension_semantics<parallel>, #tpu.dimension_semantics<parallel>, #tpu.dimension_semantics<arbitrary>], iteration_bounds = array<i64: 2, 1, 1>, scalar_prefetch = 0 : i64, scratch_operands = 1 : i64, tpu.core_type = #tpu.core_type<tc>, window_params = [{transform_indices = @transform_0, window_bounds = array<i64: 64, 48>}, {transform_indices = @transform_1, window_bounds = array<i64: 48, 16>}, {transform_indices = @transform_2, window_bounds = array<i64: 1, 16>}, {transform_indices = @transform_3, window_bounds = array<i64: 64, 16>}, {transform_indices = @transform_4, window_bounds = array<i64: 64, 16>}]} {
    %c0_i32 = arith.constant 0 : i32
    %0 = arith.cmpi eq, %arg2, %c0_i32 : i32
    %1 = arith.extui %0 : i1 to i32
    %c0_i32_0 = arith.constant 0 : i32
    %2 = arith.cmpi ne, %1, %c0_i32_0 : i32
    scf.if %2 {
      %cst_10 = arith.constant 0.000000e+00 : f32
      %12 = vector.broadcast %cst_10 : f32 to vector<64x16xf32>
      %c0_11 = arith.constant 0 : index
      %c0_12 = arith.constant 0 : index
      %13 = vector.load %arg8[%c0_11, %c0_12] : memref<64x16xf32, #tpu.memory_space<vmem>>, vector<64x16xf32>
      tpu.vector_store %arg8[%c0_11, %c0_12], %12 {strides = array<i32>} : memref<64x16xf32, #tpu.memory_space<vmem>>, vector<64x16xf32>,
    } else {
    }
    %c0 = arith.constant 0 : index
    %c0_1 = arith.constant 0 : index
    %3 = vector.load %arg8[%c0, %c0_1] : memref<64x16xf32, #tpu.memory_space<vmem>>, vector<64x16xf32>
    %c0_2 = arith.constant 0 : index
    %c0_3 = arith.constant 0 : index
    %4 = vector.load %arg3[%c0_2, %c0_3] : memref<64x48xbf16, #tpu.memory_space<vmem>>, vector<64x48xbf16>
    %c0_4 = arith.constant 0 : index
    %c0_5 = arith.constant 0 : index
    %5 = vector.load %arg4[%c0_4, %c0_5] : memref<48x16xbf16, #tpu.memory_space<vmem>>, vector<48x16xbf16>
    %cst = arith.constant dense<0.000000e+00> : vector<64x16xf32>
    %6 = tpu.matmul %4, %5, %cst {dimension_numbers = #tpu.dot_dimension_numbers<[1], [0], [0], [1], [0, 0, 1, 1], [], []>} : vector<64x48xbf16>, vector<48x16xbf16>, vector<64x16xf32> -> vector<64x16xf32>
    %7 = arith.addf %3, %6 : vector<64x16xf32>
    %c0_6 = arith.constant 0 : index
    %c0_7 = arith.constant 0 : index
    %8 = vector.load %arg8[%c0_6, %c0_7] : memref<64x16xf32, #tpu.memory_space<vmem>>, vector<64x16xf32>
    tpu.vector_store %arg8[%c0_6, %c0_7], %7 {strides = array<i32>} : memref<64x16xf32, #tpu.memory_space<vmem>>, vector<64x16xf32>,
    %c0_i32_8 = arith.constant 0 : i32
    %9 = arith.cmpi eq, %arg2, %c0_i32_8 : i32
    %10 = arith.extui %9 : i1 to i32
    %c0_i32_9 = arith.constant 0 : i32
    %11 = arith.cmpi ne, %10, %c0_i32_9 : i32
    scf.if %11 {
      %c0_10 = arith.constant 0 : index
      %c0_11 = arith.constant 0 : index
      %12 = vector.load %arg8[%c0_10, %c0_11] : memref<64x16xf32, #tpu.memory_space<vmem>>, vector<64x16xf32>
      %c0_12 = arith.constant 0 : index
      %c0_13 = arith.constant 0 : index
      %13 = vector.load %arg5[%c0_12, %c0_13] : memref<1x16xf32, #tpu.memory_space<vmem>>, vector<1x16xf32>
      %14 = vector.broadcast %13 : vector<1x16xf32> to vector<64x16xf32>
      %15 = arith.addf %12, %14 : vector<64x16xf32>
      %c0_14 = arith.constant 0 : index
      %c0_15 = arith.constant 0 : index
      %16 = vector.load %arg6[%c0_14, %c0_15] : memref<64x16xf32, #tpu.memory_space<vmem>>, vector<64x16xf32>
      %17 = arith.addf %15, %16 : vector<64x16xf32>
      %cst_16 = arith.constant 0.000000e+00 : f32
      %18 = vector.broadcast %cst_16 : f32 to vector<64x16xf32>
      %19 = arith.cmpf oge, %17, %18 : vector<64x16xf32>
      %cst_17 = arith.constant 1.000000e-01 : f32
      %20 = vector.broadcast %cst_17 : f32 to vector<64x16xf32>
      %21 = arith.mulf %20, %17 : vector<64x16xf32>
      %22 = arith.select %19, %17, %21 : vector<64x16xi1>, vector<64x16xf32>
      %c0_18 = arith.constant 0 : index
      %c0_19 = arith.constant 0 : index
      %23 = vector.load %arg7[%c0_18, %c0_19] : memref<64x16xf32, #tpu.memory_space<vmem>>, vector<64x16xf32>
      tpu.vector_store %arg7[%c0_18, %c0_19], %22 {strides = array<i32>} : memref<64x16xf32, #tpu.memory_space<vmem>>, vector<64x16xf32>,
    } else {
    }
    return
  }
  func.func @transform_0(%arg0: i32, %arg1: i32, %arg2: i32) -> (i32, i32) {
    %c0_i32 = arith.constant 0 : i32
    return %arg0, %arg2 : i32, i32
  }
  func.func @transform_1(%arg0: i32, %arg1: i32, %arg2: i32) -> (i32, i32) {
    %c0_i32 = arith.constant 0 : i32
    return %arg2, %arg1 : i32, i32
  }
  func.func @transform_2(%arg0: i32, %arg1: i32, %arg2: i32) -> (i32, i32) {
    %c0_i32 = arith.constant 0 : i32
    %c0_i32_0 = arith.constant 0 : i32
    return %c0_i32, %arg1 : i32, i32
  }
  func.func @transform_3(%arg0: i32, %arg1: i32, %arg2: i32) -> (i32, i32) {
    %c0_i32 = arith.constant 0 : i32
    return %arg0, %arg1 : i32, i32
  }
  func.func @transform_4(%arg0: i32, %arg1: i32, %arg2: i32) -> (i32, i32) {
    %c0_i32 = arith.constant 0 : i32
    return %arg0, %arg1 : i32, i32
  }
}

module attributes {stable_mosaic.version = 11 : i64} {
  func.func @_mm_kernel(%arg0: i32, %arg1: i32, %arg2: i32, %arg3: memref<64x96xbf16, #tpu.memory_space<vmem>>, %arg4: memref<96x32xbf16, #tpu.memory_space<vmem>>, %arg5: memref<1x32xf32, #tpu.memory_space<vmem>>, %arg6: memref<64x32xf32, #tpu.memory_space<vmem>>, %arg7: memref<64x32xf32, #tpu.memory_space<vmem>>, %arg8: memref<64x32xf32, #tpu.memory_space<vmem>>) attributes {dimension_semantics = [#tpu.dimension_semantics<parallel>, #tpu.dimension_semantics<parallel>, #tpu.dimension_semantics<arbitrary>], iteration_bounds = array<i64: 2, 1, 1>, scalar_prefetch = 0 : i64, scratch_operands = 1 : i64, tpu.core_type = #tpu.core_type<tc>, window_params = [{transform_indices = @transform_0, window_bounds = array<i64: 64, 96>}, {transform_indices = @transform_1, window_bounds = array<i64: 96, 32>}, {transform_indices = @transform_2, window_bounds = array<i64: 1, 32>}, {transform_indices = @transform_3, window_bounds = array<i64: 64, 32>}, {transform_indices = @transform_4, window_bounds = array<i64: 64, 32>}]} {
    %c0_i32 = arith.constant 0 : i32
    %0 = arith.cmpi eq, %arg2, %c0_i32 : i32
    %1 = arith.extui %0 : i1 to i32
    %c0_i32_0 = arith.constant 0 : i32
    %2 = arith.cmpi ne, %1, %c0_i32_0 : i32
    scf.if %2 {
      %cst_10 = arith.constant 0.000000e+00 : f32
      %12 = vector.broadcast %cst_10 : f32 to vector<64x32xf32>
      %c0_11 = arith.constant 0 : index
      %c0_12 = arith.constant 0 : index
      %13 = vector.load %arg8[%c0_11, %c0_12] : memref<64x32xf32, #tpu.memory_space<vmem>>, vector<64x32xf32>
      tpu.vector_store %arg8[%c0_11, %c0_12], %12 {strides = array<i32>} : memref<64x32xf32, #tpu.memory_space<vmem>>, vector<64x32xf32>,
    } else {
    }
    %c0 = arith.constant 0 : index
    %c0_1 = arith.constant 0 : index
    %3 = vector.load %arg8[%c0, %c0_1] : memref<64x32xf32, #tpu.memory_space<vmem>>, vector<64x32xf32>
    %c0_2 = arith.constant 0 : index
    %c0_3 = arith.constant 0 : index
    %4 = vector.load %arg3[%c0_2, %c0_3] : memref<64x96xbf16, #tpu.memory_space<vmem>>, vector<64x96xbf16>
    %c0_4 = arith.constant 0 : index
    %c0_5 = arith.constant 0 : index
    %5 = vector.load %arg4[%c0_4, %c0_5] : memref<96x32xbf16, #tpu.memory_space<vmem>>, vector<96x32xbf16>
    %cst = arith.constant dense<0.000000e+00> : vector<64x32xf32>
    %6 = tpu.matmul %4, %5, %cst {dimension_numbers = #tpu.dot_dimension_numbers<[1], [0], [0], [1], [0, 0, 1, 1], [], []>} : vector<64x96xbf16>, vector<96x32xbf16>, vector<64x32xf32> -> vector<64x32xf32>
    %7 = arith.addf %3, %6 : vector<64x32xf32>
    %c0_6 = arith.constant 0 : index
    %c0_7 = arith.constant 0 : index
    %8 = vector.load %arg8[%c0_6, %c0_7] : memref<64x32xf32, #tpu.memory_space<vmem>>, vector<64x32xf32>
    tpu.vector_store %arg8[%c0_6, %c0_7], %7 {strides = array<i32>} : memref<64x32xf32, #tpu.memory_space<vmem>>, vector<64x32xf32>,
    %c0_i32_8 = arith.constant 0 : i32
    %9 = arith.cmpi eq, %arg2, %c0_i32_8 : i32
    %10 = arith.extui %9 : i1 to i32
    %c0_i32_9 = arith.constant 0 : i32
    %11 = arith.cmpi ne, %10, %c0_i32_9 : i32
    scf.if %11 {
      %c0_10 = arith.constant 0 : index
      %c0_11 = arith.constant 0 : index
      %12 = vector.load %arg8[%c0_10, %c0_11] : memref<64x32xf32, #tpu.memory_space<vmem>>, vector<64x32xf32>
      %c0_12 = arith.constant 0 : index
      %c0_13 = arith.constant 0 : index
      %13 = vector.load %arg5[%c0_12, %c0_13] : memref<1x32xf32, #tpu.memory_space<vmem>>, vector<1x32xf32>
      %14 = vector.broadcast %13 : vector<1x32xf32> to vector<64x32xf32>
      %15 = arith.addf %12, %14 : vector<64x32xf32>
      %c0_14 = arith.constant 0 : index
      %c0_15 = arith.constant 0 : index
      %16 = vector.load %arg6[%c0_14, %c0_15] : memref<64x32xf32, #tpu.memory_space<vmem>>, vector<64x32xf32>
      %17 = arith.addf %15, %16 : vector<64x32xf32>
      %cst_16 = arith.constant 0.000000e+00 : f32
      %18 = vector.broadcast %cst_16 : f32 to vector<64x32xf32>
      %19 = arith.cmpf oge, %17, %18 : vector<64x32xf32>
      %cst_17 = arith.constant 1.000000e-01 : f32
      %20 = vector.broadcast %cst_17 : f32 to vector<64x32xf32>
      %21 = arith.mulf %20, %17 : vector<64x32xf32>
      %22 = arith.select %19, %17, %21 : vector<64x32xi1>, vector<64x32xf32>
      %c0_18 = arith.constant 0 : index
      %c0_19 = arith.constant 0 : index
      %23 = vector.load %arg7[%c0_18, %c0_19] : memref<64x32xf32, #tpu.memory_space<vmem>>, vector<64x32xf32>
      tpu.vector_store %arg7[%c0_18, %c0_19], %22 {strides = array<i32>} : memref<64x32xf32, #tpu.memory_space<vmem>>, vector<64x32xf32>,
    } else {
    }
    return
  }
  func.func @transform_0(%arg0: i32, %arg1: i32, %arg2: i32) -> (i32, i32) {
    %c0_i32 = arith.constant 0 : i32
    return %arg0, %arg2 : i32, i32
  }
  func.func @transform_1(%arg0: i32, %arg1: i32, %arg2: i32) -> (i32, i32) {
    %c0_i32 = arith.constant 0 : i32
    return %arg2, %arg1 : i32, i32
  }
  func.func @transform_2(%arg0: i32, %arg1: i32, %arg2: i32) -> (i32, i32) {
    %c0_i32 = arith.constant 0 : i32
    %c0_i32_0 = arith.constant 0 : i32
    return %c0_i32, %arg1 : i32, i32
  }
  func.func @transform_3(%arg0: i32, %arg1: i32, %arg2: i32) -> (i32, i32) {
    %c0_i32 = arith.constant 0 : i32
    return %arg0, %arg1 : i32, i32
  }
  func.func @transform_4(%arg0: i32, %arg1: i32, %arg2: i32) -> (i32, i32) {
    %c0_i32 = arith.constant 0 : i32
    return %arg0, %arg1 : i32, i32
  }
}

module attributes {stable_mosaic.version = 11 : i64} {
  func.func @_mm_kernel(%arg0: i32, %arg1: i32, %arg2: i32, %arg3: memref<64x32xbf16, #tpu.memory_space<vmem>>, %arg4: memref<32x32xbf16, #tpu.memory_space<vmem>>, %arg5: memref<1x32xf32, #tpu.memory_space<vmem>>, %arg6: memref<64x32xf32, #tpu.memory_space<vmem>>, %arg7: memref<64x32xf32, #tpu.memory_space<vmem>>) attributes {dimension_semantics = [#tpu.dimension_semantics<parallel>, #tpu.dimension_semantics<parallel>, #tpu.dimension_semantics<arbitrary>], iteration_bounds = array<i64: 2, 1, 1>, scalar_prefetch = 0 : i64, scratch_operands = 1 : i64, tpu.core_type = #tpu.core_type<tc>, window_params = [{transform_indices = @transform_0, window_bounds = array<i64: 64, 32>}, {transform_indices = @transform_1, window_bounds = array<i64: 32, 32>}, {transform_indices = @transform_2, window_bounds = array<i64: 1, 32>}, {transform_indices = @transform_3, window_bounds = array<i64: 64, 32>}]} {
    %c0_i32 = arith.constant 0 : i32
    %0 = arith.cmpi eq, %arg2, %c0_i32 : i32
    %1 = arith.extui %0 : i1 to i32
    %c0_i32_0 = arith.constant 0 : i32
    %2 = arith.cmpi ne, %1, %c0_i32_0 : i32
    scf.if %2 {
      %cst_10 = arith.constant 0.000000e+00 : f32
      %12 = vector.broadcast %cst_10 : f32 to vector<64x32xf32>
      %c0_11 = arith.constant 0 : index
      %c0_12 = arith.constant 0 : index
      %13 = vector.load %arg7[%c0_11, %c0_12] : memref<64x32xf32, #tpu.memory_space<vmem>>, vector<64x32xf32>
      tpu.vector_store %arg7[%c0_11, %c0_12], %12 {strides = array<i32>} : memref<64x32xf32, #tpu.memory_space<vmem>>, vector<64x32xf32>,
    } else {
    }
    %c0 = arith.constant 0 : index
    %c0_1 = arith.constant 0 : index
    %3 = vector.load %arg7[%c0, %c0_1] : memref<64x32xf32, #tpu.memory_space<vmem>>, vector<64x32xf32>
    %c0_2 = arith.constant 0 : index
    %c0_3 = arith.constant 0 : index
    %4 = vector.load %arg3[%c0_2, %c0_3] : memref<64x32xbf16, #tpu.memory_space<vmem>>, vector<64x32xbf16>
    %c0_4 = arith.constant 0 : index
    %c0_5 = arith.constant 0 : index
    %5 = vector.load %arg4[%c0_4, %c0_5] : memref<32x32xbf16, #tpu.memory_space<vmem>>, vector<32x32xbf16>
    %cst = arith.constant dense<0.000000e+00> : vector<64x32xf32>
    %6 = tpu.matmul %4, %5, %cst {dimension_numbers = #tpu.dot_dimension_numbers<[1], [0], [0], [1], [0, 0, 1, 1], [], []>} : vector<64x32xbf16>, vector<32x32xbf16>, vector<64x32xf32> -> vector<64x32xf32>
    %7 = arith.addf %3, %6 : vector<64x32xf32>
    %c0_6 = arith.constant 0 : index
    %c0_7 = arith.constant 0 : index
    %8 = vector.load %arg7[%c0_6, %c0_7] : memref<64x32xf32, #tpu.memory_space<vmem>>, vector<64x32xf32>
    tpu.vector_store %arg7[%c0_6, %c0_7], %7 {strides = array<i32>} : memref<64x32xf32, #tpu.memory_space<vmem>>, vector<64x32xf32>,
    %c0_i32_8 = arith.constant 0 : i32
    %9 = arith.cmpi eq, %arg2, %c0_i32_8 : i32
    %10 = arith.extui %9 : i1 to i32
    %c0_i32_9 = arith.constant 0 : i32
    %11 = arith.cmpi ne, %10, %c0_i32_9 : i32
    scf.if %11 {
      %c0_10 = arith.constant 0 : index
      %c0_11 = arith.constant 0 : index
      %12 = vector.load %arg7[%c0_10, %c0_11] : memref<64x32xf32, #tpu.memory_space<vmem>>, vector<64x32xf32>
      %c0_12 = arith.constant 0 : index
      %c0_13 = arith.constant 0 : index
      %13 = vector.load %arg5[%c0_12, %c0_13] : memref<1x32xf32, #tpu.memory_space<vmem>>, vector<1x32xf32>
      %14 = vector.broadcast %13 : vector<1x32xf32> to vector<64x32xf32>
      %15 = arith.addf %12, %14 : vector<64x32xf32>
      %c0_14 = arith.constant 0 : index
      %c0_15 = arith.constant 0 : index
      %16 = vector.load %arg6[%c0_14, %c0_15] : memref<64x32xf32, #tpu.memory_space<vmem>>, vector<64x32xf32>
      tpu.vector_store %arg6[%c0_14, %c0_15], %15 {strides = array<i32>} : memref<64x32xf32, #tpu.memory_space<vmem>>, vector<64x32xf32>,
    } else {
    }
    return
  }
  func.func @transform_0(%arg0: i32, %arg1: i32, %arg2: i32) -> (i32, i32) {
    %c0_i32 = arith.constant 0 : i32
    return %arg0, %arg2 : i32, i32
  }
  func.func @transform_1(%arg0: i32, %arg1: i32, %arg2: i32) -> (i32, i32) {
    %c0_i32 = arith.constant 0 : i32
    return %arg2, %arg1 : i32, i32
  }
  func.func @transform_2(%arg0: i32, %arg1: i32, %arg2: i32) -> (i32, i32) {
    %c0_i32 = arith.constant 0 : i32
    %c0_i32_0 = arith.constant 0 : i32
    return %c0_i32, %arg1 : i32, i32
  }
  func.func @transform_3(%arg0: i32, %arg1: i32, %arg2: i32) -> (i32, i32) {
    %c0_i32 = arith.constant 0 : i32
    return %arg0, %arg1 : i32, i32
  }
}

</mosaic_0001>

<llo_original>
// kernel: _lambda_.10
$region0: #{_lambda_.10}
  #allocation0 [shape = 'u32[]', space=smem, size = 0x4, offset = 0x4, fixed_abs, tag = 'smem constant byte address 0x4 - core index']
  #allocation1 [shape = 'u32[72,128]{1,0:T(1,128)}', space=vmem, size = 0x9000, scoped, tag = 'internal scratch']
  #allocation2 [shape = 'f32[64,32]{1,0:T(8,128)}', space=vmem, size = 0x8000, scoped, tag = 'scratch operand']
  %s0 = inlined_call_operand.vmem [shape: bf16[128,16], index: 0, kind: input, shape index: {}]
  %s1 = inlined_call_operand.vmem [shape: bf16[16,32], index: 1, kind: input, shape index: {}]
  %s2 = inlined_call_operand.vmem [shape: f32[1,32], index: 2, kind: input, shape index: {}]
  %s3 = inlined_call_operand.vmem [shape: bf16[128,32], index: 3, kind: output, shape index: {}]
  %s4 = sld [smem:[#allocation0]]
  $region53: #{_lambda_.10} parent=0
    _
  %s6 = ssub.s32 1, %s4
  %s7 = scalar_select 0, %s6, %s4
  loop: start=0, step=1, limit=4
  $region2: #{_lambda_.10} parent=0 // loop_pre_header
    _
  $region3: #{_lambda_.10} parent=0 // loop_header
    %s9 = sphi 0, %s13
    %p10 = scmp.ge.s32.totalorder %s9, 4
    %s16 = sphi 0, %s35
    %s17 = sphi 0, %s31
    %s18 = sphi 0, %s27
    %s19 = sphi 0, %s16
    %s20 = sphi 0, %s17
    %s21 = sphi 0, %s18
    %s22 = sphi 0, %s19
    %s23 = sphi 0, %s20
    %s24 = sphi 0, %s21
    %s40 = sphi 0, %s42
    %s43 = sphi 0, %s40
    %s44 = sphi 0, %s43
    %s60 = sphi 0, %s44
    %s68 = sphi 0, %s70
    %s71 = sphi 0, %s68
    %s72 = sphi 0, %s71
    %s88 = sphi 0, %s72
    %s94 = sphi 0, %s96
    %s97 = sphi 0, %s94
    %s98 = sphi 0, %s97
    %s114 = sphi 0, %s98
    %s122 = sphi 0, %s124
    %s125 = sphi 0, %s122
    %s126 = sphi 0, %s125
    %s142 = sphi 0, %s126
  $region4: #{_lambda_.10} parent=0 // loop_header_branch
    %12 = sbr.rel (%p10) target = $region8
  $region5: #{_lambda_.10} parent=0 // loop_body
    %s14 = ssub.s32 %s9, 1
    %s15 = ssub.s32 %s9, 2
    %s25 = sadd.s32 1, %s18
    %p26 = scmp.ge.s32.totalorder %s25, 1
    %s27 = scalar_select %p26, 0, %s25
    %s28 = sadd.s32 1, %s17
    %s29 = scalar_select %p26, %s28, %s17
    %p30 = scmp.ge.s32.totalorder %s29, 1
    %s31 = scalar_select %p30, 0, %s29
    %s32 = sadd.s32 1, %s16
    %s33 = scalar_select %p30, %s32, %s16
    %p34 = scmp.ge.s32.totalorder %s33, 2
    %s35 = scalar_select %p34, 0, %s33
    %s36 = ssub.s32 %s16, %s35
    %s37 = ssub.s32 %s18, %s27
    %s38 = sor.u32 %s36, %s37
    %p39 = scmp.eq.s32.totalorder %s38, 0
    %s41 = sadd.s32 %s40, 1
    %s42 = scalar_select %p39, %s40, %s41
    %p45 = pneg %p39
    %p46 = scmp.eq.s32.totalorder %s9, 1
    %p47 = por %p45, %p46
    %p48 = scmp.ne.s32.totalorder %s40, %s43
    %p49 = scmp.eq.s32.totalorder %s9, 0
    %p50 = por %p48, %p49
    %p51 = scmp.ne.s32.totalorder %s40, %s43
    %p52 = scmp.eq.s32.totalorder %s14, 1
    %p53 = por %p51, %p52
    %p54 = scmp.ne.s32.totalorder %s43, %s44
    %p55 = scmp.eq.s32.totalorder %s14, 0
    %p56 = por %p54, %p55
    %p57 = scmp.ne.s32.totalorder %s43, %s44
    %p58 = scmp.eq.s32.totalorder %s15, 1
    %p59 = por %p57, %p58
    %p61 = scmp.ne.s32.totalorder %s44, %s60
    %p62 = scmp.eq.s32.totalorder %s15, 0
    %p63 = por %p61, %p62
    %s64 = ssub.s32 %s18, %s27
    %s65 = ssub.s32 %s17, %s31
    %s66 = sor.u32 %s64, %s65
    %p67 = scmp.eq.s32.totalorder %s66, 0
    %s69 = sadd.s32 %s68, 1
    %s70 = scalar_select %p67, %s68, %s69
    %p73 = pneg %p67
    %p74 = scmp.eq.s32.totalorder %s9, 1
    %p75 = por %p73, %p74
    %p76 = scmp.ne.s32.totalorder %s68, %s71
    %p77 = scmp.eq.s32.totalorder %s9, 0
    %p78 = por %p76, %p77
    %p79 = scmp.ne.s32.totalorder %s68, %s71
    %p80 = scmp.eq.s32.totalorder %s14, 1
    %p81 = por %p79, %p80
    %p82 = scmp.ne.s32.totalorder %s71, %s72
    %p83 = scmp.eq.s32.totalorder %s14, 0
    %p84 = por %p82, %p83
    %p85 = scmp.ne.s32.totalorder %s71, %s72
    %p86 = scmp.eq.s32.totalorder %s15, 1
    %p87 = por %p85, %p86
    %p89 = scmp.ne.s32.totalorder %s72, %s88
    %p90 = scmp.eq.s32.totalorder %s15, 0
    %p91 = por %p89, %p90
    %s92 = ssub.s32 %s17, %s31
    %p93 = scmp.eq.s32.totalorder %s92, 0
    %s95 = sadd.s32 %s94, 1
    %s96 = scalar_select %p93, %s94, %s95
    %p99 = pneg %p93
    %p100 = scmp.eq.s32.totalorder %s9, 1
    %p101 = por %p99, %p100
    %p102 = scmp.ne.s32.totalorder %s94, %s97
    %p103 = scmp.eq.s32.totalorder %s9, 0
    %p104 = por %p102, %p103
    %p105 = scmp.ne.s32.totalorder %s94, %s97
    %p106 = scmp.eq.s32.totalorder %s14, 1
    %p107 = por %p105, %p106
    %p108 = scmp.ne.s32.totalorder %s97, %s98
    %p109 = scmp.eq.s32.totalorder %s14, 0
    %p110 = por %p108, %p109
    %p111 = scmp.ne.s32.totalorder %s97, %s98
    %p112 = scmp.eq.s32.totalorder %s15, 1
    %p113 = por %p111, %p112
    %p115 = scmp.ne.s32.totalorder %s98, %s114
    %p116 = scmp.eq.s32.totalorder %s15, 0
    %p117 = por %p115, %p116
    %s118 = ssub.s32 %s16, %s35
    %s119 = ssub.s32 %s17, %s31
    %s120 = sor.u32 %s118, %s119
    %p121 = scmp.eq.s32.totalorder %s120, 0
    %s123 = sadd.s32 %s122, 1
    %s124 = scalar_select %p121, %s122, %s123
    %p127 = pneg %p121
    %p128 = scmp.eq.s32.totalorder %s9, 1
    %p129 = por %p127, %p128
    %p130 = scmp.ne.s32.totalorder %s122, %s125
    %p131 = scmp.eq.s32.totalorder %s9, 0
    %p132 = por %p130, %p131
    %p133 = scmp.ne.s32.totalorder %s122, %s125
    %p134 = scmp.eq.s32.totalorder %s14, 1
    %p135 = por %p133, %p134
    %p136 = scmp.ne.s32.totalorder %s125, %s126
    %p137 = scmp.eq.s32.totalorder %s14, 0
    %p138 = por %p136, %p137
    %p139 = scmp.ne.s32.totalorder %s125, %s126
    %p140 = scmp.eq.s32.totalorder %s15, 1
    %p141 = por %p139, %p140
    %p143 = scmp.ne.s32.totalorder %s126, %s142
    %p144 = scmp.eq.s32.totalorder %s15, 0
    %p145 = por %p143, %p144
    %p146 = scmp.le.s32.totalorder 1, %s9
    %p147 = scmp.lt.s32.totalorder %s9, 3
    %p148 = pnand %p146, %p147
    %p149 = pneg %p148
    // Predicated region
    $region9: #{_lambda_.10} parent=5 // pred_check
      _
    $region10: #{_lambda_.10} parent=5 // pred_check_branch
      %151 = sbr.rel (%p148) target = $region12
    $region11: #{_lambda_.10} parent=5 // pred_region
      %s152 = ssub.s32 %s9, 1
      // Predicated region
      $region13: #{_lambda_.10} parent=11 // pred_check
        %p153 = pneg %p84
      $region14: #{_lambda_.10} parent=11 // pred_check_branch
        %155 = sbr.rel (%p153) target = $region16
      $region15: #{_lambda_.10} parent=11 // pred_region
        %s156 = smul.u32 2, %s21
        %p157 = scmp.lt.s32.totalorder %s156, 1
        %s158 = scalar_select %p157, %s156, 1
        %p159 = scmp.lt.s32.totalorder %s20, 0
        %s160 = scalar_select %p159, %s20, 0
        %s161 = sadd.s32 %s160, %s158
        %s162 = smul.addr %s161, 4
        %s163 = scalar_lea.vmem %s1, %s162
        %s164 = smul.u32 2, %s21
      $region16: #{_lambda_.10} parent=11 // pred_fallthru
        _
      // Predicated region
      $region17: #{_lambda_.10} parent=11 // pred_check
        %p165 = pneg %p110
      $region18: #{_lambda_.10} parent=11 // pred_check_branch
        %167 = sbr.rel (%p165) target = $region20
      $region19: #{_lambda_.10} parent=11 // pred_region
        %p168 = scmp.lt.s32.totalorder %s20, 0
        %s169 = scalar_select %p168, %s20, 0
        %s170 = scalar_lea.vmem %s2, %s169
      $region20: #{_lambda_.10} parent=11 // pred_fallthru
        _
    $region12: #{_lambda_.10} parent=5 // pred_fallthru
      _
    %p171 = scmp.lt.s32.totalorder %s9, 2
    // Predicated region
    $region21: #{_lambda_.10} parent=5 // pred_check
      %p172 = pneg %p171
    $region22: #{_lambda_.10} parent=5 // pred_check_branch
      %174 = sbr.rel (%p172) target = $region24
    $region23: #{_lambda_.10} parent=5 // pred_region
      // Predicated region
      $region25: #{_lambda_.10} parent=23 // pred_check
        %p175 = pneg %p50
      $region26: #{_lambda_.10} parent=23 // pred_check_branch
        %177 = sbr.rel (%p175) target = $region28
      $region27: #{_lambda_.10} parent=23 // pred_region
        %s178 = smul.u32 8, %s16
        %p179 = scmp.lt.s32.totalorder %s178, 15
        %s180 = scalar_select %p179, %s178, 15
        %p181 = scmp.lt.s32.totalorder %s18, 0
        %s182 = scalar_select %p181, %s18, 0
        %s183 = sadd.s32 %s182, %s180
        %s184 = smul.addr %s183, 4
        %s185 = scalar_lea.vmem %s0, %s184
        %s186 = smul.u32 8, %s16
      $region28: #{_lambda_.10} parent=23 // pred_fallthru
        _
    $region24: #{_lambda_.10} parent=5 // pred_fallthru
      _
    %p187 = scmp.le.s32.totalorder 1, %s9
    %p188 = scmp.lt.s32.totalorder %s9, 3
    %p189 = pnand %p187, %p188
    %p190 = pneg %p189
    // Predicated region
    $region29: #{_lambda_.10} parent=5 // pred_check
      _
    $region30: #{_lambda_.10} parent=5 // pred_check_branch
      %192 = sbr.rel (%p189) target = $region32
    $region31: #{_lambda_.10} parent=5 // pred_region
      %s193 = ssub.s32 %s9, 1
      %s194 = smul.u32 8, %s19
      %p195 = scmp.lt.s32.totalorder %s194, 15
      %s196 = scalar_select %p195, %s194, 15
      %p197 = scmp.lt.s32.totalorder %s21, 0
      %s198 = scalar_select %p197, %s21, 0
      %s199 = sadd.s32 %s198, %s196
      %s200 = smul.addr %s199, 4
      %s201 = scalar_lea.vmem %s0, %s200
      %p202 = pneg %p56
      %p203 = pneg %p53
      %s204 = smul.u32 2, %s21
      %p205 = scmp.lt.s32.totalorder %s204, 1
      %s206 = scalar_select %p205, %s204, 1
      %p207 = scmp.lt.s32.totalorder %s20, 0
      %s208 = scalar_select %p207, %s20, 0
      %s209 = sadd.s32 %s208, %s206
      %s210 = smul.addr %s209, 4
      %s211 = scalar_lea.vmem %s1, %s210
      %p212 = pneg %p84
      %p213 = pneg %p81
      %p214 = scmp.lt.s32.totalorder %s20, 0
      %s215 = scalar_select %p214, %s20, 0
      %s216 = scalar_lea.vmem %s2, %s215
      %p217 = pneg %p110
      %p218 = pneg %p107
      %p219 = pneg %p138
      %p220 = pneg %p135
      %s221 = smul.u32 8, %s19
      %p222 = scmp.lt.s32.totalorder %s221, 15
      %s223 = scalar_select %p222, %s221, 15
      %p224 = scmp.lt.s32.totalorder %s20, 0
      %s225 = scalar_select %p224, %s20, 0
      %s226 = sadd.s32 %s225, %s223
      %s227 = smul.addr %s226, 4
      %s228 = scalar_lea.vmem %s3, %s227
      %s229 = smul.u32 8, %s19
      %p230 = scmp.lt.s32.totalorder %s229, 15
      %s231 = scalar_select %p230, %s229, 15
      %p232 = scmp.lt.s32.totalorder %s21, 0
      %s233 = scalar_select %p232, %s21, 0
      %s234 = sadd.s32 %s233, %s231
      %s235 = smul.addr %s234, 4
      %s236 = scalar_lea.vmem %s0, %s235
      %s237 = smul.u32 8, %s19
      %s238 = smul.u32 2, %s21
      %p239 = scmp.lt.s32.totalorder %s238, 1
      %s240 = scalar_select %p239, %s238, 1
      %p241 = scmp.lt.s32.totalorder %s20, 0
      %s242 = scalar_select %p241, %s20, 0
      %s243 = sadd.s32 %s242, %s240
      %s244 = smul.addr %s243, 4
      %s245 = scalar_lea.vmem %s1, %s244
      %s246 = smul.u32 2, %s21
      %p247 = scmp.lt.s32.totalorder %s20, 0
      %s248 = scalar_select %p247, %s20, 0
      %s249 = scalar_lea.vmem %s2, %s248
      %s250 = smul.u32 8, %s19
      %p251 = scmp.lt.s32.totalorder %s250, 15
      %s252 = scalar_select %p251, %s250, 15
      %p253 = scmp.lt.s32.totalorder %s20, 0
      %s254 = scalar_select %p253, %s20, 0
      %s255 = sadd.s32 %s254, %s252
      %s256 = smul.addr %s255, 4
      %s257 = scalar_lea.vmem %s3, %s256
      %s258 = smul.u32 8, %s19
      %p260 = scmp.eq.s32.totalorder %s21, 0
      // Predicated region
      $region33: #{_lambda_.10} parent=31 // pred_check
        %p261 = pneg %p260
      $region34: #{_lambda_.10} parent=31 // pred_check_branch
        %263 = sbr.rel (%p261) target = $region36
      $region35: #{_lambda_.10} parent=31 // pred_region
        %vm264 = vcmask 261120
        %265 = vst.msk [vmem:[#allocation2] sm:$0xff] %vm264, 0.0
        %266 = vst.msk [vmem:[#allocation2 + $0x8] sm:$0xff] %vm264, 0.0
        %267 = vst.msk [vmem:[#allocation2 + $0x10] sm:$0xff] %vm264, 0.0
        %268 = vst.msk [vmem:[#allocation2 + $0x18] sm:$0xff] %vm264, 0.0
        %269 = vst.msk [vmem:[#allocation2 + $0x20] sm:$0xff] %vm264, 0.0
        %270 = vst.msk [vmem:[#allocation2 + $0x28] sm:$0xff] %vm264, 0.0
        %271 = vst.msk [vmem:[#allocation2 + $0x30] sm:$0xff] %vm264, 0.0
        %272 = vst.msk [vmem:[#allocation2 + $0x38] sm:$0xff] %vm264, 0.0
      $region36: #{_lambda_.10} parent=31 // pred_fallthru
        _
      %v273 = vld [vmem:[#allocation2] sm:$0xff]
      %v274 = vld [vmem:[#allocation2 + $0x8] sm:$0xff]
      %v275 = vld [vmem:[#allocation2 + $0x10] sm:$0xff]
      %v276 = vld [vmem:[#allocation2 + $0x18] sm:$0xff]
      %v277 = vld [vmem:[#allocation2 + $0x20] sm:$0xff]
      %v278 = vld [vmem:[#allocation2 + $0x28] sm:$0xff]
      %v279 = vld [vmem:[#allocation2 + $0x30] sm:$0xff]
      %v280 = vld [vmem:[#allocation2 + $0x38] sm:$0xff]
      %v281 = vld [vmem:[%s236] sm:$0xf]
      %v282 = vld [vmem:[%s236 + $0x4] sm:$0xf]
      %v283 = vld [vmem:[%s236 + $0x8] sm:$0xf]
      %v284 = vld [vmem:[%s236 + $0xc] sm:$0xf]
      %v285 = vld [vmem:[%s236 + $0x10] sm:$0xf]
      %v286 = vld [vmem:[%s236 + $0x14] sm:$0xf]
      %v287 = vld [vmem:[%s236 + $0x18] sm:$0xf]
      %v288 = vld [vmem:[%s236 + $0x1c] sm:$0xf]
      %v289 = vld [vmem:[%s245] sm:$0xf]
      %v290 = vld [vmem:[%s245 + $0x4] sm:$0xf]
      %v299 = vunpack.c.l.b16 %v281
      %v300 = vunpack.c.l.b16 %v282
      %v301 = vunpack.c.l.b16 %v283
      %v302 = vunpack.c.l.b16 %v284
      %v303 = vunpack.c.l.b16 %v285
      %v304 = vunpack.c.l.b16 %v286
      %v305 = vunpack.c.l.b16 %v287
      %v306 = vunpack.c.l.b16 %v288
      %v307 = vpack.c.b16 %v300, %v299
      %v308 = vpack.c.b16 %v302, %v301
      %v309 = vpack.c.b16 %v304, %v303
      %v310 = vpack.c.b16 %v306, %v305
      %v313 = vunpack.c.l.b16 %v289
      %v314 = vunpack.c.l.b16 %v290
      %v315 = vpack.c.b16 %v314, %v313
      %vm317 = vcmask 130048
      %v319 = vsel %vm317, %v307, 0
      %v322 = vsel %vm317, %v308, 0
      %v325 = vsel %vm317, %v309, 0
      %v328 = vsel %vm317, %v310, 0
      %330 = vmatpush.bf16.msra.mxu0 0
      %331 = vmatpush.bf16.msra.mxu0 0
      %332 = vmatpush.bf16.msra.mxu0 0
      %333 = vmatpush.bf16.msra.mxu0 0
      %334 = vmatpush.bf16.msra.mxu0 0
      %335 = vmatpush.bf16.msra.mxu0 0
      %336 = vmatpush.bf16.msra.mxu0 0
      %337 = vmatpush.bf16.msra.mxu0 %v315
      %338 = vmatmul.bf16.gmra.mxu0 %v319
      %v339 = vpop.f32.mrf.mxu0
      %v340 = vadd.f32 0.0, %v339
      %v341 = vpop.f32.mrf.mxu0
      %v342 = vadd.f32 0.0, %v341
      %343 = vmatmul.bf16.gmra.mxu0 %v322
      %v344 = vpop.f32.mrf.mxu0
      %v345 = vadd.f32 0.0, %v344
      %v346 = vpop.f32.mrf.mxu0
      %v347 = vadd.f32 0.0, %v346
      %348 = vmatmul.bf16.gmra.mxu0 %v325
      %v349 = vpop.f32.mrf.mxu0
      %v350 = vadd.f32 0.0, %v349
      %v351 = vpop.f32.mrf.mxu0
      %v352 = vadd.f32 0.0, %v351
      %353 = vmatmul.bf16.gmra.mxu0 %v328
      %v354 = vpop.f32.mrf.mxu0
      %v355 = vadd.f32 0.0, %v354
      %v356 = vpop.f32.mrf.mxu0
      %v357 = vadd.f32 0.0, %v356
      %358 = vdwg.mxu0
      %v359 = vadd.f32 %v273, %v340
      %v360 = vadd.f32 %v274, %v342
      %v361 = vadd.f32 %v275, %v345
      %v362 = vadd.f32 %v276, %v347
      %v363 = vadd.f32 %v277, %v350
      %v364 = vadd.f32 %v278, %v352
      %v365 = vadd.f32 %v279, %v355
      %v366 = vadd.f32 %v280, %v357
      %vm367 = vcmask 261120
      %368 = vst.msk [vmem:[#allocation2] sm:$0xff] %vm367, %v359
      %369 = vst.msk [vmem:[#allocation2 + $0x8] sm:$0xff] %vm367, %v360
      %370 = vst.msk [vmem:[#allocation2 + $0x10] sm:$0xff] %vm367, %v361
      %371 = vst.msk [vmem:[#allocation2 + $0x18] sm:$0xff] %vm367, %v362
      %372 = vst.msk [vmem:[#allocation2 + $0x20] sm:$0xff] %vm367, %v363
      %373 = vst.msk [vmem:[#allocation2 + $0x28] sm:$0xff] %vm367, %v364
      %374 = vst.msk [vmem:[#allocation2 + $0x30] sm:$0xff] %vm367, %v365
      %375 = vst.msk [vmem:[#allocation2 + $0x38] sm:$0xff] %vm367, %v366
      // Predicated region
      $region37: #{_lambda_.10} parent=31 // pred_check
        %p376 = pneg %p260
      $region38: #{_lambda_.10} parent=31 // pred_check_branch
        %378 = sbr.rel (%p376) target = $region40
      $region39: #{_lambda_.10} parent=31 // pred_region
        %v379 = vld [vmem:[#allocation2] sm:$0xff]
        %v380 = vld [vmem:[#allocation2 + $0x8] sm:$0xff]
        %v381 = vld [vmem:[#allocation2 + $0x10] sm:$0xff]
        %v382 = vld [vmem:[#allocation2 + $0x18] sm:$0xff]
        %v383 = vld [vmem:[#allocation2 + $0x20] sm:$0xff]
        %v384 = vld [vmem:[#allocation2 + $0x28] sm:$0xff]
        %v385 = vld [vmem:[#allocation2 + $0x30] sm:$0xff]
        %v386 = vld [vmem:[#allocation2 + $0x38] sm:$0xff]
        %v387 = vld [vmem:[%s249] sm:$0x1]
        %v389 = vperm.slane %v387, 0
        %v391 = vadd.f32 %v379, %v389
        %v392 = vadd.f32 %v380, %v389
        %v393 = vadd.f32 %v381, %v389
        %v394 = vadd.f32 %v382, %v389
        %v395 = vadd.f32 %v383, %v389
        %v396 = vadd.f32 %v384, %v389
        %v397 = vadd.f32 %v385, %v389
        %v398 = vadd.f32 %v386, %v389
        %v399 = vpack.c.bf16 %v391, %v391
        %v400 = vpack.c.bf16 %v392, %v392
        %v401 = vpack.c.bf16 %v393, %v393
        %v402 = vpack.c.bf16 %v394, %v394
        %v403 = vpack.c.bf16 %v395, %v395
        %v404 = vpack.c.bf16 %v396, %v396
        %v405 = vpack.c.bf16 %v397, %v397
        %v406 = vpack.c.bf16 %v398, %v398
        %vm407 = vcmask 257024
        %408 = vst.msk [vmem:[%s257] sm:$0xf] %vm407, %v399
        %409 = vst.msk [vmem:[%s257 + $0x4] sm:$0xf] %vm407, %v400
        %410 = vst.msk [vmem:[%s257 + $0x8] sm:$0xf] %vm407, %v401
        %411 = vst.msk [vmem:[%s257 + $0xc] sm:$0xf] %vm407, %v402
        %412 = vst.msk [vmem:[%s257 + $0x10] sm:$0xf] %vm407, %v403
        %413 = vst.msk [vmem:[%s257 + $0x14] sm:$0xf] %vm407, %v404
        %414 = vst.msk [vmem:[%s257 + $0x18] sm:$0xf] %vm407, %v405
        %415 = vst.msk [vmem:[%s257 + $0x1c] sm:$0xf] %vm407, %v406
      $region40: #{_lambda_.10} parent=31 // pred_fallthru
        _
      %s416 = smul.u32 8, %s19
      %p417 = scmp.lt.s32.totalorder %s416, 15
      %s418 = scalar_select %p417, %s416, 15
      %p419 = scmp.lt.s32.totalorder %s20, 0
      %s420 = scalar_select %p419, %s20, 0
      %s421 = sadd.s32 %s420, %s418
      %s422 = smul.addr %s421, 4
      %s423 = scalar_lea.vmem %s3, %s422
      // Predicated region
      $region41: #{_lambda_.10} parent=31 // pred_check
        %p424 = pneg %p135
      $region42: #{_lambda_.10} parent=31 // pred_check_branch
        %426 = sbr.rel (%p424) target = $region44
      $region43: #{_lambda_.10} parent=31 // pred_region
        %s427 = smul.u32 8, %s19
      $region44: #{_lambda_.10} parent=31 // pred_fallthru
        _
    $region32: #{_lambda_.10} parent=5 // pred_fallthru
      _
    %p428 = scmp.le.s32.totalorder 2, %s9
    // Predicated region
    $region45: #{_lambda_.10} parent=5 // pred_check
      %p429 = pneg %p428
    $region46: #{_lambda_.10} parent=5 // pred_check_branch
      %431 = sbr.rel (%p429) target = $region48
    $region47: #{_lambda_.10} parent=5 // pred_region
      %s432 = ssub.s32 %s9, 2
      // Predicated region
      $region49: #{_lambda_.10} parent=47 // pred_check
        %p433 = pneg %p141
      $region50: #{_lambda_.10} parent=47 // pred_check_branch
        %435 = sbr.rel (%p433) target = $region52
      $region51: #{_lambda_.10} parent=47 // pred_region
        %s436 = smul.u32 8, %s22
        %p437 = scmp.lt.s32.totalorder %s436, 15
        %s438 = scalar_select %p437, %s436, 15
        %p439 = scmp.lt.s32.totalorder %s23, 0
        %s440 = scalar_select %p439, %s23, 0
        %s441 = sadd.s32 %s440, %s438
        %s442 = smul.addr %s441, 4
        %s443 = scalar_lea.vmem %s3, %s442
      $region52: #{_lambda_.10} parent=47 // pred_fallthru
        _
    $region48: #{_lambda_.10} parent=5 // pred_fallthru
      _
  $region6: #{_lambda_.10} parent=0 // loop_footer
    %s13 = sadd.s32 1, %s9
  $region7: #{_lambda_.10} parent=0 // loop_footer_branch
    %8 = sbr.rel target = $region3
  $region8: #{_lambda_.10} parent=0 // loop_exit
    _

// kernel: _lambda_.11
$region0: #{_lambda_.11}
  #allocation0 [shape = 'u32[]', space=smem, size = 0x4, offset = 0x4, fixed_abs, tag = 'smem constant byte address 0x4 - core index']
  #allocation1 [shape = 'u32[72,128]{1,0:T(1,128)}', space=vmem, size = 0x9000, scoped, tag = 'internal scratch']
  %s0 = inlined_call_operand.vmem [shape: f32[2], index: 0, kind: input, shape index: {}]
  %s1 = inlined_call_operand.vmem [shape: bf16[4,2,8,32], index: 1, kind: input, shape index: {}]
  %s2 = inlined_call_operand.vmem [shape: bf16[4,2,8,32], index: 2, kind: input, shape index: {}]
  %s3 = inlined_call_operand.vmem [shape: bf16[4,8,64], index: 3, kind: input, shape index: {}]
  %s4 = inlined_call_operand.vmem [shape: f32[2,8,8], index: 4, kind: input, shape index: {}]
  %s5 = inlined_call_operand.vmem [shape: f32[4,8,128], index: 5, kind: output, shape index: {}]
  %s6 = sld [smem:[#allocation0]]
  $region57: #{_lambda_.11} parent=0
    _
  %s8 = ssub.s32 1, %s6
  %s9 = scalar_select 0, %s8, %s6
  $region1: #{_lambda_.11} parent=0
    #allocation2 [shape = 'u8[512]{0}', space=smem, size = 0x200, scoped, tag = 'input window, operand 0, single buffered']
    #allocation3 [shape = 's32[2]{0}', space=sflag, size = 0x8, scoped, tag = 'scoped memory for _lambda_.11']
    %10 = vsyncpa [#allocation3], 0
    loop: start=0, step=1, limit=6
    $region2: #{_lambda_.11} parent=1 // loop_pre_header
      _
    $region3: #{_lambda_.11} parent=1 // loop_header
      %s12 = sphi 0, %s16
      %p13 = scmp.ge.s32.totalorder %s12, 6
      %s20 = sphi 0, %s20
      %s22 = sphi 0, %s20
      %s23 = sphi 0, %s22
      %s37 = sphi 0, %s23
      %s43 = sphi 0, %s45
      %s46 = sphi 0, %s43
      %s47 = sphi 0, %s46
      %s63 = sphi 0, %s47
      %s69 = sphi 0, %s71
      %s72 = sphi 0, %s69
      %s73 = sphi 0, %s72
      %s89 = sphi 0, %s73
      %s95 = sphi 0, %s97
      %s98 = sphi 0, %s95
      %s99 = sphi 0, %s98
      %s115 = sphi 0, %s99
      %s119 = sphi 0, %s119
      %s121 = sphi 0, %s119
      %s122 = sphi 0, %s121
      %s136 = sphi 0, %s122
      %s142 = sphi 0, %s144
      %s145 = sphi 0, %s142
      %s146 = sphi 0, %s145
      %s162 = sphi 0, %s146
    $region4: #{_lambda_.11} parent=1 // loop_header_branch
      %15 = sbr.rel (%p13) target = $region8
    $region5: #{_lambda_.11} parent=1 // loop_body
      %s17 = ssub.s32 %s12, 1
      %s18 = ssub.s32 %s12, 2
      %s19 = sadd.s32 %s12, 1
      %s21 = sadd.s32 %s20, 1
      %p24 = scmp.eq.s32.totalorder %s12, 3
      %p25 = scmp.ne.s32.totalorder %s20, %s22
      %p26 = scmp.eq.s32.totalorder %s12, 0
      %p27 = por %p25, %p26
      %p28 = scmp.ne.s32.totalorder %s20, %s22
      %p29 = scmp.eq.s32.totalorder %s17, 3
      %p30 = por %p28, %p29
      %p31 = scmp.ne.s32.totalorder %s22, %s23
      %p32 = scmp.eq.s32.totalorder %s17, 0
      %p33 = por %p31, %p32
      %p34 = scmp.ne.s32.totalorder %s22, %s23
      %p35 = scmp.eq.s32.totalorder %s18, 3
      %p36 = por %p34, %p35
      %p38 = scmp.ne.s32.totalorder %s23, %s37
      %p39 = scmp.eq.s32.totalorder %s18, 0
      %p40 = por %p38, %p39
      %s41 = ssub.s32 %s12, %s19
      %p42 = scmp.eq.s32.totalorder %s41, 0
      %s44 = sadd.s32 %s43, 1
      %s45 = scalar_select %p42, %s43, %s44
      %p48 = pneg %p42
      %p49 = scmp.eq.s32.totalorder %s12, 3
      %p50 = por %p48, %p49
      %p51 = scmp.ne.s32.totalorder %s43, %s46
      %p52 = scmp.eq.s32.totalorder %s12, 0
      %p53 = por %p51, %p52
      %p54 = scmp.ne.s32.totalorder %s43, %s46
      %p55 = scmp.eq.s32.totalorder %s17, 3
      %p56 = por %p54, %p55
      %p57 = scmp.ne.s32.totalorder %s46, %s47
      %p58 = scmp.eq.s32.totalorder %s17, 0
      %p59 = por %p57, %p58
      %p60 = scmp.ne.s32.totalorder %s46, %s47
      %p61 = scmp.eq.s32.totalorder %s18, 3
      %p62 = por %p60, %p61
      %p64 = scmp.ne.s32.totalorder %s47, %s63
      %p65 = scmp.eq.s32.totalorder %s18, 0
      %p66 = por %p64, %p65
      %s67 = ssub.s32 %s12, %s19
      %p68 = scmp.eq.s32.totalorder %s67, 0
      %s70 = sadd.s32 %s69, 1
      %s71 = scalar_select %p68, %s69, %s70
      %p74 = pneg %p68
      %p75 = scmp.eq.s32.totalorder %s12, 3
      %p76 = por %p74, %p75
      %p77 = scmp.ne.s32.totalorder %s69, %s72
      %p78 = scmp.eq.s32.totalorder %s12, 0
      %p79 = por %p77, %p78
      %p80 = scmp.ne.s32.totalorder %s69, %s72
      %p81 = scmp.eq.s32.totalorder %s17, 3
      %p82 = por %p80, %p81
      %p83 = scmp.ne.s32.totalorder %s72, %s73
      %p84 = scmp.eq.s32.totalorder %s17, 0
      %p85 = por %p83, %p84
      %p86 = scmp.ne.s32.totalorder %s72, %s73
      %p87 = scmp.eq.s32.totalorder %s18, 3
      %p88 = por %p86, %p87
      %p90 = scmp.ne.s32.totalorder %s73, %s89
      %p91 = scmp.eq.s32.totalorder %s18, 0
      %p92 = por %p90, %p91
      %s93 = ssub.s32 %s12, %s19
      %p94 = scmp.eq.s32.totalorder %s93, 0
      %s96 = sadd.s32 %s95, 1
      %s97 = scalar_select %p94, %s95, %s96
      %p100 = pneg %p94
      %p101 = scmp.eq.s32.totalorder %s12, 3
      %p102 = por %p100, %p101
      %p103 = scmp.ne.s32.totalorder %s95, %s98
      %p104 = scmp.eq.s32.totalorder %s12, 0
      %p105 = por %p103, %p104
      %p106 = scmp.ne.s32.totalorder %s95, %s98
      %p107 = scmp.eq.s32.totalorder %s17, 3
      %p108 = por %p106, %p107
      %p109 = scmp.ne.s32.totalorder %s98, %s99
      %p110 = scmp.eq.s32.totalorder %s17, 0
      %p111 = por %p109, %p110
      %p112 = scmp.ne.s32.totalorder %s98, %s99
      %p113 = scmp.eq.s32.totalorder %s18, 3
      %p114 = por %p112, %p113
      %p116 = scmp.ne.s32.totalorder %s99, %s115
      %p117 = scmp.eq.s32.totalorder %s18, 0
      %p118 = por %p116, %p117
      %s120 = sadd.s32 %s119, 1
      %p123 = scmp.eq.s32.totalorder %s12, 3
      %p124 = scmp.ne.s32.totalorder %s119, %s121
      %p125 = scmp.eq.s32.totalorder %s12, 0
      %p126 = por %p124, %p125
      %p127 = scmp.ne.s32.totalorder %s119, %s121
      %p128 = scmp.eq.s32.totalorder %s17, 3
      %p129 = por %p127, %p128
      %p130 = scmp.ne.s32.totalorder %s121, %s122
      %p131 = scmp.eq.s32.totalorder %s17, 0
      %p132 = por %p130, %p131
      %p133 = scmp.ne.s32.totalorder %s121, %s122
      %p134 = scmp.eq.s32.totalorder %s18, 3
      %p135 = por %p133, %p134
      %p137 = scmp.ne.s32.totalorder %s122, %s136
      %p138 = scmp.eq.s32.totalorder %s18, 0
      %p139 = por %p137, %p138
      %s140 = ssub.s32 %s12, %s19
      %p141 = scmp.eq.s32.totalorder %s140, 0
      %s143 = sadd.s32 %s142, 1
      %s144 = scalar_select %p141, %s142, %s143
      %p147 = pneg %p141
      %p148 = scmp.eq.s32.totalorder %s12, 3
      %p149 = por %p147, %p148
      %p150 = scmp.ne.s32.totalorder %s142, %s145
      %p151 = scmp.eq.s32.totalorder %s12, 0
      %p152 = por %p150, %p151
      %p153 = scmp.ne.s32.totalorder %s142, %s145
      %p154 = scmp.eq.s32.totalorder %s17, 3
      %p155 = por %p153, %p154
      %p156 = scmp.ne.s32.totalorder %s145, %s146
      %p157 = scmp.eq.s32.totalorder %s17, 0
      %p158 = por %p156, %p157
      %p159 = scmp.ne.s32.totalorder %s145, %s146
      %p160 = scmp.eq.s32.totalorder %s18, 3
      %p161 = por %p159, %p160
      %p163 = scmp.ne.s32.totalorder %s146, %s162
      %p164 = scmp.eq.s32.totalorder %s18, 0
      %p165 = por %p163, %p164
      %p166 = scmp.le.s32.totalorder 1, %s12
      %p167 = scmp.lt.s32.totalorder %s12, 5
      %p168 = pnand %p166, %p167
      %p169 = pneg %p168
      // Predicated region
      $region9: #{_lambda_.11} parent=5 // pred_check
        _
      $region10: #{_lambda_.11} parent=5 // pred_check_branch
        %171 = sbr.rel (%p168) target = $region12
      $region11: #{_lambda_.11} parent=5 // pred_region
        %s172 = ssub.s32 %s12, 1
        // Predicated region
        $region13: #{_lambda_.11} parent=11 // pred_check
          %p173 = pneg %p33
        $region14: #{_lambda_.11} parent=11 // pred_check_branch
          %175 = sbr.rel (%p173) target = $region16
        $region15: #{_lambda_.11} parent=11 // pred_region
          %177 = vsyncadd [#allocation3], 0
          %s179 = sshll.u32 %s0, 4
          %s180 = int_to_ptr.vmem [resolvable:$true] %s179
          %182 = dma.vmem_to_smem %s180, 16, [#allocation2], [#allocation3]
        $region16: #{_lambda_.11} parent=11 // pred_fallthru
          _
        // Predicated region
        $region17: #{_lambda_.11} parent=11 // pred_check
          %p183 = pneg %p132
        $region18: #{_lambda_.11} parent=11 // pred_check_branch
          %185 = sbr.rel (%p183) target = $region20
        $region19: #{_lambda_.11} parent=11 // pred_region
          _
        $region20: #{_lambda_.11} parent=11 // pred_fallthru
          _
      $region12: #{_lambda_.11} parent=5 // pred_fallthru
        _
      %p186 = scmp.lt.s32.totalorder %s12, 4
      // Predicated region
      $region21: #{_lambda_.11} parent=5 // pred_check
        %p187 = pneg %p186
      $region22: #{_lambda_.11} parent=5 // pred_check_branch
        %189 = sbr.rel (%p187) target = $region24
      $region23: #{_lambda_.11} parent=5 // pred_region
        // Predicated region
        $region25: #{_lambda_.11} parent=23 // pred_check
          %p190 = pneg %p53
        $region26: #{_lambda_.11} parent=23 // pred_check_branch
          %192 = sbr.rel (%p190) target = $region28
        $region27: #{_lambda_.11} parent=23 // pred_region
          %p193 = scmp.lt.s32.totalorder %s12, 3
          %s194 = scalar_select %p193, %s12, 3
          %s195 = smul.addr %s194, 2
          %s196 = smul.addr %s195, 4
          %s197 = scalar_lea.vmem %s1, %s196
        $region28: #{_lambda_.11} parent=23 // pred_fallthru
          _
        // Predicated region
        $region29: #{_lambda_.11} parent=23 // pred_check
          %p198 = pneg %p79
        $region30: #{_lambda_.11} parent=23 // pred_check_branch
          %200 = sbr.rel (%p198) target = $region32
        $region31: #{_lambda_.11} parent=23 // pred_region
          %p201 = scmp.lt.s32.totalorder %s12, 3
          %s202 = scalar_select %p201, %s12, 3
          %s203 = smul.addr %s202, 2
          %s204 = smul.addr %s203, 4
          %s205 = scalar_lea.vmem %s2, %s204
        $region32: #{_lambda_.11} parent=23 // pred_fallthru
          _
        // Predicated region
        $region33: #{_lambda_.11} parent=23 // pred_check
          %p206 = pneg %p105
        $region34: #{_lambda_.11} parent=23 // pred_check_branch
          %208 = sbr.rel (%p206) target = $region36
        $region35: #{_lambda_.11} parent=23 // pred_region
          %p209 = scmp.lt.s32.totalorder %s12, 3
          %s210 = scalar_select %p209, %s12, 3
          %s211 = smul.addr %s210, 4
          %s212 = scalar_lea.vmem %s3, %s211
        $region36: #{_lambda_.11} parent=23 // pred_fallthru
          _
      $region24: #{_lambda_.11} parent=5 // pred_fallthru
        _
      %p213 = scmp.le.s32.totalorder 1, %s12
      %p214 = scmp.lt.s32.totalorder %s12, 5
      %p215 = pnand %p213, %p214
      %p216 = pneg %p215
      // Predicated region
      $region37: #{_lambda_.11} parent=5 // pred_check
        _
      $region38: #{_lambda_.11} parent=5 // pred_check_branch
        %218 = sbr.rel (%p215) target = $region40
      $region39: #{_lambda_.11} parent=5 // pred_region
        %s219 = ssub.s32 %s12, 1
        // Predicated region
        $region41: #{_lambda_.11} parent=39 // pred_check
          %p220 = pneg %p33
        $region42: #{_lambda_.11} parent=39 // pred_check_branch
          %222 = sbr.rel (%p220) target = $region44
        $region43: #{_lambda_.11} parent=39 // pred_region
          %224 = dma.done [#allocation3], 16
        $region44: #{_lambda_.11} parent=39 // pred_fallthru
          _
        %225 = sfence
        %p226 = pneg %p33
        %p227 = pneg %p30
        %p228 = scmp.lt.s32.totalorder %s17, 3
        %s229 = scalar_select %p228, %s17, 3
        %s230 = smul.addr %s229, 2
        %s231 = smul.addr %s230, 4
        %s232 = scalar_lea.vmem %s1, %s231
        %p233 = pneg %p59
        %p234 = pneg %p56
        %p235 = scmp.lt.s32.totalorder %s17, 3
        %s236 = scalar_select %p235, %s17, 3
        %s237 = smul.addr %s236, 2
        %s238 = smul.addr %s237, 4
        %s239 = scalar_lea.vmem %s2, %s238
        %p240 = pneg %p85
        %p241 = pneg %p82
        %p242 = scmp.lt.s32.totalorder %s17, 3
        %s243 = scalar_select %p242, %s17, 3
        %s244 = smul.addr %s243, 4
        %s245 = scalar_lea.vmem %s3, %s244
        %p246 = pneg %p111
        %p247 = pneg %p108
        %p248 = pneg %p132
        %p249 = pneg %p129
        %p250 = pneg %p158
        %p251 = pneg %p155
        %p252 = scmp.lt.s32.totalorder %s17, 3
        %s253 = scalar_select %p252, %s17, 3
        %s254 = smul.addr %s253, 8
        %s255 = scalar_lea.vmem %s5, %s254
        %p256 = scmp.lt.s32.totalorder %s17, 3
        %s257 = scalar_select %p256, %s17, 3
        %s258 = smul.addr %s257, 2
        %s259 = smul.addr %s258, 4
        %s260 = scalar_lea.vmem %s1, %s259
        %p261 = scmp.lt.s32.totalorder %s17, 3
        %s262 = scalar_select %p261, %s17, 3
        %s263 = smul.addr %s262, 2
        %s264 = smul.addr %s263, 4
        %s265 = scalar_lea.vmem %s2, %s264
        %p266 = scmp.lt.s32.totalorder %s17, 3
        %s267 = scalar_select %p266, %s17, 3
        %s268 = smul.addr %s267, 4
        %s269 = scalar_lea.vmem %s3, %s268
        %p270 = scmp.lt.s32.totalorder %s17, 3
        %s271 = scalar_select %p270, %s17, 3
        %s272 = smul.addr %s271, 8
        %s273 = scalar_lea.vmem %s5, %s272
        %v275 = vld [vmem:[%s260] sm:$0xf]
        %v276 = vld [vmem:[%s265] sm:$0xf]
        %vm277 = vcmask 261120
        %v279 = vsel %vm277, %v275, 0
        %v282 = vsel %vm277, %v276, 0
        %284 = vmatpush.bf16.xpose.msra.mxu0 0
        %285 = vmatpush.bf16.xpose.msra.mxu0 0
        %286 = vmatpush.bf16.xpose.msra.mxu0 0
        %287 = vmatpush.bf16.xpose.msra.mxu0 0
        %288 = vmatpush.bf16.xpose.msra.mxu0 0
        %289 = vmatpush.bf16.xpose.msra.mxu0 0
        %290 = vmatpush.bf16.xpose.msra.mxu0 0
        %291 = vmatpush.bf16.xpose.msra.mxu0 %v282
        %292 = vmatmul.bf16.gmra.mxu0 %v279
        %v293 = vpop.f32.mrf.mxu0
        %v294 = vadd.f32 0.0, %v293
        %v295 = vpop.f32.mrf.mxu0
        %296 = vdwg.mxu0
        %v297 = vmul.f32 %v294, 0.03125
        %vm298 = vcmask 64512
        %v299 = vsel %vm298, %v297, -inf
        %300 = vmax.xlane.f32.xlu0 %v299
        %v301 = vpop.xlane.xlu0 %300
        %v302 = vsub.f32 %v297, %v301
        %v303 = vmul.f32 %v302, 1.442695
        %v304 = vpow.pop %v303
        %v305 = vsel %vm298, %v304, 0.0
        %306 = vadd.xlane.f32.xlu0 %v305
        %v307 = vpop.xlane.xlu0 %306
        %v308 = vrcp.pop %v307
        %v309 = vmul.f32 %v304, %v308
        %s310 = sld [smem:[#allocation2]]
        %v311 = vstv %s310
        %v312 = vmul.f32 %v309, %v311
        %v313 = vld [vmem:[%s4] sm:$0xff]
        %v314 = vadd.f32 %v312, %v313
        %v315 = vpack.c.bf16 %v314, %v314
        %v316 = vld [vmem:[%s269] sm:$0xf]
        %317 = vxpose.xlu0.c.b16.start [1/8] %v315, 128
        %318 = vxpose.xlu0.c.b16.cont [2/8] 0, 128
        %319 = vxpose.xlu0.c.b16.cont [3/8] 0, 128
        %320 = vxpose.xlu0.c.b16.cont [4/8] 0, 128
        %321 = vxpose.xlu0.c.b16.cont [5/8] 0, 128
        %322 = vxpose.xlu0.c.b16.cont [6/8] 0, 128
        %323 = vxpose.xlu0.c.b16.cont [7/8] 0, 128
        %324 = vxpose.xlu0.c.b16.end [8/8] 0, 128
        %v325 = vpop.trf.xlu0
        %v326 = vpop.trf.xlu0
        %v327 = vpop.trf.xlu0
        %v328 = vpop.trf.xlu0
        %v329 = vpop.trf.xlu0
        %v330 = vpop.trf.xlu0
        %v331 = vpop.trf.xlu0
        %v332 = vpop.trf.xlu0
        %v334 = vsel %vm298, %v325, 0
        %vm336 = vcmask 1043456
        %v338 = vsel %vm336, %v316, 0
        %340 = vmatpush.bf16.msra.mxu0 0
        %341 = vmatpush.bf16.msra.mxu0 0
        %342 = vmatpush.bf16.msra.mxu0 0
        %343 = vmatpush.bf16.msra.mxu0 0
        %344 = vmatpush.bf16.msra.mxu0 0
        %345 = vmatpush.bf16.msra.mxu0 0
        %346 = vmatpush.bf16.msra.mxu0 0
        %347 = vmatpush.bf16.msra.mxu0 %v338
        %348 = vmatmul.bf16.gmra.mxu0 %v334
        %v349 = vpop.f32.mrf.mxu0
        %v350 = vadd.f32 0.0, %v349
        %v351 = vpop.f32.mrf.mxu0
        %352 = vdwg.mxu0
        %s353 = scalar_lea.vmem %s260, 4
        %v354 = vld [vmem:[%s353] sm:$0xf]
        %s355 = scalar_lea.vmem %s265, 4
        %v356 = vld [vmem:[%s355] sm:$0xf]
        %v358 = vsel %vm277, %v354, 0
        %v361 = vsel %vm277, %v356, 0
        %363 = vmatpush.bf16.xpose.msra.mxu0 0
        %364 = vmatpush.bf16.xpose.msra.mxu0 0
        %365 = vmatpush.bf16.xpose.msra.mxu0 0
        %366 = vmatpush.bf16.xpose.msra.mxu0 0
        %367 = vmatpush.bf16.xpose.msra.mxu0 0
        %368 = vmatpush.bf16.xpose.msra.mxu0 0
        %369 = vmatpush.bf16.xpose.msra.mxu0 0
        %370 = vmatpush.bf16.xpose.msra.mxu0 %v361
        %371 = vmatmul.bf16.gmra.mxu0 %v358
        %v372 = vpop.f32.mrf.mxu0
        %v373 = vadd.f32 0.0, %v372
        %v374 = vpop.f32.mrf.mxu0
        %375 = vdwg.mxu0
        %v376 = vmul.f32 %v373, 0.03125
        %v377 = vsel %vm298, %v376, -inf
        %378 = vmax.xlane.f32.xlu0 %v377
        %v379 = vpop.xlane.xlu0 %378
        %v380 = vsub.f32 %v376, %v379
        %v381 = vmul.f32 %v380, 1.442695
        %v382 = vpow.pop %v381
        %v383 = vsel %vm298, %v382, 0.0
        %384 = vadd.xlane.f32.xlu0 %v383
        %v385 = vpop.xlane.xlu0 %384
        %v386 = vrcp.pop %v385
        %v387 = vmul.f32 %v382, %v386
        %s388 = sld [smem:[#allocation2 + $0x1]]
        %v389 = vstv %s388
        %v390 = vmul.f32 %v387, %v389
        %s391 = scalar_lea.vmem %s4, 8
        %v392 = vld [vmem:[%s391] sm:$0xff]
        %v393 = vadd.f32 %v390, %v392
        %v394 = vpack.c.bf16 %v393, %v393
        %395 = vxpose.xlu0.c.b16.start [1/8] %v394, 128
        %396 = vxpose.xlu0.c.b16.cont [2/8] 0, 128
        %397 = vxpose.xlu0.c.b16.cont [3/8] 0, 128
        %398 = vxpose.xlu0.c.b16.cont [4/8] 0, 128
        %399 = vxpose.xlu0.c.b16.cont [5/8] 0, 128
        %400 = vxpose.xlu0.c.b16.cont [6/8] 0, 128
        %401 = vxpose.xlu0.c.b16.cont [7/8] 0, 128
        %402 = vxpose.xlu0.c.b16.end [8/8] 0, 128
        %v403 = vpop.trf.xlu0
        %v404 = vpop.trf.xlu0
        %v405 = vpop.trf.xlu0
        %v406 = vpop.trf.xlu0
        %v407 = vpop.trf.xlu0
        %v408 = vpop.trf.xlu0
        %v409 = vpop.trf.xlu0
        %v410 = vpop.trf.xlu0
        %v412 = vsel %vm298, %v403, 0
        %414 = vmatpush.bf16.msra.mxu0 0
        %415 = vmatpush.bf16.msra.mxu0 0
        %416 = vmatpush.bf16.msra.mxu0 0
        %417 = vmatpush.bf16.msra.mxu0 0
        %418 = vmatpush.bf16.msra.mxu0 0
        %419 = vmatpush.bf16.msra.mxu0 0
        %420 = vmatpush.bf16.msra.mxu0 0
        %421 = vmatpush.bf16.msra.mxu0 %v338
        %422 = vmatmul.bf16.gmra.mxu0 %v412
        %v423 = vpop.f32.mrf.mxu0
        %v424 = vadd.f32 0.0, %v423
        %v425 = vpop.f32.mrf.mxu0
        %426 = vdwg.mxu0
        %428 = vrot.lane.b32.xlu0 %v424, 64
        %v429 = vpop.permute.xlu0 %428
        %vm431 = vcmask 523264
        %v432 = vsel %vm431, %v350, %v429
        %433 = vst [vmem:[%s273] sm:$0xff] %v432
        %p434 = scmp.lt.s32.totalorder %s17, 3
        %s435 = scalar_select %p434, %s17, 3
        %s436 = smul.addr %s435, 8
        %s437 = scalar_lea.vmem %s5, %s436
        // Predicated region
        $region45: #{_lambda_.11} parent=39 // pred_check
          %p438 = pneg %p155
        $region46: #{_lambda_.11} parent=39 // pred_check_branch
          %440 = sbr.rel (%p438) target = $region48
        $region47: #{_lambda_.11} parent=39 // pred_region
          _
        $region48: #{_lambda_.11} parent=39 // pred_fallthru
          _
      $region40: #{_lambda_.11} parent=5 // pred_fallthru
        _
      %p441 = scmp.le.s32.totalorder 2, %s12
      // Predicated region
      $region49: #{_lambda_.11} parent=5 // pred_check
        %p442 = pneg %p441
      $region50: #{_lambda_.11} parent=5 // pred_check_branch
        %444 = sbr.rel (%p442) target = $region52
      $region51: #{_lambda_.11} parent=5 // pred_region
        %s445 = ssub.s32 %s12, 2
        // Predicated region
        $region53: #{_lambda_.11} parent=51 // pred_check
          %p446 = pneg %p161
        $region54: #{_lambda_.11} parent=51 // pred_check_branch
          %448 = sbr.rel (%p446) target = $region56
        $region55: #{_lambda_.11} parent=51 // pred_region
          %p449 = scmp.lt.s32.totalorder %s18, 3
          %s450 = scalar_select %p449, %s18, 3
          %s451 = smul.addr %s450, 8
          %s452 = scalar_lea.vmem %s5, %s451
        $region56: #{_lambda_.11} parent=51 // pred_fallthru
          _
      $region52: #{_lambda_.11} parent=5 // pred_fallthru
        _
    $region6: #{_lambda_.11} parent=1 // loop_footer
      %s16 = sadd.s32 1, %s12
    $region7: #{_lambda_.11} parent=1 // loop_footer_branch
      %11 = sbr.rel target = $region3
    $region8: #{_lambda_.11} parent=1 // loop_exit
      _
    %453 = vsyncpa [#allocation3], 1
    %s454 = scalar_lea.sflag [#allocation3], 1
    %455 = vsyncpa %s454, 1

// kernel: _lambda_.12
$region0: #{_lambda_.12}
  #allocation0 [shape = 'u32[]', space=smem, size = 0x4, offset = 0x4, fixed_abs, tag = 'smem constant byte address 0x4 - core index']
  #allocation1 [shape = 'u32[72,128]{1,0:T(1,128)}', space=vmem, size = 0x9000, scoped, tag = 'internal scratch']
  #allocation2 [shape = 'f32[64,16]{1,0:T(8,128)}', space=vmem, size = 0x8000, scoped, tag = 'scratch operand']
  %s0 = inlined_call_operand.vmem [shape: bf16[128,96], index: 0, kind: input, shape index: {}]
  %s1 = inlined_call_operand.vmem [shape: bf16[96,16], index: 1, kind: input, shape index: {}]
  %s2 = inlined_call_operand.vmem [shape: f32[1,16], index: 2, kind: input, shape index: {}]
  %s3 = inlined_call_operand.vmem [shape: f32[128,16], index: 3, kind: input, shape index: {}]
  %s4 = inlined_call_operand.vmem [shape: f32[128,16], index: 4, kind: output, shape index: {}]
  %s5 = sld [smem:[#allocation0]]
  $region57: #{_lambda_.12} parent=0
    _
  %s7 = ssub.s32 1, %s5
  %s8 = scalar_select 0, %s7, %s5
  loop: start=0, step=1, limit=4
  $region2: #{_lambda_.12} parent=0 // loop_pre_header
    _
  $region3: #{_lambda_.12} parent=0 // loop_header
    %s10 = sphi 0, %s14
    %p11 = scmp.ge.s32.totalorder %s10, 4
    %s17 = sphi 0, %s36
    %s18 = sphi 0, %s32
    %s19 = sphi 0, %s28
    %s20 = sphi 0, %s17
    %s21 = sphi 0, %s18
    %s22 = sphi 0, %s19
    %s23 = sphi 0, %s20
    %s24 = sphi 0, %s21
    %s25 = sphi 0, %s22
    %s41 = sphi 0, %s43
    %s44 = sphi 0, %s41
    %s45 = sphi 0, %s44
    %s61 = sphi 0, %s45
    %s69 = sphi 0, %s71
    %s72 = sphi 0, %s69
    %s73 = sphi 0, %s72
    %s89 = sphi 0, %s73
    %s95 = sphi 0, %s97
    %s98 = sphi 0, %s95
    %s99 = sphi 0, %s98
    %s115 = sphi 0, %s99
    %s123 = sphi 0, %s125
    %s126 = sphi 0, %s123
    %s127 = sphi 0, %s126
    %s143 = sphi 0, %s127
    %s151 = sphi 0, %s153
    %s154 = sphi 0, %s151
    %s155 = sphi 0, %s154
    %s171 = sphi 0, %s155
  $region4: #{_lambda_.12} parent=0 // loop_header_branch
    %13 = sbr.rel (%p11) target = $region8
  $region5: #{_lambda_.12} parent=0 // loop_body
    %s15 = ssub.s32 %s10, 1
    %s16 = ssub.s32 %s10, 2
    %s26 = sadd.s32 1, %s19
    %p27 = scmp.ge.s32.totalorder %s26, 1
    %s28 = scalar_select %p27, 0, %s26
    %s29 = sadd.s32 1, %s18
    %s30 = scalar_select %p27, %s29, %s18
    %p31 = scmp.ge.s32.totalorder %s30, 1
    %s32 = scalar_select %p31, 0, %s30
    %s33 = sadd.s32 1, %s17
    %s34 = scalar_select %p31, %s33, %s17
    %p35 = scmp.ge.s32.totalorder %s34, 2
    %s36 = scalar_select %p35, 0, %s34
    %s37 = ssub.s32 %s17, %s36
    %s38 = ssub.s32 %s19, %s28
    %s39 = sor.u32 %s37, %s38
    %p40 = scmp.eq.s32.totalorder %s39, 0
    %s42 = sadd.s32 %s41, 1
    %s43 = scalar_select %p40, %s41, %s42
    %p46 = pneg %p40
    %p47 = scmp.eq.s32.totalorder %s10, 1
    %p48 = por %p46, %p47
    %p49 = scmp.ne.s32.totalorder %s41, %s44
    %p50 = scmp.eq.s32.totalorder %s10, 0
    %p51 = por %p49, %p50
    %p52 = scmp.ne.s32.totalorder %s41, %s44
    %p53 = scmp.eq.s32.totalorder %s15, 1
    %p54 = por %p52, %p53
    %p55 = scmp.ne.s32.totalorder %s44, %s45
    %p56 = scmp.eq.s32.totalorder %s15, 0
    %p57 = por %p55, %p56
    %p58 = scmp.ne.s32.totalorder %s44, %s45
    %p59 = scmp.eq.s32.totalorder %s16, 1
    %p60 = por %p58, %p59
    %p62 = scmp.ne.s32.totalorder %s45, %s61
    %p63 = scmp.eq.s32.totalorder %s16, 0
    %p64 = por %p62, %p63
    %s65 = ssub.s32 %s19, %s28
    %s66 = ssub.s32 %s18, %s32
    %s67 = sor.u32 %s65, %s66
    %p68 = scmp.eq.s32.totalorder %s67, 0
    %s70 = sadd.s32 %s69, 1
    %s71 = scalar_select %p68, %s69, %s70
    %p74 = pneg %p68
    %p75 = scmp.eq.s32.totalorder %s10, 1
    %p76 = por %p74, %p75
    %p77 = scmp.ne.s32.totalorder %s69, %s72
    %p78 = scmp.eq.s32.totalorder %s10, 0
    %p79 = por %p77, %p78
    %p80 = scmp.ne.s32.totalorder %s69, %s72
    %p81 = scmp.eq.s32.totalorder %s15, 1
    %p82 = por %p80, %p81
    %p83 = scmp.ne.s32.totalorder %s72, %s73
    %p84 = scmp.eq.s32.totalorder %s15, 0
    %p85 = por %p83, %p84
    %p86 = scmp.ne.s32.totalorder %s72, %s73
    %p87 = scmp.eq.s32.totalorder %s16, 1
    %p88 = por %p86, %p87
    %p90 = scmp.ne.s32.totalorder %s73, %s89
    %p91 = scmp.eq.s32.totalorder %s16, 0
    %p92 = por %p90, %p91
    %s93 = ssub.s32 %s18, %s32
    %p94 = scmp.eq.s32.totalorder %s93, 0
    %s96 = sadd.s32 %s95, 1
    %s97 = scalar_select %p94, %s95, %s96
    %p100 = pneg %p94
    %p101 = scmp.eq.s32.totalorder %s10, 1
    %p102 = por %p100, %p101
    %p103 = scmp.ne.s32.totalorder %s95, %s98
    %p104 = scmp.eq.s32.totalorder %s10, 0
    %p105 = por %p103, %p104
    %p106 = scmp.ne.s32.totalorder %s95, %s98
    %p107 = scmp.eq.s32.totalorder %s15, 1
    %p108 = por %p106, %p107
    %p109 = scmp.ne.s32.totalorder %s98, %s99
    %p110 = scmp.eq.s32.totalorder %s15, 0
    %p111 = por %p109, %p110
    %p112 = scmp.ne.s32.totalorder %s98, %s99
    %p113 = scmp.eq.s32.totalorder %s16, 1
    %p114 = por %p112, %p113
    %p116 = scmp.ne.s32.totalorder %s99, %s115
    %p117 = scmp.eq.s32.totalorder %s16, 0
    %p118 = por %p116, %p117
    %s119 = ssub.s32 %s17, %s36
    %s120 = ssub.s32 %s18, %s32
    %s121 = sor.u32 %s119, %s120
    %p122 = scmp.eq.s32.totalorder %s121, 0
    %s124 = sadd.s32 %s123, 1
    %s125 = scalar_select %p122, %s123, %s124
    %p128 = pneg %p122
    %p129 = scmp.eq.s32.totalorder %s10, 1
    %p130 = por %p128, %p129
    %p131 = scmp.ne.s32.totalorder %s123, %s126
    %p132 = scmp.eq.s32.totalorder %s10, 0
    %p133 = por %p131, %p132
    %p134 = scmp.ne.s32.totalorder %s123, %s126
    %p135 = scmp.eq.s32.totalorder %s15, 1
    %p136 = por %p134, %p135
    %p137 = scmp.ne.s32.totalorder %s126, %s127
    %p138 = scmp.eq.s32.totalorder %s15, 0
    %p139 = por %p137, %p138
    %p140 = scmp.ne.s32.totalorder %s126, %s127
    %p141 = scmp.eq.s32.totalorder %s16, 1
    %p142 = por %p140, %p141
    %p144 = scmp.ne.s32.totalorder %s127, %s143
    %p145 = scmp.eq.s32.totalorder %s16, 0
    %p146 = por %p144, %p145
    %s147 = ssub.s32 %s17, %s36
    %s148 = ssub.s32 %s18, %s32
    %s149 = sor.u32 %s147, %s148
    %p150 = scmp.eq.s32.totalorder %s149, 0
    %s152 = sadd.s32 %s151, 1
    %s153 = scalar_select %p150, %s151, %s152
    %p156 = pneg %p150
    %p157 = scmp.eq.s32.totalorder %s10, 1
    %p158 = por %p156, %p157
    %p159 = scmp.ne.s32.totalorder %s151, %s154
    %p160 = scmp.eq.s32.totalorder %s10, 0
    %p161 = por %p159, %p160
    %p162 = scmp.ne.s32.totalorder %s151, %s154
    %p163 = scmp.eq.s32.totalorder %s15, 1
    %p164 = por %p162, %p163
    %p165 = scmp.ne.s32.totalorder %s154, %s155
    %p166 = scmp.eq.s32.totalorder %s15, 0
    %p167 = por %p165, %p166
    %p168 = scmp.ne.s32.totalorder %s154, %s155
    %p169 = scmp.eq.s32.totalorder %s16, 1
    %p170 = por %p168, %p169
    %p172 = scmp.ne.s32.totalorder %s155, %s171
    %p173 = scmp.eq.s32.totalorder %s16, 0
    %p174 = por %p172, %p173
    %p175 = scmp.le.s32.totalorder 1, %s10
    %p176 = scmp.lt.s32.totalorder %s10, 3
    %p177 = pnand %p175, %p176
    %p178 = pneg %p177
    // Predicated region
    $region9: #{_lambda_.12} parent=5 // pred_check
      _
    $region10: #{_lambda_.12} parent=5 // pred_check_branch
      %180 = sbr.rel (%p177) target = $region12
    $region11: #{_lambda_.12} parent=5 // pred_region
      %s181 = ssub.s32 %s10, 1
      // Predicated region
      $region13: #{_lambda_.12} parent=11 // pred_check
        %p182 = pneg %p85
      $region14: #{_lambda_.12} parent=11 // pred_check_branch
        %184 = sbr.rel (%p182) target = $region16
      $region15: #{_lambda_.12} parent=11 // pred_region
        %s185 = smul.u32 12, %s22
        %p186 = scmp.lt.s32.totalorder %s185, 11
        %s187 = scalar_select %p186, %s185, 11
        %p188 = scmp.lt.s32.totalorder %s21, 0
        %s189 = scalar_select %p188, %s21, 0
        %s190 = sadd.s32 %s189, %s187
        %s191 = smul.addr %s190, 4
        %s192 = scalar_lea.vmem %s1, %s191
        %s193 = smul.u32 12, %s22
      $region16: #{_lambda_.12} parent=11 // pred_fallthru
        _
      // Predicated region
      $region17: #{_lambda_.12} parent=11 // pred_check
        %p194 = pneg %p111
      $region18: #{_lambda_.12} parent=11 // pred_check_branch
        %196 = sbr.rel (%p194) target = $region20
      $region19: #{_lambda_.12} parent=11 // pred_region
        %p197 = scmp.lt.s32.totalorder %s21, 0
        %s198 = scalar_select %p197, %s21, 0
        %s199 = scalar_lea.vmem %s2, %s198
      $region20: #{_lambda_.12} parent=11 // pred_fallthru
        _
    $region12: #{_lambda_.12} parent=5 // pred_fallthru
      _
    %p200 = scmp.lt.s32.totalorder %s10, 2
    // Predicated region
    $region21: #{_lambda_.12} parent=5 // pred_check
      %p201 = pneg %p200
    $region22: #{_lambda_.12} parent=5 // pred_check_branch
      %203 = sbr.rel (%p201) target = $region24
    $region23: #{_lambda_.12} parent=5 // pred_region
      // Predicated region
      $region25: #{_lambda_.12} parent=23 // pred_check
        %p204 = pneg %p51
      $region26: #{_lambda_.12} parent=23 // pred_check_branch
        %206 = sbr.rel (%p204) target = $region28
      $region27: #{_lambda_.12} parent=23 // pred_region
        %s207 = smul.u32 8, %s17
        %p208 = scmp.lt.s32.totalorder %s207, 15
        %s209 = scalar_select %p208, %s207, 15
        %p210 = scmp.lt.s32.totalorder %s19, 0
        %s211 = scalar_select %p210, %s19, 0
        %s212 = sadd.s32 %s211, %s209
        %s213 = smul.addr %s212, 4
        %s214 = scalar_lea.vmem %s0, %s213
        %s215 = smul.u32 8, %s17
      $region28: #{_lambda_.12} parent=23 // pred_fallthru
        _
      // Predicated region
      $region29: #{_lambda_.12} parent=23 // pred_check
        %p216 = pneg %p133
      $region30: #{_lambda_.12} parent=23 // pred_check_branch
        %218 = sbr.rel (%p216) target = $region32
      $region31: #{_lambda_.12} parent=23 // pred_region
        %s219 = smul.u32 8, %s17
        %p220 = scmp.lt.s32.totalorder %s219, 15
        %s221 = scalar_select %p220, %s219, 15
        %p222 = scmp.lt.s32.totalorder %s18, 0
        %s223 = scalar_select %p222, %s18, 0
        %s224 = sadd.s32 %s223, %s221
        %s225 = smul.addr %s224, 8
        %s226 = scalar_lea.vmem %s3, %s225
        %s227 = smul.u32 8, %s17
      $region32: #{_lambda_.12} parent=23 // pred_fallthru
        _
    $region24: #{_lambda_.12} parent=5 // pred_fallthru
      _
    %p228 = scmp.le.s32.totalorder 1, %s10
    %p229 = scmp.lt.s32.totalorder %s10, 3
    %p230 = pnand %p228, %p229
    %p231 = pneg %p230
    // Predicated region
    $region33: #{_lambda_.12} parent=5 // pred_check
      _
    $region34: #{_lambda_.12} parent=5 // pred_check_branch
      %233 = sbr.rel (%p230) target = $region36
    $region35: #{_lambda_.12} parent=5 // pred_region
      %s234 = ssub.s32 %s10, 1
      %s235 = smul.u32 8, %s20
      %p236 = scmp.lt.s32.totalorder %s235, 15
      %s237 = scalar_select %p236, %s235, 15
      %p238 = scmp.lt.s32.totalorder %s22, 0
      %s239 = scalar_select %p238, %s22, 0
      %s240 = sadd.s32 %s239, %s237
      %s241 = smul.addr %s240, 4
      %s242 = scalar_lea.vmem %s0, %s241
      %p243 = pneg %p57
      %p244 = pneg %p54
      %s245 = smul.u32 12, %s22
      %p246 = scmp.lt.s32.totalorder %s245, 11
      %s247 = scalar_select %p246, %s245, 11
      %p248 = scmp.lt.s32.totalorder %s21, 0
      %s249 = scalar_select %p248, %s21, 0
      %s250 = sadd.s32 %s249, %s247
      %s251 = smul.addr %s250, 4
      %s252 = scalar_lea.vmem %s1, %s251
      %p253 = pneg %p85
      %p254 = pneg %p82
      %p255 = scmp.lt.s32.totalorder %s21, 0
      %s256 = scalar_select %p255, %s21, 0
      %s257 = scalar_lea.vmem %s2, %s256
      %p258 = pneg %p111
      %p259 = pneg %p108
      %s260 = smul.u32 8, %s20
      %p261 = scmp.lt.s32.totalorder %s260, 15
      %s262 = scalar_select %p261, %s260, 15
      %p263 = scmp.lt.s32.totalorder %s21, 0
      %s264 = scalar_select %p263, %s21, 0
      %s265 = sadd.s32 %s264, %s262
      %s266 = smul.addr %s265, 8
      %s267 = scalar_lea.vmem %s3, %s266
      %p268 = pneg %p139
      %p269 = pneg %p136
      %p270 = pneg %p167
      %p271 = pneg %p164
      %s272 = smul.u32 8, %s20
      %p273 = scmp.lt.s32.totalorder %s272, 15
      %s274 = scalar_select %p273, %s272, 15
      %p275 = scmp.lt.s32.totalorder %s21, 0
      %s276 = scalar_select %p275, %s21, 0
      %s277 = sadd.s32 %s276, %s274
      %s278 = smul.addr %s277, 8
      %s279 = scalar_lea.vmem %s4, %s278
      %s280 = smul.u32 8, %s20
      %p281 = scmp.lt.s32.totalorder %s280, 15
      %s282 = scalar_select %p281, %s280, 15
      %p283 = scmp.lt.s32.totalorder %s22, 0
      %s284 = scalar_select %p283, %s22, 0
      %s285 = sadd.s32 %s284, %s282
      %s286 = smul.addr %s285, 4
      %s287 = scalar_lea.vmem %s0, %s286
      %s288 = smul.u32 8, %s20
      %s289 = smul.u32 12, %s22
      %p290 = scmp.lt.s32.totalorder %s289, 11
      %s291 = scalar_select %p290, %s289, 11
      %p292 = scmp.lt.s32.totalorder %s21, 0
      %s293 = scalar_select %p292, %s21, 0
      %s294 = sadd.s32 %s293, %s291
      %s295 = smul.addr %s294, 4
      %s296 = scalar_lea.vmem %s1, %s295
      %s297 = smul.u32 12, %s22
      %p298 = scmp.lt.s32.totalorder %s21, 0
      %s299 = scalar_select %p298, %s21, 0
      %s300 = scalar_lea.vmem %s2, %s299
      %s301 = smul.u32 8, %s20
      %p302 = scmp.lt.s32.totalorder %s301, 15
      %s303 = scalar_select %p302, %s301, 15
      %p304 = scmp.lt.s32.totalorder %s21, 0
      %s305 = scalar_select %p304, %s21, 0
      %s306 = sadd.s32 %s305, %s303
      %s307 = smul.addr %s306, 8
      %s308 = scalar_lea.vmem %s3, %s307
      %s309 = smul.u32 8, %s20
      %s310 = smul.u32 8, %s20
      %p311 = scmp.lt.s32.totalorder %s310, 15
      %s312 = scalar_select %p311, %s310, 15
      %p313 = scmp.lt.s32.totalorder %s21, 0
      %s314 = scalar_select %p313, %s21, 0
      %s315 = sadd.s32 %s314, %s312
      %s316 = smul.addr %s315, 8
      %s317 = scalar_lea.vmem %s4, %s316
      %s318 = smul.u32 8, %s20
      %p320 = scmp.eq.s32.totalorder %s22, 0
      // Predicated region
      $region37: #{_lambda_.12} parent=35 // pred_check
        %p321 = pneg %p320
      $region38: #{_lambda_.12} parent=35 // pred_check_branch
        %323 = sbr.rel (%p321) target = $region40
      $region39: #{_lambda_.12} parent=35 // pred_region
        %vm324 = vcmask 130048
        %325 = vst.msk [vmem:[#allocation2] sm:$0xff] %vm324, 0.0
        %326 = vst.msk [vmem:[#allocation2 + $0x8] sm:$0xff] %vm324, 0.0
        %327 = vst.msk [vmem:[#allocation2 + $0x10] sm:$0xff] %vm324, 0.0
        %328 = vst.msk [vmem:[#allocation2 + $0x18] sm:$0xff] %vm324, 0.0
        %329 = vst.msk [vmem:[#allocation2 + $0x20] sm:$0xff] %vm324, 0.0
        %330 = vst.msk [vmem:[#allocation2 + $0x28] sm:$0xff] %vm324, 0.0
        %331 = vst.msk [vmem:[#allocation2 + $0x30] sm:$0xff] %vm324, 0.0
        %332 = vst.msk [vmem:[#allocation2 + $0x38] sm:$0xff] %vm324, 0.0
      $region40: #{_lambda_.12} parent=35 // pred_fallthru
        _
      %v333 = vld [vmem:[#allocation2] sm:$0xff]
      %v334 = vld [vmem:[#allocation2 + $0x8] sm:$0xff]
      %v335 = vld [vmem:[#allocation2 + $0x10] sm:$0xff]
      %v336 = vld [vmem:[#allocation2 + $0x18] sm:$0xff]
      %v337 = vld [vmem:[#allocation2 + $0x20] sm:$0xff]
      %v338 = vld [vmem:[#allocation2 + $0x28] sm:$0xff]
      %v339 = vld [vmem:[#allocation2 + $0x30] sm:$0xff]
      %v340 = vld [vmem:[#allocation2 + $0x38] sm:$0xff]
      %v341 = vld [vmem:[%s287] sm:$0xf]
      %v342 = vld [vmem:[%s287 + $0x4] sm:$0xf]
      %v343 = vld [vmem:[%s287 + $0x8] sm:$0xf]
      %v344 = vld [vmem:[%s287 + $0xc] sm:$0xf]
      %v345 = vld [vmem:[%s287 + $0x10] sm:$0xf]
      %v346 = vld [vmem:[%s287 + $0x14] sm:$0xf]
      %v347 = vld [vmem:[%s287 + $0x18] sm:$0xf]
      %v348 = vld [vmem:[%s287 + $0x1c] sm:$0xf]
      %v349 = vld [vmem:[%s296] sm:$0xf]
      %v350 = vld [vmem:[%s296 + $0x4] sm:$0xf]
      %v351 = vld [vmem:[%s296 + $0x8] sm:$0xf]
      %v352 = vld [vmem:[%s296 + $0xc] sm:$0xf]
      %v353 = vld [vmem:[%s296 + $0x10] sm:$0xf]
      %v354 = vld [vmem:[%s296 + $0x14] sm:$0xf]
      %v355 = vld [vmem:[%s296 + $0x18] sm:$0xf]
      %v356 = vld [vmem:[%s296 + $0x1c] sm:$0xf]
      %v357 = vld [vmem:[%s296 + $0x20] sm:$0xf]
      %v358 = vld [vmem:[%s296 + $0x24] sm:$0xf]
      %v359 = vld [vmem:[%s296 + $0x28] sm:$0xf]
      %v360 = vld [vmem:[%s296 + $0x2c] sm:$0xf]
      %v369 = vunpack.c.l.b16 %v341
      %v370 = vunpack.c.l.b16 %v342
      %v371 = vunpack.c.l.b16 %v343
      %v372 = vunpack.c.l.b16 %v344
      %v373 = vunpack.c.l.b16 %v345
      %v374 = vunpack.c.l.b16 %v346
      %v375 = vunpack.c.l.b16 %v347
      %v376 = vunpack.c.l.b16 %v348
      %v377 = vpack.c.b16 %v370, %v369
      %v378 = vpack.c.b16 %v372, %v371
      %v379 = vpack.c.b16 %v374, %v373
      %v380 = vpack.c.b16 %v376, %v375
      %v393 = vunpack.c.l.b16 %v349
      %v394 = vunpack.c.l.b16 %v350
      %v395 = vunpack.c.l.b16 %v351
      %v396 = vunpack.c.l.b16 %v352
      %v397 = vunpack.c.l.b16 %v353
      %v398 = vunpack.c.l.b16 %v354
      %v399 = vunpack.c.l.b16 %v355
      %v400 = vunpack.c.l.b16 %v356
      %v401 = vunpack.c.l.b16 %v357
      %v402 = vunpack.c.l.b16 %v358
      %v403 = vunpack.c.l.b16 %v359
      %v404 = vunpack.c.l.b16 %v360
      %v405 = vpack.c.b16 %v394, %v393
      %v406 = vpack.c.b16 %v396, %v395
      %v407 = vpack.c.b16 %v398, %v397
      %v408 = vpack.c.b16 %v400, %v399
      %v409 = vpack.c.b16 %v402, %v401
      %v410 = vpack.c.b16 %v404, %v403
      %vm417 = vcmask 785408
      %v419 = vsel %vm417, %v377, 0
      %v422 = vsel %vm417, %v378, 0
      %v425 = vsel %vm417, %v379, 0
      %v428 = vsel %vm417, %v380, 0
      %430 = vmatpush.bf16.msra.mxu0 0
      %431 = vmatpush.bf16.msra.mxu0 0
      %432 = vmatpush.bf16.msra.mxu0 %v410
      %433 = vmatpush.bf16.msra.mxu0 %v409
      %434 = vmatpush.bf16.msra.mxu0 %v408
      %435 = vmatpush.bf16.msra.mxu0 %v407
      %436 = vmatpush.bf16.msra.mxu0 %v406
      %437 = vmatpush.bf16.msra.mxu0 %v405
      %438 = vmatmul.bf16.gmra.mxu0 %v419
      %v439 = vpop.f32.mrf.mxu0
      %v440 = vadd.f32 0.0, %v439
      %v441 = vpop.f32.mrf.mxu0
      %v442 = vadd.f32 0.0, %v441
      %443 = vmatmul.bf16.gmra.mxu0 %v422
      %v444 = vpop.f32.mrf.mxu0
      %v445 = vadd.f32 0.0, %v444
      %v446 = vpop.f32.mrf.mxu0
      %v447 = vadd.f32 0.0, %v446
      %448 = vmatmul.bf16.gmra.mxu0 %v425
      %v449 = vpop.f32.mrf.mxu0
      %v450 = vadd.f32 0.0, %v449
      %v451 = vpop.f32.mrf.mxu0
      %v452 = vadd.f32 0.0, %v451
      %453 = vmatmul.bf16.gmra.mxu0 %v428
      %v454 = vpop.f32.mrf.mxu0
      %v455 = vadd.f32 0.0, %v454
      %v456 = vpop.f32.mrf.mxu0
      %v457 = vadd.f32 0.0, %v456
      %458 = vdwg.mxu0
      %v459 = vadd.f32 %v333, %v440
      %v460 = vadd.f32 %v334, %v442
      %v461 = vadd.f32 %v335, %v445
      %v462 = vadd.f32 %v336, %v447
      %v463 = vadd.f32 %v337, %v450
      %v464 = vadd.f32 %v338, %v452
      %v465 = vadd.f32 %v339, %v455
      %v466 = vadd.f32 %v340, %v457
      %vm467 = vcmask 130048
      %468 = vst.msk [vmem:[#allocation2] sm:$0xff] %vm467, %v459
      %469 = vst.msk [vmem:[#allocation2 + $0x8] sm:$0xff] %vm467, %v460
      %470 = vst.msk [vmem:[#allocation2 + $0x10] sm:$0xff] %vm467, %v461
      %471 = vst.msk [vmem:[#allocation2 + $0x18] sm:$0xff] %vm467, %v462
      %472 = vst.msk [vmem:[#allocation2 + $0x20] sm:$0xff] %vm467, %v463
      %473 = vst.msk [vmem:[#allocation2 + $0x28] sm:$0xff] %vm467, %v464
      %474 = vst.msk [vmem:[#allocation2 + $0x30] sm:$0xff] %vm467, %v465
      %475 = vst.msk [vmem:[#allocation2 + $0x38] sm:$0xff] %vm467, %v466
      // Predicated region
      $region41: #{_lambda_.12} parent=35 // pred_check
        %p476 = pneg %p320
      $region42: #{_lambda_.12} parent=35 // pred_check_branch
        %478 = sbr.rel (%p476) target = $region44
      $region43: #{_lambda_.12} parent=35 // pred_region
        %v479 = vld [vmem:[#allocation2] sm:$0xff]
        %v480 = vld [vmem:[#allocation2 + $0x8] sm:$0xff]
        %v481 = vld [vmem:[#allocation2 + $0x10] sm:$0xff]
        %v482 = vld [vmem:[#allocation2 + $0x18] sm:$0xff]
        %v483 = vld [vmem:[#allocation2 + $0x20] sm:$0xff]
        %v484 = vld [vmem:[#allocation2 + $0x28] sm:$0xff]
        %v485 = vld [vmem:[#allocation2 + $0x30] sm:$0xff]
        %v486 = vld [vmem:[#allocation2 + $0x38] sm:$0xff]
        %v487 = vld [vmem:[%s300] sm:$0x1]
        %v489 = vperm.slane %v487, 0
        %v491 = vadd.f32 %v479, %v489
        %v492 = vadd.f32 %v480, %v489
        %v493 = vadd.f32 %v481, %v489
        %v494 = vadd.f32 %v482, %v489
        %v495 = vadd.f32 %v483, %v489
        %v496 = vadd.f32 %v484, %v489
        %v497 = vadd.f32 %v485, %v489
        %v498 = vadd.f32 %v486, %v489
        %v499 = vld [vmem:[%s308] sm:$0xff]
        %v500 = vld [vmem:[%s308 + $0x8] sm:$0xff]
        %v501 = vld [vmem:[%s308 + $0x10] sm:$0xff]
        %v502 = vld [vmem:[%s308 + $0x18] sm:$0xff]
        %v503 = vld [vmem:[%s308 + $0x20] sm:$0xff]
        %v504 = vld [vmem:[%s308 + $0x28] sm:$0xff]
        %v505 = vld [vmem:[%s308 + $0x30] sm:$0xff]
        %v506 = vld [vmem:[%s308 + $0x38] sm:$0xff]
        %v507 = vadd.f32 %v491, %v499
        %v508 = vadd.f32 %v492, %v500
        %v509 = vadd.f32 %v493, %v501
        %v510 = vadd.f32 %v494, %v502
        %v511 = vadd.f32 %v495, %v503
        %v512 = vadd.f32 %v496, %v504
        %v513 = vadd.f32 %v497, %v505
        %v514 = vadd.f32 %v498, %v506
        %vm515 = vcmp.ge.f32.partialorder %v507, 0.0
        %vm516 = vcmp.ge.f32.partialorder %v508, 0.0
        %vm517 = vcmp.ge.f32.partialorder %v509, 0.0
        %vm518 = vcmp.ge.f32.partialorder %v510, 0.0
        %vm519 = vcmp.ge.f32.partialorder %v511, 0.0
        %vm520 = vcmp.ge.f32.partialorder %v512, 0.0
        %vm521 = vcmp.ge.f32.partialorder %v513, 0.0
        %vm522 = vcmp.ge.f32.partialorder %v514, 0.0
        %v523 = vmul.f32 %v507, 0.1
        %v524 = vmul.f32 %v508, 0.1
        %v525 = vmul.f32 %v509, 0.1
        %v526 = vmul.f32 %v510, 0.1
        %v527 = vmul.f32 %v511, 0.1
        %v528 = vmul.f32 %v512, 0.1
        %v529 = vmul.f32 %v513, 0.1
        %v530 = vmul.f32 %v514, 0.1
        %v531 = vsel %vm515, %v507, %v523
        %v532 = vsel %vm516, %v508, %v524
        %v533 = vsel %vm517, %v509, %v525
        %v534 = vsel %vm518, %v510, %v526
        %v535 = vsel %vm519, %v511, %v527
        %v536 = vsel %vm520, %v512, %v528
        %v537 = vsel %vm521, %v513, %v529
        %v538 = vsel %vm522, %v514, %v530
        %539 = vst.msk [vmem:[%s317] sm:$0xff] %vm467, %v531
        %540 = vst.msk [vmem:[%s317 + $0x8] sm:$0xff] %vm467, %v532
        %541 = vst.msk [vmem:[%s317 + $0x10] sm:$0xff] %vm467, %v533
        %542 = vst.msk [vmem:[%s317 + $0x18] sm:$0xff] %vm467, %v534
        %543 = vst.msk [vmem:[%s317 + $0x20] sm:$0xff] %vm467, %v535
        %544 = vst.msk [vmem:[%s317 + $0x28] sm:$0xff] %vm467, %v536
        %545 = vst.msk [vmem:[%s317 + $0x30] sm:$0xff] %vm467, %v537
        %546 = vst.msk [vmem:[%s317 + $0x38] sm:$0xff] %vm467, %v538
      $region44: #{_lambda_.12} parent=35 // pred_fallthru
        _
      %s547 = smul.u32 8, %s20
      %p548 = scmp.lt.s32.totalorder %s547, 15
      %s549 = scalar_select %p548, %s547, 15
      %p550 = scmp.lt.s32.totalorder %s21, 0
      %s551 = scalar_select %p550, %s21, 0
      %s552 = sadd.s32 %s551, %s549
      %s553 = smul.addr %s552, 8
      %s554 = scalar_lea.vmem %s4, %s553
      // Predicated region
      $region45: #{_lambda_.12} parent=35 // pred_check
        %p555 = pneg %p164
      $region46: #{_lambda_.12} parent=35 // pred_check_branch
        %557 = sbr.rel (%p555) target = $region48
      $region47: #{_lambda_.12} parent=35 // pred_region
        %s558 = smul.u32 8, %s20
      $region48: #{_lambda_.12} parent=35 // pred_fallthru
        _
    $region36: #{_lambda_.12} parent=5 // pred_fallthru
      _
    %p559 = scmp.le.s32.totalorder 2, %s10
    // Predicated region
    $region49: #{_lambda_.12} parent=5 // pred_check
      %p560 = pneg %p559
    $region50: #{_lambda_.12} parent=5 // pred_check_branch
      %562 = sbr.rel (%p560) target = $region52
    $region51: #{_lambda_.12} parent=5 // pred_region
      %s563 = ssub.s32 %s10, 2
      // Predicated region
      $region53: #{_lambda_.12} parent=51 // pred_check
        %p564 = pneg %p170
      $region54: #{_lambda_.12} parent=51 // pred_check_branch
        %566 = sbr.rel (%p564) target = $region56
      $region55: #{_lambda_.12} parent=51 // pred_region
        %s567 = smul.u32 8, %s23
        %p568 = scmp.lt.s32.totalorder %s567, 15
        %s569 = scalar_select %p568, %s567, 15
        %p570 = scmp.lt.s32.totalorder %s24, 0
        %s571 = scalar_select %p570, %s24, 0
        %s572 = sadd.s32 %s571, %s569
        %s573 = smul.addr %s572, 8
        %s574 = scalar_lea.vmem %s4, %s573
      $region56: #{_lambda_.12} parent=51 // pred_fallthru
        _
    $region52: #{_lambda_.12} parent=5 // pred_fallthru
      _
  $region6: #{_lambda_.12} parent=0 // loop_footer
    %s14 = sadd.s32 1, %s10
  $region7: #{_lambda_.12} parent=0 // loop_footer_branch
    %9 = sbr.rel target = $region3
  $region8: #{_lambda_.12} parent=0 // loop_exit
    _

// kernel: div.82
$region0: #{div.82}
  %s0 = inlined_call_operand.vmem [shape: f32[4,8], index: 0, kind: input, shape index: {}]
  %s1 = inlined_call_operand.vmem [shape: f32[32], index: 1, kind: output, shape index: {}]
  $region1: #{div.82} parent=0
    #allocation0 [shape = 'u8[4096]{0}', space=vmem, size = 0x1000, scoped, tag = 'scoped mem for output reshape']
    #allocation1 [shape = 'u8[4096]{0}', space=vmem, size = 0x1000, scoped, tag = 'scoped mem for input reshape']
    %s3 = ssub.s32 16, 1
    %v4 = vld [vmem:[%s0] sm:%s3]
    %5 = vst [vmem:[#allocation1] sm:%s3] %v4
    %v6 = vld [vmem:[#allocation1] sm:$0x1]
    %vm7 = vcmask 64512
    %8 = vst.msk [vmem:[#allocation0] sm:$0x1] %vm7, %v6
    %s9 = scalar_lea.vmem [#allocation1], 3
    %v10 = vld [vmem:[%s9] sm:$0x1]
    %11 = vrot.lane.b32.xlu0 %v10, 24
    %v12 = vpop.permute.xlu0 %11
    %vm13 = vcmask 261312
    %14 = vst.msk [vmem:[#allocation0] sm:$0x1] %vm13, %v12
    %s15 = scalar_lea.vmem [#allocation1], 2
    %v16 = vld [vmem:[%s15] sm:$0x1]
    %17 = vrot.lane.b32.xlu0 %v16, 16
    %v18 = vpop.permute.xlu0 %17
    %vm19 = vcmask 195712
    %20 = vst.msk [vmem:[#allocation0] sm:$0x1] %vm19, %v18
    %s21 = scalar_lea.vmem [#allocation1], 1
    %v22 = vld [vmem:[%s21] sm:$0x1]
    %23 = vrot.lane.b32.xlu0 %v22, 8
    %v24 = vpop.permute.xlu0 %23
    %vm25 = vcmask 130112
    %26 = vst.msk [vmem:[#allocation0] sm:$0x1] %vm25, %v24
    %s28 = ssub.s32 2, 1
    %v29 = vld [vmem:[#allocation0] sm:%s28]
    %s31 = ssub.s32 2, 1
    %32 = vst [vmem:[%s1] sm:%s31] %v29

// kernel: _lambda_.16
$region0: #{_lambda_.16}
  #allocation0 [shape = 'u32[]', space=smem, size = 0x4, offset = 0x4, fixed_abs, tag = 'smem constant byte address 0x4 - core index']
  #allocation1 [shape = 'u32[72,128]{1,0:T(1,128)}', space=vmem, size = 0x9000, scoped, tag = 'internal scratch']
  #allocation2 [shape = 'f32[64,32]{1,0:T(8,128)}', space=vmem, size = 0x8000, scoped, tag = 'scratch operand']
  %s0 = inlined_call_operand.vmem [shape: bf16[128,16], index: 0, kind: input, shape index: {}]
  %s1 = inlined_call_operand.vmem [shape: bf16[16,32], index: 1, kind: input, shape index: {}]
  %s2 = inlined_call_operand.vmem [shape: f32[1,32], index: 2, kind: input, shape index: {}]
  %s3 = inlined_call_operand.vmem [shape: f32[128,32], index: 3, kind: output, shape index: {}]
  %s4 = sld [smem:[#allocation0]]
  $region53: #{_lambda_.16} parent=0
    _
  %s6 = ssub.s32 1, %s4
  %s7 = scalar_select 0, %s6, %s4
  loop: start=0, step=1, limit=4
  $region2: #{_lambda_.16} parent=0 // loop_pre_header
    _
  $region3: #{_lambda_.16} parent=0 // loop_header
    %s9 = sphi 0, %s13
    %p10 = scmp.ge.s32.totalorder %s9, 4
    %s16 = sphi 0, %s35
    %s17 = sphi 0, %s31
    %s18 = sphi 0, %s27
    %s19 = sphi 0, %s16
    %s20 = sphi 0, %s17
    %s21 = sphi 0, %s18
    %s22 = sphi 0, %s19
    %s23 = sphi 0, %s20
    %s24 = sphi 0, %s21
    %s40 = sphi 0, %s42
    %s43 = sphi 0, %s40
    %s44 = sphi 0, %s43
    %s60 = sphi 0, %s44
    %s68 = sphi 0, %s70
    %s71 = sphi 0, %s68
    %s72 = sphi 0, %s71
    %s88 = sphi 0, %s72
    %s94 = sphi 0, %s96
    %s97 = sphi 0, %s94
    %s98 = sphi 0, %s97
    %s114 = sphi 0, %s98
    %s122 = sphi 0, %s124
    %s125 = sphi 0, %s122
    %s126 = sphi 0, %s125
    %s142 = sphi 0, %s126
  $region4: #{_lambda_.16} parent=0 // loop_header_branch
    %12 = sbr.rel (%p10) target = $region8
  $region5: #{_lambda_.16} parent=0 // loop_body
    %s14 = ssub.s32 %s9, 1
    %s15 = ssub.s32 %s9, 2
    %s25 = sadd.s32 1, %s18
    %p26 = scmp.ge.s32.totalorder %s25, 1
    %s27 = scalar_select %p26, 0, %s25
    %s28 = sadd.s32 1, %s17
    %s29 = scalar_select %p26, %s28, %s17
    %p30 = scmp.ge.s32.totalorder %s29, 1
    %s31 = scalar_select %p30, 0, %s29
    %s32 = sadd.s32 1, %s16
    %s33 = scalar_select %p30, %s32, %s16
    %p34 = scmp.ge.s32.totalorder %s33, 2
    %s35 = scalar_select %p34, 0, %s33
    %s36 = ssub.s32 %s16, %s35
    %s37 = ssub.s32 %s18, %s27
    %s38 = sor.u32 %s36, %s37
    %p39 = scmp.eq.s32.totalorder %s38, 0
    %s41 = sadd.s32 %s40, 1
    %s42 = scalar_select %p39, %s40, %s41
    %p45 = pneg %p39
    %p46 = scmp.eq.s32.totalorder %s9, 1
    %p47 = por %p45, %p46
    %p48 = scmp.ne.s32.totalorder %s40, %s43
    %p49 = scmp.eq.s32.totalorder %s9, 0
    %p50 = por %p48, %p49
    %p51 = scmp.ne.s32.totalorder %s40, %s43
    %p52 = scmp.eq.s32.totalorder %s14, 1
    %p53 = por %p51, %p52
    %p54 = scmp.ne.s32.totalorder %s43, %s44
    %p55 = scmp.eq.s32.totalorder %s14, 0
    %p56 = por %p54, %p55
    %p57 = scmp.ne.s32.totalorder %s43, %s44
    %p58 = scmp.eq.s32.totalorder %s15, 1
    %p59 = por %p57, %p58
    %p61 = scmp.ne.s32.totalorder %s44, %s60
    %p62 = scmp.eq.s32.totalorder %s15, 0
    %p63 = por %p61, %p62
    %s64 = ssub.s32 %s18, %s27
    %s65 = ssub.s32 %s17, %s31
    %s66 = sor.u32 %s64, %s65
    %p67 = scmp.eq.s32.totalorder %s66, 0
    %s69 = sadd.s32 %s68, 1
    %s70 = scalar_select %p67, %s68, %s69
    %p73 = pneg %p67
    %p74 = scmp.eq.s32.totalorder %s9, 1
    %p75 = por %p73, %p74
    %p76 = scmp.ne.s32.totalorder %s68, %s71
    %p77 = scmp.eq.s32.totalorder %s9, 0
    %p78 = por %p76, %p77
    %p79 = scmp.ne.s32.totalorder %s68, %s71
    %p80 = scmp.eq.s32.totalorder %s14, 1
    %p81 = por %p79, %p80
    %p82 = scmp.ne.s32.totalorder %s71, %s72
    %p83 = scmp.eq.s32.totalorder %s14, 0
    %p84 = por %p82, %p83
    %p85 = scmp.ne.s32.totalorder %s71, %s72
    %p86 = scmp.eq.s32.totalorder %s15, 1
    %p87 = por %p85, %p86
    %p89 = scmp.ne.s32.totalorder %s72, %s88
    %p90 = scmp.eq.s32.totalorder %s15, 0
    %p91 = por %p89, %p90
    %s92 = ssub.s32 %s17, %s31
    %p93 = scmp.eq.s32.totalorder %s92, 0
    %s95 = sadd.s32 %s94, 1
    %s96 = scalar_select %p93, %s94, %s95
    %p99 = pneg %p93
    %p100 = scmp.eq.s32.totalorder %s9, 1
    %p101 = por %p99, %p100
    %p102 = scmp.ne.s32.totalorder %s94, %s97
    %p103 = scmp.eq.s32.totalorder %s9, 0
    %p104 = por %p102, %p103
    %p105 = scmp.ne.s32.totalorder %s94, %s97
    %p106 = scmp.eq.s32.totalorder %s14, 1
    %p107 = por %p105, %p106
    %p108 = scmp.ne.s32.totalorder %s97, %s98
    %p109 = scmp.eq.s32.totalorder %s14, 0
    %p110 = por %p108, %p109
    %p111 = scmp.ne.s32.totalorder %s97, %s98
    %p112 = scmp.eq.s32.totalorder %s15, 1
    %p113 = por %p111, %p112
    %p115 = scmp.ne.s32.totalorder %s98, %s114
    %p116 = scmp.eq.s32.totalorder %s15, 0
    %p117 = por %p115, %p116
    %s118 = ssub.s32 %s16, %s35
    %s119 = ssub.s32 %s17, %s31
    %s120 = sor.u32 %s118, %s119
    %p121 = scmp.eq.s32.totalorder %s120, 0
    %s123 = sadd.s32 %s122, 1
    %s124 = scalar_select %p121, %s122, %s123
    %p127 = pneg %p121
    %p128 = scmp.eq.s32.totalorder %s9, 1
    %p129 = por %p127, %p128
    %p130 = scmp.ne.s32.totalorder %s122, %s125
    %p131 = scmp.eq.s32.totalorder %s9, 0
    %p132 = por %p130, %p131
    %p133 = scmp.ne.s32.totalorder %s122, %s125
    %p134 = scmp.eq.s32.totalorder %s14, 1
    %p135 = por %p133, %p134
    %p136 = scmp.ne.s32.totalorder %s125, %s126
    %p137 = scmp.eq.s32.totalorder %s14, 0
    %p138 = por %p136, %p137
    %p139 = scmp.ne.s32.totalorder %s125, %s126
    %p140 = scmp.eq.s32.totalorder %s15, 1
    %p141 = por %p139, %p140
    %p143 = scmp.ne.s32.totalorder %s126, %s142
    %p144 = scmp.eq.s32.totalorder %s15, 0
    %p145 = por %p143, %p144
    %p146 = scmp.le.s32.totalorder 1, %s9
    %p147 = scmp.lt.s32.totalorder %s9, 3
    %p148 = pnand %p146, %p147
    %p149 = pneg %p148
    // Predicated region
    $region9: #{_lambda_.16} parent=5 // pred_check
      _
    $region10: #{_lambda_.16} parent=5 // pred_check_branch
      %151 = sbr.rel (%p148) target = $region12
    $region11: #{_lambda_.16} parent=5 // pred_region
      %s152 = ssub.s32 %s9, 1
      // Predicated region
      $region13: #{_lambda_.16} parent=11 // pred_check
        %p153 = pneg %p84
      $region14: #{_lambda_.16} parent=11 // pred_check_branch
        %155 = sbr.rel (%p153) target = $region16
      $region15: #{_lambda_.16} parent=11 // pred_region
        %s156 = smul.u32 2, %s21
        %p157 = scmp.lt.s32.totalorder %s156, 1
        %s158 = scalar_select %p157, %s156, 1
        %p159 = scmp.lt.s32.totalorder %s20, 0
        %s160 = scalar_select %p159, %s20, 0
        %s161 = sadd.s32 %s160, %s158
        %s162 = smul.addr %s161, 4
        %s163 = scalar_lea.vmem %s1, %s162
        %s164 = smul.u32 2, %s21
      $region16: #{_lambda_.16} parent=11 // pred_fallthru
        _
      // Predicated region
      $region17: #{_lambda_.16} parent=11 // pred_check
        %p165 = pneg %p110
      $region18: #{_lambda_.16} parent=11 // pred_check_branch
        %167 = sbr.rel (%p165) target = $region20
      $region19: #{_lambda_.16} parent=11 // pred_region
        %p168 = scmp.lt.s32.totalorder %s20, 0
        %s169 = scalar_select %p168, %s20, 0
        %s170 = scalar_lea.vmem %s2, %s169
      $region20: #{_lambda_.16} parent=11 // pred_fallthru
        _
    $region12: #{_lambda_.16} parent=5 // pred_fallthru
      _
    %p171 = scmp.lt.s32.totalorder %s9, 2
    // Predicated region
    $region21: #{_lambda_.16} parent=5 // pred_check
      %p172 = pneg %p171
    $region22: #{_lambda_.16} parent=5 // pred_check_branch
      %174 = sbr.rel (%p172) target = $region24
    $region23: #{_lambda_.16} parent=5 // pred_region
      // Predicated region
      $region25: #{_lambda_.16} parent=23 // pred_check
        %p175 = pneg %p50
      $region26: #{_lambda_.16} parent=23 // pred_check_branch
        %177 = sbr.rel (%p175) target = $region28
      $region27: #{_lambda_.16} parent=23 // pred_region
        %s178 = smul.u32 8, %s16
        %p179 = scmp.lt.s32.totalorder %s178, 15
        %s180 = scalar_select %p179, %s178, 15
        %p181 = scmp.lt.s32.totalorder %s18, 0
        %s182 = scalar_select %p181, %s18, 0
        %s183 = sadd.s32 %s182, %s180
        %s184 = smul.addr %s183, 4
        %s185 = scalar_lea.vmem %s0, %s184
        %s186 = smul.u32 8, %s16
      $region28: #{_lambda_.16} parent=23 // pred_fallthru
        _
    $region24: #{_lambda_.16} parent=5 // pred_fallthru
      _
    %p187 = scmp.le.s32.totalorder 1, %s9
    %p188 = scmp.lt.s32.totalorder %s9, 3
    %p189 = pnand %p187, %p188
    %p190 = pneg %p189
    // Predicated region
    $region29: #{_lambda_.16} parent=5 // pred_check
      _
    $region30: #{_lambda_.16} parent=5 // pred_check_branch
      %192 = sbr.rel (%p189) target = $region32
    $region31: #{_lambda_.16} parent=5 // pred_region
      %s193 = ssub.s32 %s9, 1
      %s194 = smul.u32 8, %s19
      %p195 = scmp.lt.s32.totalorder %s194, 15
      %s196 = scalar_select %p195, %s194, 15
      %p197 = scmp.lt.s32.totalorder %s21, 0
      %s198 = scalar_select %p197, %s21, 0
      %s199 = sadd.s32 %s198, %s196
      %s200 = smul.addr %s199, 4
      %s201 = scalar_lea.vmem %s0, %s200
      %p202 = pneg %p56
      %p203 = pneg %p53
      %s204 = smul.u32 2, %s21
      %p205 = scmp.lt.s32.totalorder %s204, 1
      %s206 = scalar_select %p205, %s204, 1
      %p207 = scmp.lt.s32.totalorder %s20, 0
      %s208 = scalar_select %p207, %s20, 0
      %s209 = sadd.s32 %s208, %s206
      %s210 = smul.addr %s209, 4
      %s211 = scalar_lea.vmem %s1, %s210
      %p212 = pneg %p84
      %p213 = pneg %p81
      %p214 = scmp.lt.s32.totalorder %s20, 0
      %s215 = scalar_select %p214, %s20, 0
      %s216 = scalar_lea.vmem %s2, %s215
      %p217 = pneg %p110
      %p218 = pneg %p107
      %p219 = pneg %p138
      %p220 = pneg %p135
      %s221 = smul.u32 8, %s19
      %p222 = scmp.lt.s32.totalorder %s221, 15
      %s223 = scalar_select %p222, %s221, 15
      %p224 = scmp.lt.s32.totalorder %s20, 0
      %s225 = scalar_select %p224, %s20, 0
      %s226 = sadd.s32 %s225, %s223
      %s227 = smul.addr %s226, 8
      %s228 = scalar_lea.vmem %s3, %s227
      %s229 = smul.u32 8, %s19
      %p230 = scmp.lt.s32.totalorder %s229, 15
      %s231 = scalar_select %p230, %s229, 15
      %p232 = scmp.lt.s32.totalorder %s21, 0
      %s233 = scalar_select %p232, %s21, 0
      %s234 = sadd.s32 %s233, %s231
      %s235 = smul.addr %s234, 4
      %s236 = scalar_lea.vmem %s0, %s235
      %s237 = smul.u32 8, %s19
      %s238 = smul.u32 2, %s21
      %p239 = scmp.lt.s32.totalorder %s238, 1
      %s240 = scalar_select %p239, %s238, 1
      %p241 = scmp.lt.s32.totalorder %s20, 0
      %s242 = scalar_select %p241, %s20, 0
      %s243 = sadd.s32 %s242, %s240
      %s244 = smul.addr %s243, 4
      %s245 = scalar_lea.vmem %s1, %s244
      %s246 = smul.u32 2, %s21
      %p247 = scmp.lt.s32.totalorder %s20, 0
      %s248 = scalar_select %p247, %s20, 0
      %s249 = scalar_lea.vmem %s2, %s248
      %s250 = smul.u32 8, %s19
      %p251 = scmp.lt.s32.totalorder %s250, 15
      %s252 = scalar_select %p251, %s250, 15
      %p253 = scmp.lt.s32.totalorder %s20, 0
      %s254 = scalar_select %p253, %s20, 0
      %s255 = sadd.s32 %s254, %s252
      %s256 = smul.addr %s255, 8
      %s257 = scalar_lea.vmem %s3, %s256
      %s258 = smul.u32 8, %s19
      %p260 = scmp.eq.s32.totalorder %s21, 0
      // Predicated region
      $region33: #{_lambda_.16} parent=31 // pred_check
        %p261 = pneg %p260
      $region34: #{_lambda_.16} parent=31 // pred_check_branch
        %263 = sbr.rel (%p261) target = $region36
      $region35: #{_lambda_.16} parent=31 // pred_region
        %vm264 = vcmask 261120
        %265 = vst.msk [vmem:[#allocation2] sm:$0xff] %vm264, 0.0
        %266 = vst.msk [vmem:[#allocation2 + $0x8] sm:$0xff] %vm264, 0.0
        %267 = vst.msk [vmem:[#allocation2 + $0x10] sm:$0xff] %vm264, 0.0
        %268 = vst.msk [vmem:[#allocation2 + $0x18] sm:$0xff] %vm264, 0.0
        %269 = vst.msk [vmem:[#allocation2 + $0x20] sm:$0xff] %vm264, 0.0
        %270 = vst.msk [vmem:[#allocation2 + $0x28] sm:$0xff] %vm264, 0.0
        %271 = vst.msk [vmem:[#allocation2 + $0x30] sm:$0xff] %vm264, 0.0
        %272 = vst.msk [vmem:[#allocation2 + $0x38] sm:$0xff] %vm264, 0.0
      $region36: #{_lambda_.16} parent=31 // pred_fallthru
        _
      %v273 = vld [vmem:[#allocation2] sm:$0xff]
      %v274 = vld [vmem:[#allocation2 + $0x8] sm:$0xff]
      %v275 = vld [vmem:[#allocation2 + $0x10] sm:$0xff]
      %v276 = vld [vmem:[#allocation2 + $0x18] sm:$0xff]
      %v277 = vld [vmem:[#allocation2 + $0x20] sm:$0xff]
      %v278 = vld [vmem:[#allocation2 + $0x28] sm:$0xff]
      %v279 = vld [vmem:[#allocation2 + $0x30] sm:$0xff]
      %v280 = vld [vmem:[#allocation2 + $0x38] sm:$0xff]
      %v281 = vld [vmem:[%s236] sm:$0xf]
      %v282 = vld [vmem:[%s236 + $0x4] sm:$0xf]
      %v283 = vld [vmem:[%s236 + $0x8] sm:$0xf]
      %v284 = vld [vmem:[%s236 + $0xc] sm:$0xf]
      %v285 = vld [vmem:[%s236 + $0x10] sm:$0xf]
      %v286 = vld [vmem:[%s236 + $0x14] sm:$0xf]
      %v287 = vld [vmem:[%s236 + $0x18] sm:$0xf]
      %v288 = vld [vmem:[%s236 + $0x1c] sm:$0xf]
      %v289 = vld [vmem:[%s245] sm:$0xf]
      %v290 = vld [vmem:[%s245 + $0x4] sm:$0xf]
      %v299 = vunpack.c.l.b16 %v281
      %v300 = vunpack.c.l.b16 %v282
      %v301 = vunpack.c.l.b16 %v283
      %v302 = vunpack.c.l.b16 %v284
      %v303 = vunpack.c.l.b16 %v285
      %v304 = vunpack.c.l.b16 %v286
      %v305 = vunpack.c.l.b16 %v287
      %v306 = vunpack.c.l.b16 %v288
      %v307 = vpack.c.b16 %v300, %v299
      %v308 = vpack.c.b16 %v302, %v301
      %v309 = vpack.c.b16 %v304, %v303
      %v310 = vpack.c.b16 %v306, %v305
      %v313 = vunpack.c.l.b16 %v289
      %v314 = vunpack.c.l.b16 %v290
      %v315 = vpack.c.b16 %v314, %v313
      %vm317 = vcmask 130048
      %v319 = vsel %vm317, %v307, 0
      %v322 = vsel %vm317, %v308, 0
      %v325 = vsel %vm317, %v309, 0
      %v328 = vsel %vm317, %v310, 0
      %330 = vmatpush.bf16.msra.mxu0 0
      %331 = vmatpush.bf16.msra.mxu0 0
      %332 = vmatpush.bf16.msra.mxu0 0
      %333 = vmatpush.bf16.msra.mxu0 0
      %334 = vmatpush.bf16.msra.mxu0 0
      %335 = vmatpush.bf16.msra.mxu0 0
      %336 = vmatpush.bf16.msra.mxu0 0
      %337 = vmatpush.bf16.msra.mxu0 %v315
      %338 = vmatmul.bf16.gmra.mxu0 %v319
      %v339 = vpop.f32.mrf.mxu0
      %v340 = vadd.f32 0.0, %v339
      %v341 = vpop.f32.mrf.mxu0
      %v342 = vadd.f32 0.0, %v341
      %343 = vmatmul.bf16.gmra.mxu0 %v322
      %v344 = vpop.f32.mrf.mxu0
      %v345 = vadd.f32 0.0, %v344
      %v346 = vpop.f32.mrf.mxu0
      %v347 = vadd.f32 0.0, %v346
      %348 = vmatmul.bf16.gmra.mxu0 %v325
      %v349 = vpop.f32.mrf.mxu0
      %v350 = vadd.f32 0.0, %v349
      %v351 = vpop.f32.mrf.mxu0
      %v352 = vadd.f32 0.0, %v351
      %353 = vmatmul.bf16.gmra.mxu0 %v328
      %v354 = vpop.f32.mrf.mxu0
      %v355 = vadd.f32 0.0, %v354
      %v356 = vpop.f32.mrf.mxu0
      %v357 = vadd.f32 0.0, %v356
      %358 = vdwg.mxu0
      %v359 = vadd.f32 %v273, %v340
      %v360 = vadd.f32 %v274, %v342
      %v361 = vadd.f32 %v275, %v345
      %v362 = vadd.f32 %v276, %v347
      %v363 = vadd.f32 %v277, %v350
      %v364 = vadd.f32 %v278, %v352
      %v365 = vadd.f32 %v279, %v355
      %v366 = vadd.f32 %v280, %v357
      %vm367 = vcmask 261120
      %368 = vst.msk [vmem:[#allocation2] sm:$0xff] %vm367, %v359
      %369 = vst.msk [vmem:[#allocation2 + $0x8] sm:$0xff] %vm367, %v360
      %370 = vst.msk [vmem:[#allocation2 + $0x10] sm:$0xff] %vm367, %v361
      %371 = vst.msk [vmem:[#allocation2 + $0x18] sm:$0xff] %vm367, %v362
      %372 = vst.msk [vmem:[#allocation2 + $0x20] sm:$0xff] %vm367, %v363
      %373 = vst.msk [vmem:[#allocation2 + $0x28] sm:$0xff] %vm367, %v364
      %374 = vst.msk [vmem:[#allocation2 + $0x30] sm:$0xff] %vm367, %v365
      %375 = vst.msk [vmem:[#allocation2 + $0x38] sm:$0xff] %vm367, %v366
      // Predicated region
      $region37: #{_lambda_.16} parent=31 // pred_check
        %p376 = pneg %p260
      $region38: #{_lambda_.16} parent=31 // pred_check_branch
        %378 = sbr.rel (%p376) target = $region40
      $region39: #{_lambda_.16} parent=31 // pred_region
        %v379 = vld [vmem:[#allocation2] sm:$0xff]
        %v380 = vld [vmem:[#allocation2 + $0x8] sm:$0xff]
        %v381 = vld [vmem:[#allocation2 + $0x10] sm:$0xff]
        %v382 = vld [vmem:[#allocation2 + $0x18] sm:$0xff]
        %v383 = vld [vmem:[#allocation2 + $0x20] sm:$0xff]
        %v384 = vld [vmem:[#allocation2 + $0x28] sm:$0xff]
        %v385 = vld [vmem:[#allocation2 + $0x30] sm:$0xff]
        %v386 = vld [vmem:[#allocation2 + $0x38] sm:$0xff]
        %v387 = vld [vmem:[%s249] sm:$0x1]
        %v389 = vperm.slane %v387, 0
        %v391 = vadd.f32 %v379, %v389
        %v392 = vadd.f32 %v380, %v389
        %v393 = vadd.f32 %v381, %v389
        %v394 = vadd.f32 %v382, %v389
        %v395 = vadd.f32 %v383, %v389
        %v396 = vadd.f32 %v384, %v389
        %v397 = vadd.f32 %v385, %v389
        %v398 = vadd.f32 %v386, %v389
        %399 = vst.msk [vmem:[%s257] sm:$0xff] %vm367, %v391
        %400 = vst.msk [vmem:[%s257 + $0x8] sm:$0xff] %vm367, %v392
        %401 = vst.msk [vmem:[%s257 + $0x10] sm:$0xff] %vm367, %v393
        %402 = vst.msk [vmem:[%s257 + $0x18] sm:$0xff] %vm367, %v394
        %403 = vst.msk [vmem:[%s257 + $0x20] sm:$0xff] %vm367, %v395
        %404 = vst.msk [vmem:[%s257 + $0x28] sm:$0xff] %vm367, %v396
        %405 = vst.msk [vmem:[%s257 + $0x30] sm:$0xff] %vm367, %v397
        %406 = vst.msk [vmem:[%s257 + $0x38] sm:$0xff] %vm367, %v398
      $region40: #{_lambda_.16} parent=31 // pred_fallthru
        _
      %s407 = smul.u32 8, %s19
      %p408 = scmp.lt.s32.totalorder %s407, 15
      %s409 = scalar_select %p408, %s407, 15
      %p410 = scmp.lt.s32.totalorder %s20, 0
      %s411 = scalar_select %p410, %s20, 0
      %s412 = sadd.s32 %s411, %s409
      %s413 = smul.addr %s412, 8
      %s414 = scalar_lea.vmem %s3, %s413
      // Predicated region
      $region41: #{_lambda_.16} parent=31 // pred_check
        %p415 = pneg %p135
      $region42: #{_lambda_.16} parent=31 // pred_check_branch
        %417 = sbr.rel (%p415) target = $region44
      $region43: #{_lambda_.16} parent=31 // pred_region
        %s418 = smul.u32 8, %s19
      $region44: #{_lambda_.16} parent=31 // pred_fallthru
        _
    $region32: #{_lambda_.16} parent=5 // pred_fallthru
      _
    %p419 = scmp.le.s32.totalorder 2, %s9
    // Predicated region
    $region45: #{_lambda_.16} parent=5 // pred_check
      %p420 = pneg %p419
    $region46: #{_lambda_.16} parent=5 // pred_check_branch
      %422 = sbr.rel (%p420) target = $region48
    $region47: #{_lambda_.16} parent=5 // pred_region
      %s423 = ssub.s32 %s9, 2
      // Predicated region
      $region49: #{_lambda_.16} parent=47 // pred_check
        %p424 = pneg %p141
      $region50: #{_lambda_.16} parent=47 // pred_check_branch
        %426 = sbr.rel (%p424) target = $region52
      $region51: #{_lambda_.16} parent=47 // pred_region
        %s427 = smul.u32 8, %s22
        %p428 = scmp.lt.s32.totalorder %s427, 15
        %s429 = scalar_select %p428, %s427, 15
        %p430 = scmp.lt.s32.totalorder %s23, 0
        %s431 = scalar_select %p430, %s23, 0
        %s432 = sadd.s32 %s431, %s429
        %s433 = smul.addr %s432, 8
        %s434 = scalar_lea.vmem %s3, %s433
      $region52: #{_lambda_.16} parent=47 // pred_fallthru
        _
    $region48: #{_lambda_.16} parent=5 // pred_fallthru
      _
  $region6: #{_lambda_.16} parent=0 // loop_footer
    %s13 = sadd.s32 1, %s9
  $region7: #{_lambda_.16} parent=0 // loop_footer_branch
    %8 = sbr.rel target = $region3
  $region8: #{_lambda_.16} parent=0 // loop_exit
    _

// kernel: _lambda_.13
$region0: #{_lambda_.13}
  #allocation0 [shape = 'u32[]', space=smem, size = 0x4, offset = 0x4, fixed_abs, tag = 'smem constant byte address 0x4 - core index']
  #allocation1 [shape = 'u32[72,128]{1,0:T(1,128)}', space=vmem, size = 0x9000, scoped, tag = 'internal scratch']
  #allocation2 [shape = 'f32[64,16]{1,0:T(8,128)}', space=vmem, size = 0x8000, scoped, tag = 'scratch operand']
  %s0 = inlined_call_operand.vmem [shape: bf16[128,48], index: 0, kind: input, shape index: {}]
  %s1 = inlined_call_operand.vmem [shape: bf16[48,16], index: 1, kind: input, shape index: {}]
  %s2 = inlined_call_operand.vmem [shape: f32[1,16], index: 2, kind: input, shape index: {}]
  %s3 = inlined_call_operand.vmem [shape: f32[128,16], index: 3, kind: input, shape index: {}]
  %s4 = inlined_call_operand.vmem [shape: f32[128,16], index: 4, kind: output, shape index: {}]
  %s5 = sld [smem:[#allocation0]]
  $region57: #{_lambda_.13} parent=0
    _
  %s7 = ssub.s32 1, %s5
  %s8 = scalar_select 0, %s7, %s5
  loop: start=0, step=1, limit=4
  $region2: #{_lambda_.13} parent=0 // loop_pre_header
    _
  $region3: #{_lambda_.13} parent=0 // loop_header
    %s10 = sphi 0, %s14
    %p11 = scmp.ge.s32.totalorder %s10, 4
    %s17 = sphi 0, %s36
    %s18 = sphi 0, %s32
    %s19 = sphi 0, %s28
    %s20 = sphi 0, %s17
    %s21 = sphi 0, %s18
    %s22 = sphi 0, %s19
    %s23 = sphi 0, %s20
    %s24 = sphi 0, %s21
    %s25 = sphi 0, %s22
    %s41 = sphi 0, %s43
    %s44 = sphi 0, %s41
    %s45 = sphi 0, %s44
    %s61 = sphi 0, %s45
    %s69 = sphi 0, %s71
    %s72 = sphi 0, %s69
    %s73 = sphi 0, %s72
    %s89 = sphi 0, %s73
    %s95 = sphi 0, %s97
    %s98 = sphi 0, %s95
    %s99 = sphi 0, %s98
    %s115 = sphi 0, %s99
    %s123 = sphi 0, %s125
    %s126 = sphi 0, %s123
    %s127 = sphi 0, %s126
    %s143 = sphi 0, %s127
    %s151 = sphi 0, %s153
    %s154 = sphi 0, %s151
    %s155 = sphi 0, %s154
    %s171 = sphi 0, %s155
  $region4: #{_lambda_.13} parent=0 // loop_header_branch
    %13 = sbr.rel (%p11) target = $region8
  $region5: #{_lambda_.13} parent=0 // loop_body
    %s15 = ssub.s32 %s10, 1
    %s16 = ssub.s32 %s10, 2
    %s26 = sadd.s32 1, %s19
    %p27 = scmp.ge.s32.totalorder %s26, 1
    %s28 = scalar_select %p27, 0, %s26
    %s29 = sadd.s32 1, %s18
    %s30 = scalar_select %p27, %s29, %s18
    %p31 = scmp.ge.s32.totalorder %s30, 1
    %s32 = scalar_select %p31, 0, %s30
    %s33 = sadd.s32 1, %s17
    %s34 = scalar_select %p31, %s33, %s17
    %p35 = scmp.ge.s32.totalorder %s34, 2
    %s36 = scalar_select %p35, 0, %s34
    %s37 = ssub.s32 %s17, %s36
    %s38 = ssub.s32 %s19, %s28
    %s39 = sor.u32 %s37, %s38
    %p40 = scmp.eq.s32.totalorder %s39, 0
    %s42 = sadd.s32 %s41, 1
    %s43 = scalar_select %p40, %s41, %s42
    %p46 = pneg %p40
    %p47 = scmp.eq.s32.totalorder %s10, 1
    %p48 = por %p46, %p47
    %p49 = scmp.ne.s32.totalorder %s41, %s44
    %p50 = scmp.eq.s32.totalorder %s10, 0
    %p51 = por %p49, %p50
    %p52 = scmp.ne.s32.totalorder %s41, %s44
    %p53 = scmp.eq.s32.totalorder %s15, 1
    %p54 = por %p52, %p53
    %p55 = scmp.ne.s32.totalorder %s44, %s45
    %p56 = scmp.eq.s32.totalorder %s15, 0
    %p57 = por %p55, %p56
    %p58 = scmp.ne.s32.totalorder %s44, %s45
    %p59 = scmp.eq.s32.totalorder %s16, 1
    %p60 = por %p58, %p59
    %p62 = scmp.ne.s32.totalorder %s45, %s61
    %p63 = scmp.eq.s32.totalorder %s16, 0
    %p64 = por %p62, %p63
    %s65 = ssub.s32 %s19, %s28
    %s66 = ssub.s32 %s18, %s32
    %s67 = sor.u32 %s65, %s66
    %p68 = scmp.eq.s32.totalorder %s67, 0
    %s70 = sadd.s32 %s69, 1
    %s71 = scalar_select %p68, %s69, %s70
    %p74 = pneg %p68
    %p75 = scmp.eq.s32.totalorder %s10, 1
    %p76 = por %p74, %p75
    %p77 = scmp.ne.s32.totalorder %s69, %s72
    %p78 = scmp.eq.s32.totalorder %s10, 0
    %p79 = por %p77, %p78
    %p80 = scmp.ne.s32.totalorder %s69, %s72
    %p81 = scmp.eq.s32.totalorder %s15, 1
    %p82 = por %p80, %p81
    %p83 = scmp.ne.s32.totalorder %s72, %s73
    %p84 = scmp.eq.s32.totalorder %s15, 0
    %p85 = por %p83, %p84
    %p86 = scmp.ne.s32.totalorder %s72, %s73
    %p87 = scmp.eq.s32.totalorder %s16, 1
    %p88 = por %p86, %p87
    %p90 = scmp.ne.s32.totalorder %s73, %s89
    %p91 = scmp.eq.s32.totalorder %s16, 0
    %p92 = por %p90, %p91
    %s93 = ssub.s32 %s18, %s32
    %p94 = scmp.eq.s32.totalorder %s93, 0
    %s96 = sadd.s32 %s95, 1
    %s97 = scalar_select %p94, %s95, %s96
    %p100 = pneg %p94
    %p101 = scmp.eq.s32.totalorder %s10, 1
    %p102 = por %p100, %p101
    %p103 = scmp.ne.s32.totalorder %s95, %s98
    %p104 = scmp.eq.s32.totalorder %s10, 0
    %p105 = por %p103, %p104
    %p106 = scmp.ne.s32.totalorder %s95, %s98
    %p107 = scmp.eq.s32.totalorder %s15, 1
    %p108 = por %p106, %p107
    %p109 = scmp.ne.s32.totalorder %s98, %s99
    %p110 = scmp.eq.s32.totalorder %s15, 0
    %p111 = por %p109, %p110
    %p112 = scmp.ne.s32.totalorder %s98, %s99
    %p113 = scmp.eq.s32.totalorder %s16, 1
    %p114 = por %p112, %p113
    %p116 = scmp.ne.s32.totalorder %s99, %s115
    %p117 = scmp.eq.s32.totalorder %s16, 0
    %p118 = por %p116, %p117
    %s119 = ssub.s32 %s17, %s36
    %s120 = ssub.s32 %s18, %s32
    %s121 = sor.u32 %s119, %s120
    %p122 = scmp.eq.s32.totalorder %s121, 0
    %s124 = sadd.s32 %s123, 1
    %s125 = scalar_select %p122, %s123, %s124
    %p128 = pneg %p122
    %p129 = scmp.eq.s32.totalorder %s10, 1
    %p130 = por %p128, %p129
    %p131 = scmp.ne.s32.totalorder %s123, %s126
    %p132 = scmp.eq.s32.totalorder %s10, 0
    %p133 = por %p131, %p132
    %p134 = scmp.ne.s32.totalorder %s123, %s126
    %p135 = scmp.eq.s32.totalorder %s15, 1
    %p136 = por %p134, %p135
    %p137 = scmp.ne.s32.totalorder %s126, %s127
    %p138 = scmp.eq.s32.totalorder %s15, 0
    %p139 = por %p137, %p138
    %p140 = scmp.ne.s32.totalorder %s126, %s127
    %p141 = scmp.eq.s32.totalorder %s16, 1
    %p142 = por %p140, %p141
    %p144 = scmp.ne.s32.totalorder %s127, %s143
    %p145 = scmp.eq.s32.totalorder %s16, 0
    %p146 = por %p144, %p145
    %s147 = ssub.s32 %s17, %s36
    %s148 = ssub.s32 %s18, %s32
    %s149 = sor.u32 %s147, %s148
    %p150 = scmp.eq.s32.totalorder %s149, 0
    %s152 = sadd.s32 %s151, 1
    %s153 = scalar_select %p150, %s151, %s152
    %p156 = pneg %p150
    %p157 = scmp.eq.s32.totalorder %s10, 1
    %p158 = por %p156, %p157
    %p159 = scmp.ne.s32.totalorder %s151, %s154
    %p160 = scmp.eq.s32.totalorder %s10, 0
    %p161 = por %p159, %p160
    %p162 = scmp.ne.s32.totalorder %s151, %s154
    %p163 = scmp.eq.s32.totalorder %s15, 1
    %p164 = por %p162, %p163
    %p165 = scmp.ne.s32.totalorder %s154, %s155
    %p166 = scmp.eq.s32.totalorder %s15, 0
    %p167 = por %p165, %p166
    %p168 = scmp.ne.s32.totalorder %s154, %s155
    %p169 = scmp.eq.s32.totalorder %s16, 1
    %p170 = por %p168, %p169
    %p172 = scmp.ne.s32.totalorder %s155, %s171
    %p173 = scmp.eq.s32.totalorder %s16, 0
    %p174 = por %p172, %p173
    %p175 = scmp.le.s32.totalorder 1, %s10
    %p176 = scmp.lt.s32.totalorder %s10, 3
    %p177 = pnand %p175, %p176
    %p178 = pneg %p177
    // Predicated region
    $region9: #{_lambda_.13} parent=5 // pred_check
      _
    $region10: #{_lambda_.13} parent=5 // pred_check_branch
      %180 = sbr.rel (%p177) target = $region12
    $region11: #{_lambda_.13} parent=5 // pred_region
      %s181 = ssub.s32 %s10, 1
      // Predicated region
      $region13: #{_lambda_.13} parent=11 // pred_check
        %p182 = pneg %p85
      $region14: #{_lambda_.13} parent=11 // pred_check_branch
        %184 = sbr.rel (%p182) target = $region16
      $region15: #{_lambda_.13} parent=11 // pred_region
        %s185 = smul.u32 6, %s22
        %p186 = scmp.lt.s32.totalorder %s185, 5
        %s187 = scalar_select %p186, %s185, 5
        %p188 = scmp.lt.s32.totalorder %s21, 0
        %s189 = scalar_select %p188, %s21, 0
        %s190 = sadd.s32 %s189, %s187
        %s191 = smul.addr %s190, 4
        %s192 = scalar_lea.vmem %s1, %s191
        %s193 = smul.u32 6, %s22
      $region16: #{_lambda_.13} parent=11 // pred_fallthru
        _
      // Predicated region
      $region17: #{_lambda_.13} parent=11 // pred_check
        %p194 = pneg %p111
      $region18: #{_lambda_.13} parent=11 // pred_check_branch
        %196 = sbr.rel (%p194) target = $region20
      $region19: #{_lambda_.13} parent=11 // pred_region
        %p197 = scmp.lt.s32.totalorder %s21, 0
        %s198 = scalar_select %p197, %s21, 0
        %s199 = scalar_lea.vmem %s2, %s198
      $region20: #{_lambda_.13} parent=11 // pred_fallthru
        _
    $region12: #{_lambda_.13} parent=5 // pred_fallthru
      _
    %p200 = scmp.lt.s32.totalorder %s10, 2
    // Predicated region
    $region21: #{_lambda_.13} parent=5 // pred_check
      %p201 = pneg %p200
    $region22: #{_lambda_.13} parent=5 // pred_check_branch
      %203 = sbr.rel (%p201) target = $region24
    $region23: #{_lambda_.13} parent=5 // pred_region
      // Predicated region
      $region25: #{_lambda_.13} parent=23 // pred_check
        %p204 = pneg %p51
      $region26: #{_lambda_.13} parent=23 // pred_check_branch
        %206 = sbr.rel (%p204) target = $region28
      $region27: #{_lambda_.13} parent=23 // pred_region
        %s207 = smul.u32 8, %s17
        %p208 = scmp.lt.s32.totalorder %s207, 15
        %s209 = scalar_select %p208, %s207, 15
        %p210 = scmp.lt.s32.totalorder %s19, 0
        %s211 = scalar_select %p210, %s19, 0
        %s212 = sadd.s32 %s211, %s209
        %s213 = smul.addr %s212, 4
        %s214 = scalar_lea.vmem %s0, %s213
        %s215 = smul.u32 8, %s17
      $region28: #{_lambda_.13} parent=23 // pred_fallthru
        _
      // Predicated region
      $region29: #{_lambda_.13} parent=23 // pred_check
        %p216 = pneg %p133
      $region30: #{_lambda_.13} parent=23 // pred_check_branch
        %218 = sbr.rel (%p216) target = $region32
      $region31: #{_lambda_.13} parent=23 // pred_region
        %s219 = smul.u32 8, %s17
        %p220 = scmp.lt.s32.totalorder %s219, 15
        %s221 = scalar_select %p220, %s219, 15
        %p222 = scmp.lt.s32.totalorder %s18, 0
        %s223 = scalar_select %p222, %s18, 0
        %s224 = sadd.s32 %s223, %s221
        %s225 = smul.addr %s224, 8
        %s226 = scalar_lea.vmem %s3, %s225
        %s227 = smul.u32 8, %s17
      $region32: #{_lambda_.13} parent=23 // pred_fallthru
        _
    $region24: #{_lambda_.13} parent=5 // pred_fallthru
      _
    %p228 = scmp.le.s32.totalorder 1, %s10
    %p229 = scmp.lt.s32.totalorder %s10, 3
    %p230 = pnand %p228, %p229
    %p231 = pneg %p230
    // Predicated region
    $region33: #{_lambda_.13} parent=5 // pred_check
      _
    $region34: #{_lambda_.13} parent=5 // pred_check_branch
      %233 = sbr.rel (%p230) target = $region36
    $region35: #{_lambda_.13} parent=5 // pred_region
      %s234 = ssub.s32 %s10, 1
      %s235 = smul.u32 8, %s20
      %p236 = scmp.lt.s32.totalorder %s235, 15
      %s237 = scalar_select %p236, %s235, 15
      %p238 = scmp.lt.s32.totalorder %s22, 0
      %s239 = scalar_select %p238, %s22, 0
      %s240 = sadd.s32 %s239, %s237
      %s241 = smul.addr %s240, 4
      %s242 = scalar_lea.vmem %s0, %s241
      %p243 = pneg %p57
      %p244 = pneg %p54
      %s245 = smul.u32 6, %s22
      %p246 = scmp.lt.s32.totalorder %s245, 5
      %s247 = scalar_select %p246, %s245, 5
      %p248 = scmp.lt.s32.totalorder %s21, 0
      %s249 = scalar_select %p248, %s21, 0
      %s250 = sadd.s32 %s249, %s247
      %s251 = smul.addr %s250, 4
      %s252 = scalar_lea.vmem %s1, %s251
      %p253 = pneg %p85
      %p254 = pneg %p82
      %p255 = scmp.lt.s32.totalorder %s21, 0
      %s256 = scalar_select %p255, %s21, 0
      %s257 = scalar_lea.vmem %s2, %s256
      %p258 = pneg %p111
      %p259 = pneg %p108
      %s260 = smul.u32 8, %s20
      %p261 = scmp.lt.s32.totalorder %s260, 15
      %s262 = scalar_select %p261, %s260, 15
      %p263 = scmp.lt.s32.totalorder %s21, 0
      %s264 = scalar_select %p263, %s21, 0
      %s265 = sadd.s32 %s264, %s262
      %s266 = smul.addr %s265, 8
      %s267 = scalar_lea.vmem %s3, %s266
      %p268 = pneg %p139
      %p269 = pneg %p136
      %p270 = pneg %p167
      %p271 = pneg %p164
      %s272 = smul.u32 8, %s20
      %p273 = scmp.lt.s32.totalorder %s272, 15
      %s274 = scalar_select %p273, %s272, 15
      %p275 = scmp.lt.s32.totalorder %s21, 0
      %s276 = scalar_select %p275, %s21, 0
      %s277 = sadd.s32 %s276, %s274
      %s278 = smul.addr %s277, 8
      %s279 = scalar_lea.vmem %s4, %s278
      %s280 = smul.u32 8, %s20
      %p281 = scmp.lt.s32.totalorder %s280, 15
      %s282 = scalar_select %p281, %s280, 15
      %p283 = scmp.lt.s32.totalorder %s22, 0
      %s284 = scalar_select %p283, %s22, 0
      %s285 = sadd.s32 %s284, %s282
      %s286 = smul.addr %s285, 4
      %s287 = scalar_lea.vmem %s0, %s286
      %s288 = smul.u32 8, %s20
      %s289 = smul.u32 6, %s22
      %p290 = scmp.lt.s32.totalorder %s289, 5
      %s291 = scalar_select %p290, %s289, 5
      %p292 = scmp.lt.s32.totalorder %s21, 0
      %s293 = scalar_select %p292, %s21, 0
      %s294 = sadd.s32 %s293, %s291
      %s295 = smul.addr %s294, 4
      %s296 = scalar_lea.vmem %s1, %s295
      %s297 = smul.u32 6, %s22
      %p298 = scmp.lt.s32.totalorder %s21, 0
      %s299 = scalar_select %p298, %s21, 0
      %s300 = scalar_lea.vmem %s2, %s299
      %s301 = smul.u32 8, %s20
      %p302 = scmp.lt.s32.totalorder %s301, 15
      %s303 = scalar_select %p302, %s301, 15
      %p304 = scmp.lt.s32.totalorder %s21, 0
      %s305 = scalar_select %p304, %s21, 0
      %s306 = sadd.s32 %s305, %s303
      %s307 = smul.addr %s306, 8
      %s308 = scalar_lea.vmem %s3, %s307
      %s309 = smul.u32 8, %s20
      %s310 = smul.u32 8, %s20
      %p311 = scmp.lt.s32.totalorder %s310, 15
      %s312 = scalar_select %p311, %s310, 15
      %p313 = scmp.lt.s32.totalorder %s21, 0
      %s314 = scalar_select %p313, %s21, 0
      %s315 = sadd.s32 %s314, %s312
      %s316 = smul.addr %s315, 8
      %s317 = scalar_lea.vmem %s4, %s316
      %s318 = smul.u32 8, %s20
      %p320 = scmp.eq.s32.totalorder %s22, 0
      // Predicated region
      $region37: #{_lambda_.13} parent=35 // pred_check
        %p321 = pneg %p320
      $region38: #{_lambda_.13} parent=35 // pred_check_branch
        %323 = sbr.rel (%p321) target = $region40
      $region39: #{_lambda_.13} parent=35 // pred_region
        %vm324 = vcmask 130048
        %325 = vst.msk [vmem:[#allocation2] sm:$0xff] %vm324, 0.0
        %326 = vst.msk [vmem:[#allocation2 + $0x8] sm:$0xff] %vm324, 0.0
        %327 = vst.msk [vmem:[#allocation2 + $0x10] sm:$0xff] %vm324, 0.0
        %328 = vst.msk [vmem:[#allocation2 + $0x18] sm:$0xff] %vm324, 0.0
        %329 = vst.msk [vmem:[#allocation2 + $0x20] sm:$0xff] %vm324, 0.0
        %330 = vst.msk [vmem:[#allocation2 + $0x28] sm:$0xff] %vm324, 0.0
        %331 = vst.msk [vmem:[#allocation2 + $0x30] sm:$0xff] %vm324, 0.0
        %332 = vst.msk [vmem:[#allocation2 + $0x38] sm:$0xff] %vm324, 0.0
      $region40: #{_lambda_.13} parent=35 // pred_fallthru
        _
      %v333 = vld [vmem:[#allocation2] sm:$0xff]
      %v334 = vld [vmem:[#allocation2 + $0x8] sm:$0xff]
      %v335 = vld [vmem:[#allocation2 + $0x10] sm:$0xff]
      %v336 = vld [vmem:[#allocation2 + $0x18] sm:$0xff]
      %v337 = vld [vmem:[#allocation2 + $0x20] sm:$0xff]
      %v338 = vld [vmem:[#allocation2 + $0x28] sm:$0xff]
      %v339 = vld [vmem:[#allocation2 + $0x30] sm:$0xff]
      %v340 = vld [vmem:[#allocation2 + $0x38] sm:$0xff]
      %v341 = vld [vmem:[%s287] sm:$0xf]
      %v342 = vld [vmem:[%s287 + $0x4] sm:$0xf]
      %v343 = vld [vmem:[%s287 + $0x8] sm:$0xf]
      %v344 = vld [vmem:[%s287 + $0xc] sm:$0xf]
      %v345 = vld [vmem:[%s287 + $0x10] sm:$0xf]
      %v346 = vld [vmem:[%s287 + $0x14] sm:$0xf]
      %v347 = vld [vmem:[%s287 + $0x18] sm:$0xf]
      %v348 = vld [vmem:[%s287 + $0x1c] sm:$0xf]
      %v349 = vld [vmem:[%s296] sm:$0xf]
      %v350 = vld [vmem:[%s296 + $0x4] sm:$0xf]
      %v351 = vld [vmem:[%s296 + $0x8] sm:$0xf]
      %v352 = vld [vmem:[%s296 + $0xc] sm:$0xf]
      %v353 = vld [vmem:[%s296 + $0x10] sm:$0xf]
      %v354 = vld [vmem:[%s296 + $0x14] sm:$0xf]
      %v363 = vunpack.c.l.b16 %v341
      %v364 = vunpack.c.l.b16 %v342
      %v365 = vunpack.c.l.b16 %v343
      %v366 = vunpack.c.l.b16 %v344
      %v367 = vunpack.c.l.b16 %v345
      %v368 = vunpack.c.l.b16 %v346
      %v369 = vunpack.c.l.b16 %v347
      %v370 = vunpack.c.l.b16 %v348
      %v371 = vpack.c.b16 %v364, %v363
      %v372 = vpack.c.b16 %v366, %v365
      %v373 = vpack.c.b16 %v368, %v367
      %v374 = vpack.c.b16 %v370, %v369
      %v381 = vunpack.c.l.b16 %v349
      %v382 = vunpack.c.l.b16 %v350
      %v383 = vunpack.c.l.b16 %v351
      %v384 = vunpack.c.l.b16 %v352
      %v385 = vunpack.c.l.b16 %v353
      %v386 = vunpack.c.l.b16 %v354
      %v387 = vpack.c.b16 %v382, %v381
      %v388 = vpack.c.b16 %v384, %v383
      %v389 = vpack.c.b16 %v386, %v385
      %vm393 = vcmask 392192
      %v395 = vsel %vm393, %v371, 0
      %v398 = vsel %vm393, %v372, 0
      %v401 = vsel %vm393, %v373, 0
      %v404 = vsel %vm393, %v374, 0
      %406 = vmatpush.bf16.msra.mxu0 0
      %407 = vmatpush.bf16.msra.mxu0 0
      %408 = vmatpush.bf16.msra.mxu0 0
      %409 = vmatpush.bf16.msra.mxu0 0
      %410 = vmatpush.bf16.msra.mxu0 0
      %411 = vmatpush.bf16.msra.mxu0 %v389
      %412 = vmatpush.bf16.msra.mxu0 %v388
      %413 = vmatpush.bf16.msra.mxu0 %v387
      %414 = vmatmul.bf16.gmra.mxu0 %v395
      %v415 = vpop.f32.mrf.mxu0
      %v416 = vadd.f32 0.0, %v415
      %v417 = vpop.f32.mrf.mxu0
      %v418 = vadd.f32 0.0, %v417
      %419 = vmatmul.bf16.gmra.mxu0 %v398
      %v420 = vpop.f32.mrf.mxu0
      %v421 = vadd.f32 0.0, %v420
      %v422 = vpop.f32.mrf.mxu0
      %v423 = vadd.f32 0.0, %v422
      %424 = vmatmul.bf16.gmra.mxu0 %v401
      %v425 = vpop.f32.mrf.mxu0
      %v426 = vadd.f32 0.0, %v425
      %v427 = vpop.f32.mrf.mxu0
      %v428 = vadd.f32 0.0, %v427
      %429 = vmatmul.bf16.gmra.mxu0 %v404
      %v430 = vpop.f32.mrf.mxu0
      %v431 = vadd.f32 0.0, %v430
      %v432 = vpop.f32.mrf.mxu0
      %v433 = vadd.f32 0.0, %v432
      %434 = vdwg.mxu0
      %v435 = vadd.f32 %v333, %v416
      %v436 = vadd.f32 %v334, %v418
      %v437 = vadd.f32 %v335, %v421
      %v438 = vadd.f32 %v336, %v423
      %v439 = vadd.f32 %v337, %v426
      %v440 = vadd.f32 %v338, %v428
      %v441 = vadd.f32 %v339, %v431
      %v442 = vadd.f32 %v340, %v433
      %vm443 = vcmask 130048
      %444 = vst.msk [vmem:[#allocation2] sm:$0xff] %vm443, %v435
      %445 = vst.msk [vmem:[#allocation2 + $0x8] sm:$0xff] %vm443, %v436
      %446 = vst.msk [vmem:[#allocation2 + $0x10] sm:$0xff] %vm443, %v437
      %447 = vst.msk [vmem:[#allocation2 + $0x18] sm:$0xff] %vm443, %v438
      %448 = vst.msk [vmem:[#allocation2 + $0x20] sm:$0xff] %vm443, %v439
      %449 = vst.msk [vmem:[#allocation2 + $0x28] sm:$0xff] %vm443, %v440
      %450 = vst.msk [vmem:[#allocation2 + $0x30] sm:$0xff] %vm443, %v441
      %451 = vst.msk [vmem:[#allocation2 + $0x38] sm:$0xff] %vm443, %v442
      // Predicated region
      $region41: #{_lambda_.13} parent=35 // pred_check
        %p452 = pneg %p320
      $region42: #{_lambda_.13} parent=35 // pred_check_branch
        %454 = sbr.rel (%p452) target = $region44
      $region43: #{_lambda_.13} parent=35 // pred_region
        %v455 = vld [vmem:[#allocation2] sm:$0xff]
        %v456 = vld [vmem:[#allocation2 + $0x8] sm:$0xff]
        %v457 = vld [vmem:[#allocation2 + $0x10] sm:$0xff]
        %v458 = vld [vmem:[#allocation2 + $0x18] sm:$0xff]
        %v459 = vld [vmem:[#allocation2 + $0x20] sm:$0xff]
        %v460 = vld [vmem:[#allocation2 + $0x28] sm:$0xff]
        %v461 = vld [vmem:[#allocation2 + $0x30] sm:$0xff]
        %v462 = vld [vmem:[#allocation2 + $0x38] sm:$0xff]
        %v463 = vld [vmem:[%s300] sm:$0x1]
        %v465 = vperm.slane %v463, 0
        %v467 = vadd.f32 %v455, %v465
        %v468 = vadd.f32 %v456, %v465
        %v469 = vadd.f32 %v457, %v465
        %v470 = vadd.f32 %v458, %v465
        %v471 = vadd.f32 %v459, %v465
        %v472 = vadd.f32 %v460, %v465
        %v473 = vadd.f32 %v461, %v465
        %v474 = vadd.f32 %v462, %v465
        %v475 = vld [vmem:[%s308] sm:$0xff]
        %v476 = vld [vmem:[%s308 + $0x8] sm:$0xff]
        %v477 = vld [vmem:[%s308 + $0x10] sm:$0xff]
        %v478 = vld [vmem:[%s308 + $0x18] sm:$0xff]
        %v479 = vld [vmem:[%s308 + $0x20] sm:$0xff]
        %v480 = vld [vmem:[%s308 + $0x28] sm:$0xff]
        %v481 = vld [vmem:[%s308 + $0x30] sm:$0xff]
        %v482 = vld [vmem:[%s308 + $0x38] sm:$0xff]
        %v483 = vadd.f32 %v467, %v475
        %v484 = vadd.f32 %v468, %v476
        %v485 = vadd.f32 %v469, %v477
        %v486 = vadd.f32 %v470, %v478
        %v487 = vadd.f32 %v471, %v479
        %v488 = vadd.f32 %v472, %v480
        %v489 = vadd.f32 %v473, %v481
        %v490 = vadd.f32 %v474, %v482
        %vm491 = vcmp.ge.f32.partialorder %v483, 0.0
        %vm492 = vcmp.ge.f32.partialorder %v484, 0.0
        %vm493 = vcmp.ge.f32.partialorder %v485, 0.0
        %vm494 = vcmp.ge.f32.partialorder %v486, 0.0
        %vm495 = vcmp.ge.f32.partialorder %v487, 0.0
        %vm496 = vcmp.ge.f32.partialorder %v488, 0.0
        %vm497 = vcmp.ge.f32.partialorder %v489, 0.0
        %vm498 = vcmp.ge.f32.partialorder %v490, 0.0
        %v499 = vmul.f32 %v483, 0.1
        %v500 = vmul.f32 %v484, 0.1
        %v501 = vmul.f32 %v485, 0.1
        %v502 = vmul.f32 %v486, 0.1
        %v503 = vmul.f32 %v487, 0.1
        %v504 = vmul.f32 %v488, 0.1
        %v505 = vmul.f32 %v489, 0.1
        %v506 = vmul.f32 %v490, 0.1
        %v507 = vsel %vm491, %v483, %v499
        %v508 = vsel %vm492, %v484, %v500
        %v509 = vsel %vm493, %v485, %v501
        %v510 = vsel %vm494, %v486, %v502
        %v511 = vsel %vm495, %v487, %v503
        %v512 = vsel %vm496, %v488, %v504
        %v513 = vsel %vm497, %v489, %v505
        %v514 = vsel %vm498, %v490, %v506
        %515 = vst.msk [vmem:[%s317] sm:$0xff] %vm443, %v507
        %516 = vst.msk [vmem:[%s317 + $0x8] sm:$0xff] %vm443, %v508
        %517 = vst.msk [vmem:[%s317 + $0x10] sm:$0xff] %vm443, %v509
        %518 = vst.msk [vmem:[%s317 + $0x18] sm:$0xff] %vm443, %v510
        %519 = vst.msk [vmem:[%s317 + $0x20] sm:$0xff] %vm443, %v511
        %520 = vst.msk [vmem:[%s317 + $0x28] sm:$0xff] %vm443, %v512
        %521 = vst.msk [vmem:[%s317 + $0x30] sm:$0xff] %vm443, %v513
        %522 = vst.msk [vmem:[%s317 + $0x38] sm:$0xff] %vm443, %v514
      $region44: #{_lambda_.13} parent=35 // pred_fallthru
        _
      %s523 = smul.u32 8, %s20
      %p524 = scmp.lt.s32.totalorder %s523, 15
      %s525 = scalar_select %p524, %s523, 15
      %p526 = scmp.lt.s32.totalorder %s21, 0
      %s527 = scalar_select %p526, %s21, 0
      %s528 = sadd.s32 %s527, %s525
      %s529 = smul.addr %s528, 8
      %s530 = scalar_lea.vmem %s4, %s529
      // Predicated region
      $region45: #{_lambda_.13} parent=35 // pred_check
        %p531 = pneg %p164
      $region46: #{_lambda_.13} parent=35 // pred_check_branch
        %533 = sbr.rel (%p531) target = $region48
      $region47: #{_lambda_.13} parent=35 // pred_region
        %s534 = smul.u32 8, %s20
      $region48: #{_lambda_.13} parent=35 // pred_fallthru
        _
    $region36: #{_lambda_.13} parent=5 // pred_fallthru
      _
    %p535 = scmp.le.s32.totalorder 2, %s10
    // Predicated region
    $region49: #{_lambda_.13} parent=5 // pred_check
      %p536 = pneg %p535
    $region50: #{_lambda_.13} parent=5 // pred_check_branch
      %538 = sbr.rel (%p536) target = $region52
    $region51: #{_lambda_.13} parent=5 // pred_region
      %s539 = ssub.s32 %s10, 2
      // Predicated region
      $region53: #{_lambda_.13} parent=51 // pred_check
        %p540 = pneg %p170
      $region54: #{_lambda_.13} parent=51 // pred_check_branch
        %542 = sbr.rel (%p540) target = $region56
      $region55: #{_lambda_.13} parent=51 // pred_region
        %s543 = smul.u32 8, %s23
        %p544 = scmp.lt.s32.totalorder %s543, 15
        %s545 = scalar_select %p544, %s543, 15
        %p546 = scmp.lt.s32.totalorder %s24, 0
        %s547 = scalar_select %p546, %s24, 0
        %s548 = sadd.s32 %s547, %s545
        %s549 = smul.addr %s548, 8
        %s550 = scalar_lea.vmem %s4, %s549
      $region56: #{_lambda_.13} parent=51 // pred_fallthru
        _
    $region52: #{_lambda_.13} parent=5 // pred_fallthru
      _
  $region6: #{_lambda_.13} parent=0 // loop_footer
    %s14 = sadd.s32 1, %s10
  $region7: #{_lambda_.13} parent=0 // loop_footer_branch
    %9 = sbr.rel target = $region3
  $region8: #{_lambda_.13} parent=0 // loop_exit
    _

// kernel: _lambda_.17
$region0: #{_lambda_.17}
  #allocation0 [shape = 'u32[]', space=smem, size = 0x4, offset = 0x4, fixed_abs, tag = 'smem constant byte address 0x4 - core index']
  #allocation1 [shape = 'u32[72,128]{1,0:T(1,128)}', space=vmem, size = 0x9000, scoped, tag = 'internal scratch']
  #allocation2 [shape = 'f32[64,32]{1,0:T(8,128)}', space=vmem, size = 0x8000, scoped, tag = 'scratch operand']
  %s0 = inlined_call_operand.vmem [shape: bf16[128,96], index: 0, kind: input, shape index: {}]
  %s1 = inlined_call_operand.vmem [shape: bf16[96,32], index: 1, kind: input, shape index: {}]
  %s2 = inlined_call_operand.vmem [shape: f32[1,32], index: 2, kind: input, shape index: {}]
  %s3 = inlined_call_operand.vmem [shape: f32[128,32], index: 3, kind: input, shape index: {}]
  %s4 = inlined_call_operand.vmem [shape: f32[128,32], index: 4, kind: output, shape index: {}]
  %s5 = sld [smem:[#allocation0]]
  $region57: #{_lambda_.17} parent=0
    _
  %s7 = ssub.s32 1, %s5
  %s8 = scalar_select 0, %s7, %s5
  loop: start=0, step=1, limit=4
  $region2: #{_lambda_.17} parent=0 // loop_pre_header
    _
  $region3: #{_lambda_.17} parent=0 // loop_header
    %s10 = sphi 0, %s14
    %p11 = scmp.ge.s32.totalorder %s10, 4
    %s17 = sphi 0, %s36
    %s18 = sphi 0, %s32
    %s19 = sphi 0, %s28
    %s20 = sphi 0, %s17
    %s21 = sphi 0, %s18
    %s22 = sphi 0, %s19
    %s23 = sphi 0, %s20
    %s24 = sphi 0, %s21
    %s25 = sphi 0, %s22
    %s41 = sphi 0, %s43
    %s44 = sphi 0, %s41
    %s45 = sphi 0, %s44
    %s61 = sphi 0, %s45
    %s69 = sphi 0, %s71
    %s72 = sphi 0, %s69
    %s73 = sphi 0, %s72
    %s89 = sphi 0, %s73
    %s95 = sphi 0, %s97
    %s98 = sphi 0, %s95
    %s99 = sphi 0, %s98
    %s115 = sphi 0, %s99
    %s123 = sphi 0, %s125
    %s126 = sphi 0, %s123
    %s127 = sphi 0, %s126
    %s143 = sphi 0, %s127
    %s151 = sphi 0, %s153
    %s154 = sphi 0, %s151
    %s155 = sphi 0, %s154
    %s171 = sphi 0, %s155
  $region4: #{_lambda_.17} parent=0 // loop_header_branch
    %13 = sbr.rel (%p11) target = $region8
  $region5: #{_lambda_.17} parent=0 // loop_body
    %s15 = ssub.s32 %s10, 1
    %s16 = ssub.s32 %s10, 2
    %s26 = sadd.s32 1, %s19
    %p27 = scmp.ge.s32.totalorder %s26, 1
    %s28 = scalar_select %p27, 0, %s26
    %s29 = sadd.s32 1, %s18
    %s30 = scalar_select %p27, %s29, %s18
    %p31 = scmp.ge.s32.totalorder %s30, 1
    %s32 = scalar_select %p31, 0, %s30
    %s33 = sadd.s32 1, %s17
    %s34 = scalar_select %p31, %s33, %s17
    %p35 = scmp.ge.s32.totalorder %s34, 2
    %s36 = scalar_select %p35, 0, %s34
    %s37 = ssub.s32 %s17, %s36
    %s38 = ssub.s32 %s19, %s28
    %s39 = sor.u32 %s37, %s38
    %p40 = scmp.eq.s32.totalorder %s39, 0
    %s42 = sadd.s32 %s41, 1
    %s43 = scalar_select %p40, %s41, %s42
    %p46 = pneg %p40
    %p47 = scmp.eq.s32.totalorder %s10, 1
    %p48 = por %p46, %p47
    %p49 = scmp.ne.s32.totalorder %s41, %s44
    %p50 = scmp.eq.s32.totalorder %s10, 0
    %p51 = por %p49, %p50
    %p52 = scmp.ne.s32.totalorder %s41, %s44
    %p53 = scmp.eq.s32.totalorder %s15, 1
    %p54 = por %p52, %p53
    %p55 = scmp.ne.s32.totalorder %s44, %s45
    %p56 = scmp.eq.s32.totalorder %s15, 0
    %p57 = por %p55, %p56
    %p58 = scmp.ne.s32.totalorder %s44, %s45
    %p59 = scmp.eq.s32.totalorder %s16, 1
    %p60 = por %p58, %p59
    %p62 = scmp.ne.s32.totalorder %s45, %s61
    %p63 = scmp.eq.s32.totalorder %s16, 0
    %p64 = por %p62, %p63
    %s65 = ssub.s32 %s19, %s28
    %s66 = ssub.s32 %s18, %s32
    %s67 = sor.u32 %s65, %s66
    %p68 = scmp.eq.s32.totalorder %s67, 0
    %s70 = sadd.s32 %s69, 1
    %s71 = scalar_select %p68, %s69, %s70
    %p74 = pneg %p68
    %p75 = scmp.eq.s32.totalorder %s10, 1
    %p76 = por %p74, %p75
    %p77 = scmp.ne.s32.totalorder %s69, %s72
    %p78 = scmp.eq.s32.totalorder %s10, 0
    %p79 = por %p77, %p78
    %p80 = scmp.ne.s32.totalorder %s69, %s72
    %p81 = scmp.eq.s32.totalorder %s15, 1
    %p82 = por %p80, %p81
    %p83 = scmp.ne.s32.totalorder %s72, %s73
    %p84 = scmp.eq.s32.totalorder %s15, 0
    %p85 = por %p83, %p84
    %p86 = scmp.ne.s32.totalorder %s72, %s73
    %p87 = scmp.eq.s32.totalorder %s16, 1
    %p88 = por %p86, %p87
    %p90 = scmp.ne.s32.totalorder %s73, %s89
    %p91 = scmp.eq.s32.totalorder %s16, 0
    %p92 = por %p90, %p91
    %s93 = ssub.s32 %s18, %s32
    %p94 = scmp.eq.s32.totalorder %s93, 0
    %s96 = sadd.s32 %s95, 1
    %s97 = scalar_select %p94, %s95, %s96
    %p100 = pneg %p94
    %p101 = scmp.eq.s32.totalorder %s10, 1
    %p102 = por %p100, %p101
    %p103 = scmp.ne.s32.totalorder %s95, %s98
    %p104 = scmp.eq.s32.totalorder %s10, 0
    %p105 = por %p103, %p104
    %p106 = scmp.ne.s32.totalorder %s95, %s98
    %p107 = scmp.eq.s32.totalorder %s15, 1
    %p108 = por %p106, %p107
    %p109 = scmp.ne.s32.totalorder %s98, %s99
    %p110 = scmp.eq.s32.totalorder %s15, 0
    %p111 = por %p109, %p110
    %p112 = scmp.ne.s32.totalorder %s98, %s99
    %p113 = scmp.eq.s32.totalorder %s16, 1
    %p114 = por %p112, %p113
    %p116 = scmp.ne.s32.totalorder %s99, %s115
    %p117 = scmp.eq.s32.totalorder %s16, 0
    %p118 = por %p116, %p117
    %s119 = ssub.s32 %s17, %s36
    %s120 = ssub.s32 %s18, %s32
    %s121 = sor.u32 %s119, %s120
    %p122 = scmp.eq.s32.totalorder %s121, 0
    %s124 = sadd.s32 %s123, 1
    %s125 = scalar_select %p122, %s123, %s124
    %p128 = pneg %p122
    %p129 = scmp.eq.s32.totalorder %s10, 1
    %p130 = por %p128, %p129
    %p131 = scmp.ne.s32.totalorder %s123, %s126
    %p132 = scmp.eq.s32.totalorder %s10, 0
    %p133 = por %p131, %p132
    %p134 = scmp.ne.s32.totalorder %s123, %s126
    %p135 = scmp.eq.s32.totalorder %s15, 1
    %p136 = por %p134, %p135
    %p137 = scmp.ne.s32.totalorder %s126, %s127
    %p138 = scmp.eq.s32.totalorder %s15, 0
    %p139 = por %p137, %p138
    %p140 = scmp.ne.s32.totalorder %s126, %s127
    %p141 = scmp.eq.s32.totalorder %s16, 1
    %p142 = por %p140, %p141
    %p144 = scmp.ne.s32.totalorder %s127, %s143
    %p145 = scmp.eq.s32.totalorder %s16, 0
    %p146 = por %p144, %p145
    %s147 = ssub.s32 %s17, %s36
    %s148 = ssub.s32 %s18, %s32
    %s149 = sor.u32 %s147, %s148
    %p150 = scmp.eq.s32.totalorder %s149, 0
    %s152 = sadd.s32 %s151, 1
    %s153 = scalar_select %p150, %s151, %s152
    %p156 = pneg %p150
    %p157 = scmp.eq.s32.totalorder %s10, 1
    %p158 = por %p156, %p157
    %p159 = scmp.ne.s32.totalorder %s151, %s154
    %p160 = scmp.eq.s32.totalorder %s10, 0
    %p161 = por %p159, %p160
    %p162 = scmp.ne.s32.totalorder %s151, %s154
    %p163 = scmp.eq.s32.totalorder %s15, 1
    %p164 = por %p162, %p163
    %p165 = scmp.ne.s32.totalorder %s154, %s155
    %p166 = scmp.eq.s32.totalorder %s15, 0
    %p167 = por %p165, %p166
    %p168 = scmp.ne.s32.totalorder %s154, %s155
    %p169 = scmp.eq.s32.totalorder %s16, 1
    %p170 = por %p168, %p169
    %p172 = scmp.ne.s32.totalorder %s155, %s171
    %p173 = scmp.eq.s32.totalorder %s16, 0
    %p174 = por %p172, %p173
    %p175 = scmp.le.s32.totalorder 1, %s10
    %p176 = scmp.lt.s32.totalorder %s10, 3
    %p177 = pnand %p175, %p176
    %p178 = pneg %p177
    // Predicated region
    $region9: #{_lambda_.17} parent=5 // pred_check
      _
    $region10: #{_lambda_.17} parent=5 // pred_check_branch
      %180 = sbr.rel (%p177) target = $region12
    $region11: #{_lambda_.17} parent=5 // pred_region
      %s181 = ssub.s32 %s10, 1
      // Predicated region
      $region13: #{_lambda_.17} parent=11 // pred_check
        %p182 = pneg %p85
      $region14: #{_lambda_.17} parent=11 // pred_check_branch
        %184 = sbr.rel (%p182) target = $region16
      $region15: #{_lambda_.17} parent=11 // pred_region
        %s185 = smul.u32 12, %s22
        %p186 = scmp.lt.s32.totalorder %s185, 11
        %s187 = scalar_select %p186, %s185, 11
        %p188 = scmp.lt.s32.totalorder %s21, 0
        %s189 = scalar_select %p188, %s21, 0
        %s190 = sadd.s32 %s189, %s187
        %s191 = smul.addr %s190, 4
        %s192 = scalar_lea.vmem %s1, %s191
        %s193 = smul.u32 12, %s22
      $region16: #{_lambda_.17} parent=11 // pred_fallthru
        _
      // Predicated region
      $region17: #{_lambda_.17} parent=11 // pred_check
        %p194 = pneg %p111
      $region18: #{_lambda_.17} parent=11 // pred_check_branch
        %196 = sbr.rel (%p194) target = $region20
      $region19: #{_lambda_.17} parent=11 // pred_region
        %p197 = scmp.lt.s32.totalorder %s21, 0
        %s198 = scalar_select %p197, %s21, 0
        %s199 = scalar_lea.vmem %s2, %s198
      $region20: #{_lambda_.17} parent=11 // pred_fallthru
        _
    $region12: #{_lambda_.17} parent=5 // pred_fallthru
      _
    %p200 = scmp.lt.s32.totalorder %s10, 2
    // Predicated region
    $region21: #{_lambda_.17} parent=5 // pred_check
      %p201 = pneg %p200
    $region22: #{_lambda_.17} parent=5 // pred_check_branch
      %203 = sbr.rel (%p201) target = $region24
    $region23: #{_lambda_.17} parent=5 // pred_region
      // Predicated region
      $region25: #{_lambda_.17} parent=23 // pred_check
        %p204 = pneg %p51
      $region26: #{_lambda_.17} parent=23 // pred_check_branch
        %206 = sbr.rel (%p204) target = $region28
      $region27: #{_lambda_.17} parent=23 // pred_region
        %s207 = smul.u32 8, %s17
        %p208 = scmp.lt.s32.totalorder %s207, 15
        %s209 = scalar_select %p208, %s207, 15
        %p210 = scmp.lt.s32.totalorder %s19, 0
        %s211 = scalar_select %p210, %s19, 0
        %s212 = sadd.s32 %s211, %s209
        %s213 = smul.addr %s212, 4
        %s214 = scalar_lea.vmem %s0, %s213
        %s215 = smul.u32 8, %s17
      $region28: #{_lambda_.17} parent=23 // pred_fallthru
        _
      // Predicated region
      $region29: #{_lambda_.17} parent=23 // pred_check
        %p216 = pneg %p133
      $region30: #{_lambda_.17} parent=23 // pred_check_branch
        %218 = sbr.rel (%p216) target = $region32
      $region31: #{_lambda_.17} parent=23 // pred_region
        %s219 = smul.u32 8, %s17
        %p220 = scmp.lt.s32.totalorder %s219, 15
        %s221 = scalar_select %p220, %s219, 15
        %p222 = scmp.lt.s32.totalorder %s18, 0
        %s223 = scalar_select %p222, %s18, 0
        %s224 = sadd.s32 %s223, %s221
        %s225 = smul.addr %s224, 8
        %s226 = scalar_lea.vmem %s3, %s225
        %s227 = smul.u32 8, %s17
      $region32: #{_lambda_.17} parent=23 // pred_fallthru
        _
    $region24: #{_lambda_.17} parent=5 // pred_fallthru
      _
    %p228 = scmp.le.s32.totalorder 1, %s10
    %p229 = scmp.lt.s32.totalorder %s10, 3
    %p230 = pnand %p228, %p229
    %p231 = pneg %p230
    // Predicated region
    $region33: #{_lambda_.17} parent=5 // pred_check
      _
    $region34: #{_lambda_.17} parent=5 // pred_check_branch
      %233 = sbr.rel (%p230) target = $region36
    $region35: #{_lambda_.17} parent=5 // pred_region
      %s234 = ssub.s32 %s10, 1
      %s235 = smul.u32 8, %s20
      %p236 = scmp.lt.s32.totalorder %s235, 15
      %s237 = scalar_select %p236, %s235, 15
      %p238 = scmp.lt.s32.totalorder %s22, 0
      %s239 = scalar_select %p238, %s22, 0
      %s240 = sadd.s32 %s239, %s237
      %s241 = smul.addr %s240, 4
      %s242 = scalar_lea.vmem %s0, %s241
      %p243 = pneg %p57
      %p244 = pneg %p54
      %s245 = smul.u32 12, %s22
      %p246 = scmp.lt.s32.totalorder %s245, 11
      %s247 = scalar_select %p246, %s245, 11
      %p248 = scmp.lt.s32.totalorder %s21, 0
      %s249 = scalar_select %p248, %s21, 0
      %s250 = sadd.s32 %s249, %s247
      %s251 = smul.addr %s250, 4
      %s252 = scalar_lea.vmem %s1, %s251
      %p253 = pneg %p85
      %p254 = pneg %p82
      %p255 = scmp.lt.s32.totalorder %s21, 0
      %s256 = scalar_select %p255, %s21, 0
      %s257 = scalar_lea.vmem %s2, %s256
      %p258 = pneg %p111
      %p259 = pneg %p108
      %s260 = smul.u32 8, %s20
      %p261 = scmp.lt.s32.totalorder %s260, 15
      %s262 = scalar_select %p261, %s260, 15
      %p263 = scmp.lt.s32.totalorder %s21, 0
      %s264 = scalar_select %p263, %s21, 0
      %s265 = sadd.s32 %s264, %s262
      %s266 = smul.addr %s265, 8
      %s267 = scalar_lea.vmem %s3, %s266
      %p268 = pneg %p139
      %p269 = pneg %p136
      %p270 = pneg %p167
      %p271 = pneg %p164
      %s272 = smul.u32 8, %s20
      %p273 = scmp.lt.s32.totalorder %s272, 15
      %s274 = scalar_select %p273, %s272, 15
      %p275 = scmp.lt.s32.totalorder %s21, 0
      %s276 = scalar_select %p275, %s21, 0
      %s277 = sadd.s32 %s276, %s274
      %s278 = smul.addr %s277, 8
      %s279 = scalar_lea.vmem %s4, %s278
      %s280 = smul.u32 8, %s20
      %p281 = scmp.lt.s32.totalorder %s280, 15
      %s282 = scalar_select %p281, %s280, 15
      %p283 = scmp.lt.s32.totalorder %s22, 0
      %s284 = scalar_select %p283, %s22, 0
      %s285 = sadd.s32 %s284, %s282
      %s286 = smul.addr %s285, 4
      %s287 = scalar_lea.vmem %s0, %s286
      %s288 = smul.u32 8, %s20
      %s289 = smul.u32 12, %s22
      %p290 = scmp.lt.s32.totalorder %s289, 11
      %s291 = scalar_select %p290, %s289, 11
      %p292 = scmp.lt.s32.totalorder %s21, 0
      %s293 = scalar_select %p292, %s21, 0
      %s294 = sadd.s32 %s293, %s291
      %s295 = smul.addr %s294, 4
      %s296 = scalar_lea.vmem %s1, %s295
      %s297 = smul.u32 12, %s22
      %p298 = scmp.lt.s32.totalorder %s21, 0
      %s299 = scalar_select %p298, %s21, 0
      %s300 = scalar_lea.vmem %s2, %s299
      %s301 = smul.u32 8, %s20
      %p302 = scmp.lt.s32.totalorder %s301, 15
      %s303 = scalar_select %p302, %s301, 15
      %p304 = scmp.lt.s32.totalorder %s21, 0
      %s305 = scalar_select %p304, %s21, 0
      %s306 = sadd.s32 %s305, %s303
      %s307 = smul.addr %s306, 8
      %s308 = scalar_lea.vmem %s3, %s307
      %s309 = smul.u32 8, %s20
      %s310 = smul.u32 8, %s20
      %p311 = scmp.lt.s32.totalorder %s310, 15
      %s312 = scalar_select %p311, %s310, 15
      %p313 = scmp.lt.s32.totalorder %s21, 0
      %s314 = scalar_select %p313, %s21, 0
      %s315 = sadd.s32 %s314, %s312
      %s316 = smul.addr %s315, 8
      %s317 = scalar_lea.vmem %s4, %s316
      %s318 = smul.u32 8, %s20
      %p320 = scmp.eq.s32.totalorder %s22, 0
      // Predicated region
      $region37: #{_lambda_.17} parent=35 // pred_check
        %p321 = pneg %p320
      $region38: #{_lambda_.17} parent=35 // pred_check_branch
        %323 = sbr.rel (%p321) target = $region40
      $region39: #{_lambda_.17} parent=35 // pred_region
        %vm324 = vcmask 261120
        %325 = vst.msk [vmem:[#allocation2] sm:$0xff] %vm324, 0.0
        %326 = vst.msk [vmem:[#allocation2 + $0x8] sm:$0xff] %vm324, 0.0
        %327 = vst.msk [vmem:[#allocation2 + $0x10] sm:$0xff] %vm324, 0.0
        %328 = vst.msk [vmem:[#allocation2 + $0x18] sm:$0xff] %vm324, 0.0
        %329 = vst.msk [vmem:[#allocation2 + $0x20] sm:$0xff] %vm324, 0.0
        %330 = vst.msk [vmem:[#allocation2 + $0x28] sm:$0xff] %vm324, 0.0
        %331 = vst.msk [vmem:[#allocation2 + $0x30] sm:$0xff] %vm324, 0.0
        %332 = vst.msk [vmem:[#allocation2 + $0x38] sm:$0xff] %vm324, 0.0
      $region40: #{_lambda_.17} parent=35 // pred_fallthru
        _
      %v333 = vld [vmem:[#allocation2] sm:$0xff]
      %v334 = vld [vmem:[#allocation2 + $0x8] sm:$0xff]
      %v335 = vld [vmem:[#allocation2 + $0x10] sm:$0xff]
      %v336 = vld [vmem:[#allocation2 + $0x18] sm:$0xff]
      %v337 = vld [vmem:[#allocation2 + $0x20] sm:$0xff]
      %v338 = vld [vmem:[#allocation2 + $0x28] sm:$0xff]
      %v339 = vld [vmem:[#allocation2 + $0x30] sm:$0xff]
      %v340 = vld [vmem:[#allocation2 + $0x38] sm:$0xff]
      %v341 = vld [vmem:[%s287] sm:$0xf]
      %v342 = vld [vmem:[%s287 + $0x4] sm:$0xf]
      %v343 = vld [vmem:[%s287 + $0x8] sm:$0xf]
      %v344 = vld [vmem:[%s287 + $0xc] sm:$0xf]
      %v345 = vld [vmem:[%s287 + $0x10] sm:$0xf]
      %v346 = vld [vmem:[%s287 + $0x14] sm:$0xf]
      %v347 = vld [vmem:[%s287 + $0x18] sm:$0xf]
      %v348 = vld [vmem:[%s287 + $0x1c] sm:$0xf]
      %v349 = vld [vmem:[%s296] sm:$0xf]
      %v350 = vld [vmem:[%s296 + $0x4] sm:$0xf]
      %v351 = vld [vmem:[%s296 + $0x8] sm:$0xf]
      %v352 = vld [vmem:[%s296 + $0xc] sm:$0xf]
      %v353 = vld [vmem:[%s296 + $0x10] sm:$0xf]
      %v354 = vld [vmem:[%s296 + $0x14] sm:$0xf]
      %v355 = vld [vmem:[%s296 + $0x18] sm:$0xf]
      %v356 = vld [vmem:[%s296 + $0x1c] sm:$0xf]
      %v357 = vld [vmem:[%s296 + $0x20] sm:$0xf]
      %v358 = vld [vmem:[%s296 + $0x24] sm:$0xf]
      %v359 = vld [vmem:[%s296 + $0x28] sm:$0xf]
      %v360 = vld [vmem:[%s296 + $0x2c] sm:$0xf]
      %v369 = vunpack.c.l.b16 %v341
      %v370 = vunpack.c.l.b16 %v342
      %v371 = vunpack.c.l.b16 %v343
      %v372 = vunpack.c.l.b16 %v344
      %v373 = vunpack.c.l.b16 %v345
      %v374 = vunpack.c.l.b16 %v346
      %v375 = vunpack.c.l.b16 %v347
      %v376 = vunpack.c.l.b16 %v348
      %v377 = vpack.c.b16 %v370, %v369
      %v378 = vpack.c.b16 %v372, %v371
      %v379 = vpack.c.b16 %v374, %v373
      %v380 = vpack.c.b16 %v376, %v375
      %v393 = vunpack.c.l.b16 %v349
      %v394 = vunpack.c.l.b16 %v350
      %v395 = vunpack.c.l.b16 %v351
      %v396 = vunpack.c.l.b16 %v352
      %v397 = vunpack.c.l.b16 %v353
      %v398 = vunpack.c.l.b16 %v354
      %v399 = vunpack.c.l.b16 %v355
      %v400 = vunpack.c.l.b16 %v356
      %v401 = vunpack.c.l.b16 %v357
      %v402 = vunpack.c.l.b16 %v358
      %v403 = vunpack.c.l.b16 %v359
      %v404 = vunpack.c.l.b16 %v360
      %v405 = vpack.c.b16 %v394, %v393
      %v406 = vpack.c.b16 %v396, %v395
      %v407 = vpack.c.b16 %v398, %v397
      %v408 = vpack.c.b16 %v400, %v399
      %v409 = vpack.c.b16 %v402, %v401
      %v410 = vpack.c.b16 %v404, %v403
      %vm417 = vcmask 785408
      %v419 = vsel %vm417, %v377, 0
      %v422 = vsel %vm417, %v378, 0
      %v425 = vsel %vm417, %v379, 0
      %v428 = vsel %vm417, %v380, 0
      %430 = vmatpush.bf16.msra.mxu0 0
      %431 = vmatpush.bf16.msra.mxu0 0
      %432 = vmatpush.bf16.msra.mxu0 %v410
      %433 = vmatpush.bf16.msra.mxu0 %v409
      %434 = vmatpush.bf16.msra.mxu0 %v408
      %435 = vmatpush.bf16.msra.mxu0 %v407
      %436 = vmatpush.bf16.msra.mxu0 %v406
      %437 = vmatpush.bf16.msra.mxu0 %v405
      %438 = vmatmul.bf16.gmra.mxu0 %v419
      %v439 = vpop.f32.mrf.mxu0
      %v440 = vadd.f32 0.0, %v439
      %v441 = vpop.f32.mrf.mxu0
      %v442 = vadd.f32 0.0, %v441
      %443 = vmatmul.bf16.gmra.mxu0 %v422
      %v444 = vpop.f32.mrf.mxu0
      %v445 = vadd.f32 0.0, %v444
      %v446 = vpop.f32.mrf.mxu0
      %v447 = vadd.f32 0.0, %v446
      %448 = vmatmul.bf16.gmra.mxu0 %v425
      %v449 = vpop.f32.mrf.mxu0
      %v450 = vadd.f32 0.0, %v449
      %v451 = vpop.f32.mrf.mxu0
      %v452 = vadd.f32 0.0, %v451
      %453 = vmatmul.bf16.gmra.mxu0 %v428
      %v454 = vpop.f32.mrf.mxu0
      %v455 = vadd.f32 0.0, %v454
      %v456 = vpop.f32.mrf.mxu0
      %v457 = vadd.f32 0.0, %v456
      %458 = vdwg.mxu0
      %v459 = vadd.f32 %v333, %v440
      %v460 = vadd.f32 %v334, %v442
      %v461 = vadd.f32 %v335, %v445
      %v462 = vadd.f32 %v336, %v447
      %v463 = vadd.f32 %v337, %v450
      %v464 = vadd.f32 %v338, %v452
      %v465 = vadd.f32 %v339, %v455
      %v466 = vadd.f32 %v340, %v457
      %vm467 = vcmask 261120
      %468 = vst.msk [vmem:[#allocation2] sm:$0xff] %vm467, %v459
      %469 = vst.msk [vmem:[#allocation2 + $0x8] sm:$0xff] %vm467, %v460
      %470 = vst.msk [vmem:[#allocation2 + $0x10] sm:$0xff] %vm467, %v461
      %471 = vst.msk [vmem:[#allocation2 + $0x18] sm:$0xff] %vm467, %v462
      %472 = vst.msk [vmem:[#allocation2 + $0x20] sm:$0xff] %vm467, %v463
      %473 = vst.msk [vmem:[#allocation2 + $0x28] sm:$0xff] %vm467, %v464
      %474 = vst.msk [vmem:[#allocation2 + $0x30] sm:$0xff] %vm467, %v465
      %475 = vst.msk [vmem:[#allocation2 + $0x38] sm:$0xff] %vm467, %v466
      // Predicated region
      $region41: #{_lambda_.17} parent=35 // pred_check
        %p476 = pneg %p320
      $region42: #{_lambda_.17} parent=35 // pred_check_branch
        %478 = sbr.rel (%p476) target = $region44
      $region43: #{_lambda_.17} parent=35 // pred_region
        %v479 = vld [vmem:[#allocation2] sm:$0xff]
        %v480 = vld [vmem:[#allocation2 + $0x8] sm:$0xff]
        %v481 = vld [vmem:[#allocation2 + $0x10] sm:$0xff]
        %v482 = vld [vmem:[#allocation2 + $0x18] sm:$0xff]
        %v483 = vld [vmem:[#allocation2 + $0x20] sm:$0xff]
        %v484 = vld [vmem:[#allocation2 + $0x28] sm:$0xff]
        %v485 = vld [vmem:[#allocation2 + $0x30] sm:$0xff]
        %v486 = vld [vmem:[#allocation2 + $0x38] sm:$0xff]
        %v487 = vld [vmem:[%s300] sm:$0x1]
        %v489 = vperm.slane %v487, 0
        %v491 = vadd.f32 %v479, %v489
        %v492 = vadd.f32 %v480, %v489
        %v493 = vadd.f32 %v481, %v489
        %v494 = vadd.f32 %v482, %v489
        %v495 = vadd.f32 %v483, %v489
        %v496 = vadd.f32 %v484, %v489
        %v497 = vadd.f32 %v485, %v489
        %v498 = vadd.f32 %v486, %v489
        %v499 = vld [vmem:[%s308] sm:$0xff]
        %v500 = vld [vmem:[%s308 + $0x8] sm:$0xff]
        %v501 = vld [vmem:[%s308 + $0x10] sm:$0xff]
        %v502 = vld [vmem:[%s308 + $0x18] sm:$0xff]
        %v503 = vld [vmem:[%s308 + $0x20] sm:$0xff]
        %v504 = vld [vmem:[%s308 + $0x28] sm:$0xff]
        %v505 = vld [vmem:[%s308 + $0x30] sm:$0xff]
        %v506 = vld [vmem:[%s308 + $0x38] sm:$0xff]
        %v507 = vadd.f32 %v491, %v499
        %v508 = vadd.f32 %v492, %v500
        %v509 = vadd.f32 %v493, %v501
        %v510 = vadd.f32 %v494, %v502
        %v511 = vadd.f32 %v495, %v503
        %v512 = vadd.f32 %v496, %v504
        %v513 = vadd.f32 %v497, %v505
        %v514 = vadd.f32 %v498, %v506
        %vm515 = vcmp.ge.f32.partialorder %v507, 0.0
        %vm516 = vcmp.ge.f32.partialorder %v508, 0.0
        %vm517 = vcmp.ge.f32.partialorder %v509, 0.0
        %vm518 = vcmp.ge.f32.partialorder %v510, 0.0
        %vm519 = vcmp.ge.f32.partialorder %v511, 0.0
        %vm520 = vcmp.ge.f32.partialorder %v512, 0.0
        %vm521 = vcmp.ge.f32.partialorder %v513, 0.0
        %vm522 = vcmp.ge.f32.partialorder %v514, 0.0
        %v523 = vmul.f32 %v507, 0.1
        %v524 = vmul.f32 %v508, 0.1
        %v525 = vmul.f32 %v509, 0.1
        %v526 = vmul.f32 %v510, 0.1
        %v527 = vmul.f32 %v511, 0.1
        %v528 = vmul.f32 %v512, 0.1
        %v529 = vmul.f32 %v513, 0.1
        %v530 = vmul.f32 %v514, 0.1
        %v531 = vsel %vm515, %v507, %v523
        %v532 = vsel %vm516, %v508, %v524
        %v533 = vsel %vm517, %v509, %v525
        %v534 = vsel %vm518, %v510, %v526
        %v535 = vsel %vm519, %v511, %v527
        %v536 = vsel %vm520, %v512, %v528
        %v537 = vsel %vm521, %v513, %v529
        %v538 = vsel %vm522, %v514, %v530
        %539 = vst.msk [vmem:[%s317] sm:$0xff] %vm467, %v531
        %540 = vst.msk [vmem:[%s317 + $0x8] sm:$0xff] %vm467, %v532
        %541 = vst.msk [vmem:[%s317 + $0x10] sm:$0xff] %vm467, %v533
        %542 = vst.msk [vmem:[%s317 + $0x18] sm:$0xff] %vm467, %v534
        %543 = vst.msk [vmem:[%s317 + $0x20] sm:$0xff] %vm467, %v535
        %544 = vst.msk [vmem:[%s317 + $0x28] sm:$0xff] %vm467, %v536
        %545 = vst.msk [vmem:[%s317 + $0x30] sm:$0xff] %vm467, %v537
        %546 = vst.msk [vmem:[%s317 + $0x38] sm:$0xff] %vm467, %v538
      $region44: #{_lambda_.17} parent=35 // pred_fallthru
        _
      %s547 = smul.u32 8, %s20
      %p548 = scmp.lt.s32.totalorder %s547, 15
      %s549 = scalar_select %p548, %s547, 15
      %p550 = scmp.lt.s32.totalorder %s21, 0
      %s551 = scalar_select %p550, %s21, 0
      %s552 = sadd.s32 %s551, %s549
      %s553 = smul.addr %s552, 8
      %s554 = scalar_lea.vmem %s4, %s553
      // Predicated region
      $region45: #{_lambda_.17} parent=35 // pred_check
        %p555 = pneg %p164
      $region46: #{_lambda_.17} parent=35 // pred_check_branch
        %557 = sbr.rel (%p555) target = $region48
      $region47: #{_lambda_.17} parent=35 // pred_region
        %s558 = smul.u32 8, %s20
      $region48: #{_lambda_.17} parent=35 // pred_fallthru
        _
    $region36: #{_lambda_.17} parent=5 // pred_fallthru
      _
    %p559 = scmp.le.s32.totalorder 2, %s10
    // Predicated region
    $region49: #{_lambda_.17} parent=5 // pred_check
      %p560 = pneg %p559
    $region50: #{_lambda_.17} parent=5 // pred_check_branch
      %562 = sbr.rel (%p560) target = $region52
    $region51: #{_lambda_.17} parent=5 // pred_region
      %s563 = ssub.s32 %s10, 2
      // Predicated region
      $region53: #{_lambda_.17} parent=51 // pred_check
        %p564 = pneg %p170
      $region54: #{_lambda_.17} parent=51 // pred_check_branch
        %566 = sbr.rel (%p564) target = $region56
      $region55: #{_lambda_.17} parent=51 // pred_region
        %s567 = smul.u32 8, %s23
        %p568 = scmp.lt.s32.totalorder %s567, 15
        %s569 = scalar_select %p568, %s567, 15
        %p570 = scmp.lt.s32.totalorder %s24, 0
        %s571 = scalar_select %p570, %s24, 0
        %s572 = sadd.s32 %s571, %s569
        %s573 = smul.addr %s572, 8
        %s574 = scalar_lea.vmem %s4, %s573
      $region56: #{_lambda_.17} parent=51 // pred_fallthru
        _
    $region52: #{_lambda_.17} parent=5 // pred_fallthru
      _
  $region6: #{_lambda_.17} parent=0 // loop_footer
    %s14 = sadd.s32 1, %s10
  $region7: #{_lambda_.17} parent=0 // loop_footer_branch
    %9 = sbr.rel target = $region3
  $region8: #{_lambda_.17} parent=0 // loop_exit
    _

// kernel: _lambda_.18
$region0: #{_lambda_.18}
  #allocation0 [shape = 'u32[]', space=smem, size = 0x4, offset = 0x4, fixed_abs, tag = 'smem constant byte address 0x4 - core index']
  #allocation1 [shape = 'u32[72,128]{1,0:T(1,128)}', space=vmem, size = 0x9000, scoped, tag = 'internal scratch']
  #allocation2 [shape = 'f32[64,32]{1,0:T(8,128)}', space=vmem, size = 0x8000, scoped, tag = 'scratch operand']
  %s0 = inlined_call_operand.vmem [shape: bf16[128,32], index: 0, kind: input, shape index: {}]
  %s1 = inlined_call_operand.vmem [shape: bf16[32,32], index: 1, kind: input, shape index: {}]
  %s2 = inlined_call_operand.vmem [shape: f32[1,32], index: 2, kind: input, shape index: {}]
  %s3 = inlined_call_operand.vmem [shape: f32[128,32], index: 3, kind: output, shape index: {}]
  %s4 = sld [smem:[#allocation0]]
  $region53: #{_lambda_.18} parent=0
    _
  %s6 = ssub.s32 1, %s4
  %s7 = scalar_select 0, %s6, %s4
  loop: start=0, step=1, limit=4
  $region2: #{_lambda_.18} parent=0 // loop_pre_header
    _
  $region3: #{_lambda_.18} parent=0 // loop_header
    %s9 = sphi 0, %s13
    %p10 = scmp.ge.s32.totalorder %s9, 4
    %s16 = sphi 0, %s35
    %s17 = sphi 0, %s31
    %s18 = sphi 0, %s27
    %s19 = sphi 0, %s16
    %s20 = sphi 0, %s17
    %s21 = sphi 0, %s18
    %s22 = sphi 0, %s19
    %s23 = sphi 0, %s20
    %s24 = sphi 0, %s21
    %s40 = sphi 0, %s42
    %s43 = sphi 0, %s40
    %s44 = sphi 0, %s43
    %s60 = sphi 0, %s44
    %s68 = sphi 0, %s70
    %s71 = sphi 0, %s68
    %s72 = sphi 0, %s71
    %s88 = sphi 0, %s72
    %s94 = sphi 0, %s96
    %s97 = sphi 0, %s94
    %s98 = sphi 0, %s97
    %s114 = sphi 0, %s98
    %s122 = sphi 0, %s124
    %s125 = sphi 0, %s122
    %s126 = sphi 0, %s125
    %s142 = sphi 0, %s126
  $region4: #{_lambda_.18} parent=0 // loop_header_branch
    %12 = sbr.rel (%p10) target = $region8
  $region5: #{_lambda_.18} parent=0 // loop_body
    %s14 = ssub.s32 %s9, 1
    %s15 = ssub.s32 %s9, 2
    %s25 = sadd.s32 1, %s18
    %p26 = scmp.ge.s32.totalorder %s25, 1
    %s27 = scalar_select %p26, 0, %s25
    %s28 = sadd.s32 1, %s17
    %s29 = scalar_select %p26, %s28, %s17
    %p30 = scmp.ge.s32.totalorder %s29, 1
    %s31 = scalar_select %p30, 0, %s29
    %s32 = sadd.s32 1, %s16
    %s33 = scalar_select %p30, %s32, %s16
    %p34 = scmp.ge.s32.totalorder %s33, 2
    %s35 = scalar_select %p34, 0, %s33
    %s36 = ssub.s32 %s16, %s35
    %s37 = ssub.s32 %s18, %s27
    %s38 = sor.u32 %s36, %s37
    %p39 = scmp.eq.s32.totalorder %s38, 0
    %s41 = sadd.s32 %s40, 1
    %s42 = scalar_select %p39, %s40, %s41
    %p45 = pneg %p39
    %p46 = scmp.eq.s32.totalorder %s9, 1
    %p47 = por %p45, %p46
    %p48 = scmp.ne.s32.totalorder %s40, %s43
    %p49 = scmp.eq.s32.totalorder %s9, 0
    %p50 = por %p48, %p49
    %p51 = scmp.ne.s32.totalorder %s40, %s43
    %p52 = scmp.eq.s32.totalorder %s14, 1
    %p53 = por %p51, %p52
    %p54 = scmp.ne.s32.totalorder %s43, %s44
    %p55 = scmp.eq.s32.totalorder %s14, 0
    %p56 = por %p54, %p55
    %p57 = scmp.ne.s32.totalorder %s43, %s44
    %p58 = scmp.eq.s32.totalorder %s15, 1
    %p59 = por %p57, %p58
    %p61 = scmp.ne.s32.totalorder %s44, %s60
    %p62 = scmp.eq.s32.totalorder %s15, 0
    %p63 = por %p61, %p62
    %s64 = ssub.s32 %s18, %s27
    %s65 = ssub.s32 %s17, %s31
    %s66 = sor.u32 %s64, %s65
    %p67 = scmp.eq.s32.totalorder %s66, 0
    %s69 = sadd.s32 %s68, 1
    %s70 = scalar_select %p67, %s68, %s69
    %p73 = pneg %p67
    %p74 = scmp.eq.s32.totalorder %s9, 1
    %p75 = por %p73, %p74
    %p76 = scmp.ne.s32.totalorder %s68, %s71
    %p77 = scmp.eq.s32.totalorder %s9, 0
    %p78 = por %p76, %p77
    %p79 = scmp.ne.s32.totalorder %s68, %s71
    %p80 = scmp.eq.s32.totalorder %s14, 1
    %p81 = por %p79, %p80
    %p82 = scmp.ne.s32.totalorder %s71, %s72
    %p83 = scmp.eq.s32.totalorder %s14, 0
    %p84 = por %p82, %p83
    %p85 = scmp.ne.s32.totalorder %s71, %s72
    %p86 = scmp.eq.s32.totalorder %s15, 1
    %p87 = por %p85, %p86
    %p89 = scmp.ne.s32.totalorder %s72, %s88
    %p90 = scmp.eq.s32.totalorder %s15, 0
    %p91 = por %p89, %p90
    %s92 = ssub.s32 %s17, %s31
    %p93 = scmp.eq.s32.totalorder %s92, 0
    %s95 = sadd.s32 %s94, 1
    %s96 = scalar_select %p93, %s94, %s95
    %p99 = pneg %p93
    %p100 = scmp.eq.s32.totalorder %s9, 1
    %p101 = por %p99, %p100
    %p102 = scmp.ne.s32.totalorder %s94, %s97
    %p103 = scmp.eq.s32.totalorder %s9, 0
    %p104 = por %p102, %p103
    %p105 = scmp.ne.s32.totalorder %s94, %s97
    %p106 = scmp.eq.s32.totalorder %s14, 1
    %p107 = por %p105, %p106
    %p108 = scmp.ne.s32.totalorder %s97, %s98
    %p109 = scmp.eq.s32.totalorder %s14, 0
    %p110 = por %p108, %p109
    %p111 = scmp.ne.s32.totalorder %s97, %s98
    %p112 = scmp.eq.s32.totalorder %s15, 1
    %p113 = por %p111, %p112
    %p115 = scmp.ne.s32.totalorder %s98, %s114
    %p116 = scmp.eq.s32.totalorder %s15, 0
    %p117 = por %p115, %p116
    %s118 = ssub.s32 %s16, %s35
    %s119 = ssub.s32 %s17, %s31
    %s120 = sor.u32 %s118, %s119
    %p121 = scmp.eq.s32.totalorder %s120, 0
    %s123 = sadd.s32 %s122, 1
    %s124 = scalar_select %p121, %s122, %s123
    %p127 = pneg %p121
    %p128 = scmp.eq.s32.totalorder %s9, 1
    %p129 = por %p127, %p128
    %p130 = scmp.ne.s32.totalorder %s122, %s125
    %p131 = scmp.eq.s32.totalorder %s9, 0
    %p132 = por %p130, %p131
    %p133 = scmp.ne.s32.totalorder %s122, %s125
    %p134 = scmp.eq.s32.totalorder %s14, 1
    %p135 = por %p133, %p134
    %p136 = scmp.ne.s32.totalorder %s125, %s126
    %p137 = scmp.eq.s32.totalorder %s14, 0
    %p138 = por %p136, %p137
    %p139 = scmp.ne.s32.totalorder %s125, %s126
    %p140 = scmp.eq.s32.totalorder %s15, 1
    %p141 = por %p139, %p140
    %p143 = scmp.ne.s32.totalorder %s126, %s142
    %p144 = scmp.eq.s32.totalorder %s15, 0
    %p145 = por %p143, %p144
    %p146 = scmp.le.s32.totalorder 1, %s9
    %p147 = scmp.lt.s32.totalorder %s9, 3
    %p148 = pnand %p146, %p147
    %p149 = pneg %p148
    // Predicated region
    $region9: #{_lambda_.18} parent=5 // pred_check
      _
    $region10: #{_lambda_.18} parent=5 // pred_check_branch
      %151 = sbr.rel (%p148) target = $region12
    $region11: #{_lambda_.18} parent=5 // pred_region
      %s152 = ssub.s32 %s9, 1
      // Predicated region
      $region13: #{_lambda_.18} parent=11 // pred_check
        %p153 = pneg %p84
      $region14: #{_lambda_.18} parent=11 // pred_check_branch
        %155 = sbr.rel (%p153) target = $region16
      $region15: #{_lambda_.18} parent=11 // pred_region
        %s156 = smul.u32 4, %s21
        %p157 = scmp.lt.s32.totalorder %s156, 3
        %s158 = scalar_select %p157, %s156, 3
        %p159 = scmp.lt.s32.totalorder %s20, 0
        %s160 = scalar_select %p159, %s20, 0
        %s161 = sadd.s32 %s160, %s158
        %s162 = smul.addr %s161, 4
        %s163 = scalar_lea.vmem %s1, %s162
        %s164 = smul.u32 4, %s21
      $region16: #{_lambda_.18} parent=11 // pred_fallthru
        _
      // Predicated region
      $region17: #{_lambda_.18} parent=11 // pred_check
        %p165 = pneg %p110
      $region18: #{_lambda_.18} parent=11 // pred_check_branch
        %167 = sbr.rel (%p165) target = $region20
      $region19: #{_lambda_.18} parent=11 // pred_region
        %p168 = scmp.lt.s32.totalorder %s20, 0
        %s169 = scalar_select %p168, %s20, 0
        %s170 = scalar_lea.vmem %s2, %s169
      $region20: #{_lambda_.18} parent=11 // pred_fallthru
        _
    $region12: #{_lambda_.18} parent=5 // pred_fallthru
      _
    %p171 = scmp.lt.s32.totalorder %s9, 2
    // Predicated region
    $region21: #{_lambda_.18} parent=5 // pred_check
      %p172 = pneg %p171
    $region22: #{_lambda_.18} parent=5 // pred_check_branch
      %174 = sbr.rel (%p172) target = $region24
    $region23: #{_lambda_.18} parent=5 // pred_region
      // Predicated region
      $region25: #{_lambda_.18} parent=23 // pred_check
        %p175 = pneg %p50
      $region26: #{_lambda_.18} parent=23 // pred_check_branch
        %177 = sbr.rel (%p175) target = $region28
      $region27: #{_lambda_.18} parent=23 // pred_region
        %s178 = smul.u32 8, %s16
        %p179 = scmp.lt.s32.totalorder %s178, 15
        %s180 = scalar_select %p179, %s178, 15
        %p181 = scmp.lt.s32.totalorder %s18, 0
        %s182 = scalar_select %p181, %s18, 0
        %s183 = sadd.s32 %s182, %s180
        %s184 = smul.addr %s183, 4
        %s185 = scalar_lea.vmem %s0, %s184
        %s186 = smul.u32 8, %s16
      $region28: #{_lambda_.18} parent=23 // pred_fallthru
        _
    $region24: #{_lambda_.18} parent=5 // pred_fallthru
      _
    %p187 = scmp.le.s32.totalorder 1, %s9
    %p188 = scmp.lt.s32.totalorder %s9, 3
    %p189 = pnand %p187, %p188
    %p190 = pneg %p189
    // Predicated region
    $region29: #{_lambda_.18} parent=5 // pred_check
      _
    $region30: #{_lambda_.18} parent=5 // pred_check_branch
      %192 = sbr.rel (%p189) target = $region32
    $region31: #{_lambda_.18} parent=5 // pred_region
      %s193 = ssub.s32 %s9, 1
      %s194 = smul.u32 8, %s19
      %p195 = scmp.lt.s32.totalorder %s194, 15
      %s196 = scalar_select %p195, %s194, 15
      %p197 = scmp.lt.s32.totalorder %s21, 0
      %s198 = scalar_select %p197, %s21, 0
      %s199 = sadd.s32 %s198, %s196
      %s200 = smul.addr %s199, 4
      %s201 = scalar_lea.vmem %s0, %s200
      %p202 = pneg %p56
      %p203 = pneg %p53
      %s204 = smul.u32 4, %s21
      %p205 = scmp.lt.s32.totalorder %s204, 3
      %s206 = scalar_select %p205, %s204, 3
      %p207 = scmp.lt.s32.totalorder %s20, 0
      %s208 = scalar_select %p207, %s20, 0
      %s209 = sadd.s32 %s208, %s206
      %s210 = smul.addr %s209, 4
      %s211 = scalar_lea.vmem %s1, %s210
      %p212 = pneg %p84
      %p213 = pneg %p81
      %p214 = scmp.lt.s32.totalorder %s20, 0
      %s215 = scalar_select %p214, %s20, 0
      %s216 = scalar_lea.vmem %s2, %s215
      %p217 = pneg %p110
      %p218 = pneg %p107
      %p219 = pneg %p138
      %p220 = pneg %p135
      %s221 = smul.u32 8, %s19
      %p222 = scmp.lt.s32.totalorder %s221, 15
      %s223 = scalar_select %p222, %s221, 15
      %p224 = scmp.lt.s32.totalorder %s20, 0
      %s225 = scalar_select %p224, %s20, 0
      %s226 = sadd.s32 %s225, %s223
      %s227 = smul.addr %s226, 8
      %s228 = scalar_lea.vmem %s3, %s227
      %s229 = smul.u32 8, %s19
      %p230 = scmp.lt.s32.totalorder %s229, 15
      %s231 = scalar_select %p230, %s229, 15
      %p232 = scmp.lt.s32.totalorder %s21, 0
      %s233 = scalar_select %p232, %s21, 0
      %s234 = sadd.s32 %s233, %s231
      %s235 = smul.addr %s234, 4
      %s236 = scalar_lea.vmem %s0, %s235
      %s237 = smul.u32 8, %s19
      %s238 = smul.u32 4, %s21
      %p239 = scmp.lt.s32.totalorder %s238, 3
      %s240 = scalar_select %p239, %s238, 3
      %p241 = scmp.lt.s32.totalorder %s20, 0
      %s242 = scalar_select %p241, %s20, 0
      %s243 = sadd.s32 %s242, %s240
      %s244 = smul.addr %s243, 4
      %s245 = scalar_lea.vmem %s1, %s244
      %s246 = smul.u32 4, %s21
      %p247 = scmp.lt.s32.totalorder %s20, 0
      %s248 = scalar_select %p247, %s20, 0
      %s249 = scalar_lea.vmem %s2, %s248
      %s250 = smul.u32 8, %s19
      %p251 = scmp.lt.s32.totalorder %s250, 15
      %s252 = scalar_select %p251, %s250, 15
      %p253 = scmp.lt.s32.totalorder %s20, 0
      %s254 = scalar_select %p253, %s20, 0
      %s255 = sadd.s32 %s254, %s252
      %s256 = smul.addr %s255, 8
      %s257 = scalar_lea.vmem %s3, %s256
      %s258 = smul.u32 8, %s19
      %p260 = scmp.eq.s32.totalorder %s21, 0
      // Predicated region
      $region33: #{_lambda_.18} parent=31 // pred_check
        %p261 = pneg %p260
      $region34: #{_lambda_.18} parent=31 // pred_check_branch
        %263 = sbr.rel (%p261) target = $region36
      $region35: #{_lambda_.18} parent=31 // pred_region
        %vm264 = vcmask 261120
        %265 = vst.msk [vmem:[#allocation2] sm:$0xff] %vm264, 0.0
        %266 = vst.msk [vmem:[#allocation2 + $0x8] sm:$0xff] %vm264, 0.0
        %267 = vst.msk [vmem:[#allocation2 + $0x10] sm:$0xff] %vm264, 0.0
        %268 = vst.msk [vmem:[#allocation2 + $0x18] sm:$0xff] %vm264, 0.0
        %269 = vst.msk [vmem:[#allocation2 + $0x20] sm:$0xff] %vm264, 0.0
        %270 = vst.msk [vmem:[#allocation2 + $0x28] sm:$0xff] %vm264, 0.0
        %271 = vst.msk [vmem:[#allocation2 + $0x30] sm:$0xff] %vm264, 0.0
        %272 = vst.msk [vmem:[#allocation2 + $0x38] sm:$0xff] %vm264, 0.0
      $region36: #{_lambda_.18} parent=31 // pred_fallthru
        _
      %v273 = vld [vmem:[#allocation2] sm:$0xff]
      %v274 = vld [vmem:[#allocation2 + $0x8] sm:$0xff]
      %v275 = vld [vmem:[#allocation2 + $0x10] sm:$0xff]
      %v276 = vld [vmem:[#allocation2 + $0x18] sm:$0xff]
      %v277 = vld [vmem:[#allocation2 + $0x20] sm:$0xff]
      %v278 = vld [vmem:[#allocation2 + $0x28] sm:$0xff]
      %v279 = vld [vmem:[#allocation2 + $0x30] sm:$0xff]
      %v280 = vld [vmem:[#allocation2 + $0x38] sm:$0xff]
      %v281 = vld [vmem:[%s236] sm:$0xf]
      %v282 = vld [vmem:[%s236 + $0x4] sm:$0xf]
      %v283 = vld [vmem:[%s236 + $0x8] sm:$0xf]
      %v284 = vld [vmem:[%s236 + $0xc] sm:$0xf]
      %v285 = vld [vmem:[%s236 + $0x10] sm:$0xf]
      %v286 = vld [vmem:[%s236 + $0x14] sm:$0xf]
      %v287 = vld [vmem:[%s236 + $0x18] sm:$0xf]
      %v288 = vld [vmem:[%s236 + $0x1c] sm:$0xf]
      %v289 = vld [vmem:[%s245] sm:$0xf]
      %v290 = vld [vmem:[%s245 + $0x4] sm:$0xf]
      %v291 = vld [vmem:[%s245 + $0x8] sm:$0xf]
      %v292 = vld [vmem:[%s245 + $0xc] sm:$0xf]
      %v301 = vunpack.c.l.b16 %v281
      %v302 = vunpack.c.l.b16 %v282
      %v303 = vunpack.c.l.b16 %v283
      %v304 = vunpack.c.l.b16 %v284
      %v305 = vunpack.c.l.b16 %v285
      %v306 = vunpack.c.l.b16 %v286
      %v307 = vunpack.c.l.b16 %v287
      %v308 = vunpack.c.l.b16 %v288
      %v309 = vpack.c.b16 %v302, %v301
      %v310 = vpack.c.b16 %v304, %v303
      %v311 = vpack.c.b16 %v306, %v305
      %v312 = vpack.c.b16 %v308, %v307
      %v317 = vunpack.c.l.b16 %v289
      %v318 = vunpack.c.l.b16 %v290
      %v319 = vunpack.c.l.b16 %v291
      %v320 = vunpack.c.l.b16 %v292
      %v321 = vpack.c.b16 %v318, %v317
      %v322 = vpack.c.b16 %v320, %v319
      %vm325 = vcmask 261120
      %v327 = vsel %vm325, %v309, 0
      %v330 = vsel %vm325, %v310, 0
      %v333 = vsel %vm325, %v311, 0
      %v336 = vsel %vm325, %v312, 0
      %338 = vmatpush.bf16.msra.mxu0 0
      %339 = vmatpush.bf16.msra.mxu0 0
      %340 = vmatpush.bf16.msra.mxu0 0
      %341 = vmatpush.bf16.msra.mxu0 0
      %342 = vmatpush.bf16.msra.mxu0 0
      %343 = vmatpush.bf16.msra.mxu0 0
      %344 = vmatpush.bf16.msra.mxu0 %v322
      %345 = vmatpush.bf16.msra.mxu0 %v321
      %346 = vmatmul.bf16.gmra.mxu0 %v327
      %v347 = vpop.f32.mrf.mxu0
      %v348 = vadd.f32 0.0, %v347
      %v349 = vpop.f32.mrf.mxu0
      %v350 = vadd.f32 0.0, %v349
      %351 = vmatmul.bf16.gmra.mxu0 %v330
      %v352 = vpop.f32.mrf.mxu0
      %v353 = vadd.f32 0.0, %v352
      %v354 = vpop.f32.mrf.mxu0
      %v355 = vadd.f32 0.0, %v354
      %356 = vmatmul.bf16.gmra.mxu0 %v333
      %v357 = vpop.f32.mrf.mxu0
      %v358 = vadd.f32 0.0, %v357
      %v359 = vpop.f32.mrf.mxu0
      %v360 = vadd.f32 0.0, %v359
      %361 = vmatmul.bf16.gmra.mxu0 %v336
      %v362 = vpop.f32.mrf.mxu0
      %v363 = vadd.f32 0.0, %v362
      %v364 = vpop.f32.mrf.mxu0
      %v365 = vadd.f32 0.0, %v364
      %366 = vdwg.mxu0
      %v367 = vadd.f32 %v273, %v348
      %v368 = vadd.f32 %v274, %v350
      %v369 = vadd.f32 %v275, %v353
      %v370 = vadd.f32 %v276, %v355
      %v371 = vadd.f32 %v277, %v358
      %v372 = vadd.f32 %v278, %v360
      %v373 = vadd.f32 %v279, %v363
      %v374 = vadd.f32 %v280, %v365
      %375 = vst.msk [vmem:[#allocation2] sm:$0xff] %vm325, %v367
      %376 = vst.msk [vmem:[#allocation2 + $0x8] sm:$0xff] %vm325, %v368
      %377 = vst.msk [vmem:[#allocation2 + $0x10] sm:$0xff] %vm325, %v369
      %378 = vst.msk [vmem:[#allocation2 + $0x18] sm:$0xff] %vm325, %v370
      %379 = vst.msk [vmem:[#allocation2 + $0x20] sm:$0xff] %vm325, %v371
      %380 = vst.msk [vmem:[#allocation2 + $0x28] sm:$0xff] %vm325, %v372
      %381 = vst.msk [vmem:[#allocation2 + $0x30] sm:$0xff] %vm325, %v373
      %382 = vst.msk [vmem:[#allocation2 + $0x38] sm:$0xff] %vm325, %v374
      // Predicated region
      $region37: #{_lambda_.18} parent=31 // pred_check
        %p383 = pneg %p260
      $region38: #{_lambda_.18} parent=31 // pred_check_branch
        %385 = sbr.rel (%p383) target = $region40
      $region39: #{_lambda_.18} parent=31 // pred_region
        %v386 = vld [vmem:[#allocation2] sm:$0xff]
        %v387 = vld [vmem:[#allocation2 + $0x8] sm:$0xff]
        %v388 = vld [vmem:[#allocation2 + $0x10] sm:$0xff]
        %v389 = vld [vmem:[#allocation2 + $0x18] sm:$0xff]
        %v390 = vld [vmem:[#allocation2 + $0x20] sm:$0xff]
        %v391 = vld [vmem:[#allocation2 + $0x28] sm:$0xff]
        %v392 = vld [vmem:[#allocation2 + $0x30] sm:$0xff]
        %v393 = vld [vmem:[#allocation2 + $0x38] sm:$0xff]
        %v394 = vld [vmem:[%s249] sm:$0x1]
        %v396 = vperm.slane %v394, 0
        %v398 = vadd.f32 %v386, %v396
        %v399 = vadd.f32 %v387, %v396
        %v400 = vadd.f32 %v388, %v396
        %v401 = vadd.f32 %v389, %v396
        %v402 = vadd.f32 %v390, %v396
        %v403 = vadd.f32 %v391, %v396
        %v404 = vadd.f32 %v392, %v396
        %v405 = vadd.f32 %v393, %v396
        %406 = vst.msk [vmem:[%s257] sm:$0xff] %vm325, %v398
        %407 = vst.msk [vmem:[%s257 + $0x8] sm:$0xff] %vm325, %v399
        %408 = vst.msk [vmem:[%s257 + $0x10] sm:$0xff] %vm325, %v400
        %409 = vst.msk [vmem:[%s257 + $0x18] sm:$0xff] %vm325, %v401
        %410 = vst.msk [vmem:[%s257 + $0x20] sm:$0xff] %vm325, %v402
        %411 = vst.msk [vmem:[%s257 + $0x28] sm:$0xff] %vm325, %v403
        %412 = vst.msk [vmem:[%s257 + $0x30] sm:$0xff] %vm325, %v404
        %413 = vst.msk [vmem:[%s257 + $0x38] sm:$0xff] %vm325, %v405
      $region40: #{_lambda_.18} parent=31 // pred_fallthru
        _
      %s414 = smul.u32 8, %s19
      %p415 = scmp.lt.s32.totalorder %s414, 15
      %s416 = scalar_select %p415, %s414, 15
      %p417 = scmp.lt.s32.totalorder %s20, 0
      %s418 = scalar_select %p417, %s20, 0
      %s419 = sadd.s32 %s418, %s416
      %s420 = smul.addr %s419, 8
      %s421 = scalar_lea.vmem %s3, %s420
      // Predicated region
      $region41: #{_lambda_.18} parent=31 // pred_check
        %p422 = pneg %p135
      $region42: #{_lambda_.18} parent=31 // pred_check_branch
        %424 = sbr.rel (%p422) target = $region44
      $region43: #{_lambda_.18} parent=31 // pred_region
        %s425 = smul.u32 8, %s19
      $region44: #{_lambda_.18} parent=31 // pred_fallthru
        _
    $region32: #{_lambda_.18} parent=5 // pred_fallthru
      _
    %p426 = scmp.le.s32.totalorder 2, %s9
    // Predicated region
    $region45: #{_lambda_.18} parent=5 // pred_check
      %p427 = pneg %p426
    $region46: #{_lambda_.18} parent=5 // pred_check_branch
      %429 = sbr.rel (%p427) target = $region48
    $region47: #{_lambda_.18} parent=5 // pred_region
      %s430 = ssub.s32 %s9, 2
      // Predicated region
      $region49: #{_lambda_.18} parent=47 // pred_check
        %p431 = pneg %p141
      $region50: #{_lambda_.18} parent=47 // pred_check_branch
        %433 = sbr.rel (%p431) target = $region52
      $region51: #{_lambda_.18} parent=47 // pred_region
        %s434 = smul.u32 8, %s22
        %p435 = scmp.lt.s32.totalorder %s434, 15
        %s436 = scalar_select %p435, %s434, 15
        %p437 = scmp.lt.s32.totalorder %s23, 0
        %s438 = scalar_select %p437, %s23, 0
        %s439 = sadd.s32 %s438, %s436
        %s440 = smul.addr %s439, 8
        %s441 = scalar_lea.vmem %s3, %s440
      $region52: #{_lambda_.18} parent=47 // pred_fallthru
        _
    $region48: #{_lambda_.18} parent=5 // pred_fallthru
      _
  $region6: #{_lambda_.18} parent=0 // loop_footer
    %s13 = sadd.s32 1, %s9
  $region7: #{_lambda_.18} parent=0 // loop_footer_branch
    %8 = sbr.rel target = $region3
  $region8: #{_lambda_.18} parent=0 // loop_exit
    _

</llo_original>
